<compile_context>
chip_gen: v6e
topology: v6e:2x2x1
jax: 0.10.0
libtpu: 0.0.40
codegen_flags: <defaults>
</compile_context>

<pallas_src>
import functools

import jax
import jax.numpy as jnp
import numpy as np
from jax.experimental import pallas as pl
from jax.experimental.pallas import tpu as pltpu


# ---------------------------------------------------------------------------
# Kernel A: conv of one padded image (kh*kw shifted-row matmuls, f32 acc) plus
# per-image masked channel sum / sum-of-squares.  Grid over batch, "parallel".
# ---------------------------------------------------------------------------
def _conv_stats_kernel(x_ref, w_ref, m_ref, conv_ref, sum_ref, sumsq_ref,
                       *, kh, kw, wp, rows):
    cpad = conv_ref.shape[2]
    x = x_ref[...]            # (1, r_in, Cin_p)  bf16, flattened padded image
    w = w_ref[...]            # (kh*kw, Cin_p, Cpad) bf16
    m = m_ref[...]            # (rows, 1) f32 validity mask (1.0 = real output)

    acc = jnp.zeros((rows, cpad), jnp.float32)
    for a in range(kh):
        for b in range(kw):
            r0 = a * wp + b
            lhs = x[0, r0:r0 + rows, :]                     # (rows, Cin_p) bf16
            acc = acc + jnp.dot(lhs, w[a * kw + b],
                                preferred_element_type=jnp.float32)

    conv_ref[...] = acc[None]

    masked = acc * m
    sum_ref[...] = jnp.sum(masked, axis=0, keepdims=True)[None]
    sumsq_ref[...] = jnp.sum(acc * masked, axis=0, keepdims=True)[None]


# ---------------------------------------------------------------------------
# Kernel B: fused BatchNorm affine (y*scale + shift) + ReLU, lane-dense tiles,
# written in place via input_output_aliases.
# ---------------------------------------------------------------------------
def _bn_relu_kernel(y_ref, scale_ref, shift_ref, out_ref):
    z = y_ref[...] * scale_ref[...] + shift_ref[...]
    out_ref[...] = jnp.maximum(z, 0.0)


@functools.partial(jax.jit, static_argnames=("padding", "eps"))
def basic_conv2d(x, weight, gamma, beta, *, padding=1, eps=1e-3):
    """x: (N, Cin, H, W); weight: (Cout, Cin, kh, kw). Returns NCHW float32."""
    N, Cin, H, W = x.shape
    Cout, _, kh, kw = weight.shape
    Hp, Wp = H + 2 * padding, W + 2 * padding
    Ho, Wo = Hp - kh + 1, Wp - kw + 1          # stride 1
    Cin_p = -(-Cin // 8) * 8                   # sublane-aligned contraction
    Cpad = -(-Cout // 128) * 128               # lane-dense output channels
    rows = Ho * Wp                             # accumulator rows per image
    r_in = Hp * Wp + (kw - 1)                  # flattened rows incl. tail pad

    # --- data prep (layout plumbing only, done once in XLA) -----------------
    xh = jnp.transpose(x, (0, 2, 3, 1))                          # NHWC
    xh = jnp.pad(xh, ((0, 0), (padding, padding),
                      (padding, padding), (0, Cin_p - Cin)))
    xf = xh.reshape(N, Hp * Wp, Cin_p)
    xf = jnp.pad(xf, ((0, 0), (0, kw - 1), (0, 0))).astype(jnp.bfloat16)

    wt = jnp.transpose(weight, (2, 3, 1, 0)).reshape(kh * kw, Cin, Cout)
    wt = jnp.pad(wt, ((0, 0), (0, Cin_p - Cin),
                      (0, Cpad - Cout))).astype(jnp.bfloat16)

    mask = (jnp.arange(rows) % Wp < Wo).astype(jnp.float32).reshape(rows, 1)

    kernel_a = functools.partial(_conv_stats_kernel,
                                 kh=kh, kw=kw, wp=Wp, rows=rows)

    conv_out, psum, psumsq = pl.pallas_call(
        kernel_a,
        out_shape=(
            jax.ShapeDtypeStruct((N, rows, Cpad), jnp.float32),
            jax.ShapeDtypeStruct((N, 1, Cpad), jnp.float32),
            jax.ShapeDtypeStruct((N, 1, Cpad), jnp.float32),
        ),
        grid=(N,),
        in_specs=[
            pl.BlockSpec((1, r_in, Cin_p), lambda n: (n, 0, 0)),
            pl.BlockSpec((kh * kw, Cin_p, Cpad), lambda n: (0, 0, 0)),
            pl.BlockSpec((rows, 1), lambda n: (0, 0)),
        ],
        out_specs=(
            pl.BlockSpec((1, rows, Cpad), lambda n: (n, 0, 0)),
            pl.BlockSpec((1, 1, Cpad), lambda n: (n, 0, 0)),
            pl.BlockSpec((1, 1, Cpad), lambda n: (n, 0, 0)),
        ),
        compiler_params=pltpu.CompilerParams(
            dimension_semantics=("parallel",),
            vmem_limit_bytes=48 * 1024 * 1024,
        ),
    )(xf, wt, mask)

    # --- batch statistics (training-mode BN, biased variance) ---------------
    m_valid = N * Ho * Wo
    ch_sum = jnp.sum(psum, axis=(0, 1))
    ch_sumsq = jnp.sum(psumsq, axis=(0, 1))
    mean = ch_sum / m_valid
    var = jnp.maximum(ch_sumsq / m_valid - mean * mean, 0.0)   # clamp one-pass var
    gamma_p = jnp.pad(gamma.astype(jnp.float32), (0, Cpad - Cout))
    beta_p = jnp.pad(beta.astype(jnp.float32), (0, Cpad - Cout))
    inv = gamma_p * jax.lax.rsqrt(var + eps)
    scale = inv.reshape(1, Cpad)
    shift = (beta_p - mean * inv).reshape(1, Cpad)

    # --- fused BN + ReLU, lane-dense, in place -------------------------------
    m_rows = N * rows
    flat = conv_out.reshape(m_rows, Cpad)
    tm = min(512, m_rows)

    out_flat = pl.pallas_call(
        _bn_relu_kernel,
        out_shape=jax.ShapeDtypeStruct((m_rows, Cpad), jnp.float32),
        grid=(pl.cdiv(m_rows, tm),),
        in_specs=[
            pl.BlockSpec((tm, Cpad), lambda i: (i, 0)),
            pl.BlockSpec((1, Cpad), lambda i: (0, 0)),
            pl.BlockSpec((1, Cpad), lambda i: (0, 0)),
        ],
        out_specs=pl.BlockSpec((tm, Cpad), lambda i: (i, 0)),
        input_output_aliases={0: 0},
        compiler_params=pltpu.CompilerParams(dimension_semantics=("parallel",)),
    )(flat, scale, shift)

    # (N*Ho*Wp, Cpad) -> (N, Ho, Wp, Cpad) -> drop junk cols / pad channels -> NCHW
    out = out_flat.reshape(N, Ho, Wp, Cpad)[:, :, :Wo, :Cout]
    return jnp.transpose(out, (0, 3, 1, 2))


def _reference(x, weight, gamma, beta, *, padding=1, eps=1e-3):
    """Same math (bf16 conv operands, f32 accumulation, train-mode BN, ReLU)."""
    conv = jax.lax.conv_general_dilated(
        x.astype(jnp.bfloat16),
        weight.astype(jnp.bfloat16),
        window_strides=(1, 1),
        padding=[(padding, padding)] * 2,
        dimension_numbers=("NCHW", "OIHW", "NCHW"),
        preferred_element_type=jnp.float32,
    )
    m = conv.mean(axis=(0, 2, 3), keepdims=True)
    v = conv.var(axis=(0, 2, 3), keepdims=True)
    g = gamma.reshape(1, -1, 1, 1)
    b = beta.reshape(1, -1, 1, 1)
    y = (conv - m) / jnp.sqrt(v + eps) * g + b
    return jnp.maximum(y, 0.0)


if __name__ == "__main__":
    # Module config: BasicConv2d(in_channels=4, out_channels=16,
    #                            kernel_size=3, padding=1)
    N, Cin, Cout = 2, 4, 16
    H = W = 16
    kh = kw = 3

    key = jax.random.PRNGKey(0)
    kx, kw_key = jax.random.split(key)
    x = jax.random.normal(kx, (N, Cin, H, W), dtype=jnp.float32)
    fan_in = Cin * kh * kw
    weight = (jax.random.normal(kw_key, (Cout, Cin, kh, kw), dtype=jnp.float32)
              / np.sqrt(fan_in))
    gamma = jnp.ones((Cout,), dtype=jnp.float32)   # BN default init
    beta = jnp.zeros((Cout,), dtype=jnp.float32)

    out = basic_conv2d(x, weight, gamma, beta, padding=1, eps=1e-3)
    out = jax.block_until_ready(out)

    ref = _reference(x, weight, gamma, beta, padding=1, eps=1e-3)
    np.testing.assert_allclose(np.asarray(out), np.asarray(ref),
                               atol=2e-3, rtol=2e-3)

    print("KERNEL_OK")
</pallas_src>

<mosaic_0001>
module attributes {stable_mosaic.version = 11 : i64} {
  func.func @_conv_stats_kernel(%arg0: i32, %arg1: memref<1x326x8xbf16, #tpu.memory_space<vmem>>, %arg2: memref<9x8x128xbf16, #tpu.memory_space<vmem>>, %arg3: memref<288x1xf32, #tpu.memory_space<vmem>>, %arg4: memref<1x288x128xf32, #tpu.memory_space<vmem>>, %arg5: memref<1x1x128xf32, #tpu.memory_space<vmem>>, %arg6: memref<1x1x128xf32, #tpu.memory_space<vmem>>) attributes {dimension_semantics = [#tpu.dimension_semantics<parallel>], iteration_bounds = array<i64: 2>, scalar_prefetch = 0 : i64, scratch_operands = 0 : i64, tpu.core_type = #tpu.core_type<tc>, window_params = [{transform_indices = @transform_0, window_bounds = array<i64: 1, 326, 8>}, {pipeline_mode = #tpu.pipeline_mode<synchronous>, transform_indices = @transform_1, window_bounds = array<i64: 9, 8, 128>}, {pipeline_mode = #tpu.pipeline_mode<synchronous>, transform_indices = @transform_2, window_bounds = array<i64: 288, 1>}, {transform_indices = @transform_3, window_bounds = array<i64: 1, 288, 128>}, {transform_indices = @transform_4, window_bounds = array<i64: 1, 1, 128>}, {transform_indices = @transform_5, window_bounds = array<i64: 1, 1, 128>}]} {
    %c0 = arith.constant 0 : index
    %c0_0 = arith.constant 0 : index
    %c0_1 = arith.constant 0 : index
    %0 = vector.load %arg1[%c0, %c0_0, %c0_1] : memref<1x326x8xbf16, #tpu.memory_space<vmem>>, vector<1x326x8xbf16>
    %c0_2 = arith.constant 0 : index
    %c0_3 = arith.constant 0 : index
    %c0_4 = arith.constant 0 : index
    %1 = vector.load %arg2[%c0_2, %c0_3, %c0_4] : memref<9x8x128xbf16, #tpu.memory_space<vmem>>, vector<9x8x128xbf16>
    %c0_5 = arith.constant 0 : index
    %c0_6 = arith.constant 0 : index
    %2 = vector.load %arg3[%c0_5, %c0_6] : memref<288x1xf32, #tpu.memory_space<vmem>>, vector<288x1xf32>
    %cst = arith.constant 0.000000e+00 : f32
    %3 = vector.broadcast %cst : f32 to vector<288x128xf32>
    %4 = vector.extract_strided_slice %0 {offsets = [0, 0, 0], sizes = [1, 288, 8], strides = [1, 1, 1]} : vector<1x326x8xbf16> to vector<1x288x8xbf16>
    %5 = vector.shape_cast %4 : vector<1x288x8xbf16> to vector<288x8xbf16>
    %6 = vector.extract_strided_slice %1 {offsets = [0, 0, 0], sizes = [1, 8, 128], strides = [1, 1, 1]} : vector<9x8x128xbf16> to vector<1x8x128xbf16>
    %7 = vector.shape_cast %6 : vector<1x8x128xbf16> to vector<8x128xbf16>
    %cst_7 = arith.constant dense<0.000000e+00> : vector<288x128xf32>
    %8 = tpu.matmul %5, %7, %cst_7 {dimension_numbers = #tpu.dot_dimension_numbers<[1], [0], [0], [1], [0, 0, 1, 1], [], []>} : vector<288x8xbf16>, vector<8x128xbf16>, vector<288x128xf32> -> vector<288x128xf32>
    %9 = arith.addf %3, %8 : vector<288x128xf32>
    %10 = vector.extract_strided_slice %0 {offsets = [0, 1, 0], sizes = [1, 288, 8], strides = [1, 1, 1]} : vector<1x326x8xbf16> to vector<1x288x8xbf16>
    %11 = vector.shape_cast %10 : vector<1x288x8xbf16> to vector<288x8xbf16>
    %12 = vector.extract_strided_slice %1 {offsets = [1, 0, 0], sizes = [1, 8, 128], strides = [1, 1, 1]} : vector<9x8x128xbf16> to vector<1x8x128xbf16>
    %13 = vector.shape_cast %12 : vector<1x8x128xbf16> to vector<8x128xbf16>
    %cst_8 = arith.constant dense<0.000000e+00> : vector<288x128xf32>
    %14 = tpu.matmul %11, %13, %cst_8 {dimension_numbers = #tpu.dot_dimension_numbers<[1], [0], [0], [1], [0, 0, 1, 1], [], []>} : vector<288x8xbf16>, vector<8x128xbf16>, vector<288x128xf32> -> vector<288x128xf32>
    %15 = arith.addf %9, %14 : vector<288x128xf32>
    %16 = vector.extract_strided_slice %0 {offsets = [0, 2, 0], sizes = [1, 288, 8], strides = [1, 1, 1]} : vector<1x326x8xbf16> to vector<1x288x8xbf16>
    %17 = vector.shape_cast %16 : vector<1x288x8xbf16> to vector<288x8xbf16>
    %18 = vector.extract_strided_slice %1 {offsets = [2, 0, 0], sizes = [1, 8, 128], strides = [1, 1, 1]} : vector<9x8x128xbf16> to vector<1x8x128xbf16>
    %19 = vector.shape_cast %18 : vector<1x8x128xbf16> to vector<8x128xbf16>
    %cst_9 = arith.constant dense<0.000000e+00> : vector<288x128xf32>
    %20 = tpu.matmul %17, %19, %cst_9 {dimension_numbers = #tpu.dot_dimension_numbers<[1], [0], [0], [1], [0, 0, 1, 1], [], []>} : vector<288x8xbf16>, vector<8x128xbf16>, vector<288x128xf32> -> vector<288x128xf32>
    %21 = arith.addf %15, %20 : vector<288x128xf32>
    %22 = vector.extract_strided_slice %0 {offsets = [0, 18, 0], sizes = [1, 288, 8], strides = [1, 1, 1]} : vector<1x326x8xbf16> to vector<1x288x8xbf16>
    %23 = vector.shape_cast %22 : vector<1x288x8xbf16> to vector<288x8xbf16>
    %24 = vector.extract_strided_slice %1 {offsets = [3, 0, 0], sizes = [1, 8, 128], strides = [1, 1, 1]} : vector<9x8x128xbf16> to vector<1x8x128xbf16>
    %25 = vector.shape_cast %24 : vector<1x8x128xbf16> to vector<8x128xbf16>
    %cst_10 = arith.constant dense<0.000000e+00> : vector<288x128xf32>
    %26 = tpu.matmul %23, %25, %cst_10 {dimension_numbers = #tpu.dot_dimension_numbers<[1], [0], [0], [1], [0, 0, 1, 1], [], []>} : vector<288x8xbf16>, vector<8x128xbf16>, vector<288x128xf32> -> vector<288x128xf32>
    %27 = arith.addf %21, %26 : vector<288x128xf32>
    %28 = vector.extract_strided_slice %0 {offsets = [0, 19, 0], sizes = [1, 288, 8], strides = [1, 1, 1]} : vector<1x326x8xbf16> to vector<1x288x8xbf16>
    %29 = vector.shape_cast %28 : vector<1x288x8xbf16> to vector<288x8xbf16>
    %30 = vector.extract_strided_slice %1 {offsets = [4, 0, 0], sizes = [1, 8, 128], strides = [1, 1, 1]} : vector<9x8x128xbf16> to vector<1x8x128xbf16>
    %31 = vector.shape_cast %30 : vector<1x8x128xbf16> to vector<8x128xbf16>
    %cst_11 = arith.constant dense<0.000000e+00> : vector<288x128xf32>
    %32 = tpu.matmul %29, %31, %cst_11 {dimension_numbers = #tpu.dot_dimension_numbers<[1], [0], [0], [1], [0, 0, 1, 1], [], []>} : vector<288x8xbf16>, vector<8x128xbf16>, vector<288x128xf32> -> vector<288x128xf32>
    %33 = arith.addf %27, %32 : vector<288x128xf32>
    %34 = vector.extract_strided_slice %0 {offsets = [0, 20, 0], sizes = [1, 288, 8], strides = [1, 1, 1]} : vector<1x326x8xbf16> to vector<1x288x8xbf16>
    %35 = vector.shape_cast %34 : vector<1x288x8xbf16> to vector<288x8xbf16>
    %36 = vector.extract_strided_slice %1 {offsets = [5, 0, 0], sizes = [1, 8, 128], strides = [1, 1, 1]} : vector<9x8x128xbf16> to vector<1x8x128xbf16>
    %37 = vector.shape_cast %36 : vector<1x8x128xbf16> to vector<8x128xbf16>
    %cst_12 = arith.constant dense<0.000000e+00> : vector<288x128xf32>
    %38 = tpu.matmul %35, %37, %cst_12 {dimension_numbers = #tpu.dot_dimension_numbers<[1], [0], [0], [1], [0, 0, 1, 1], [], []>} : vector<288x8xbf16>, vector<8x128xbf16>, vector<288x128xf32> -> vector<288x128xf32>
    %39 = arith.addf %33, %38 : vector<288x128xf32>
    %40 = vector.extract_strided_slice %0 {offsets = [0, 36, 0], sizes = [1, 288, 8], strides = [1, 1, 1]} : vector<1x326x8xbf16> to vector<1x288x8xbf16>
    %41 = vector.shape_cast %40 : vector<1x288x8xbf16> to vector<288x8xbf16>
    %42 = vector.extract_strided_slice %1 {offsets = [6, 0, 0], sizes = [1, 8, 128], strides = [1, 1, 1]} : vector<9x8x128xbf16> to vector<1x8x128xbf16>
    %43 = vector.shape_cast %42 : vector<1x8x128xbf16> to vector<8x128xbf16>
    %cst_13 = arith.constant dense<0.000000e+00> : vector<288x128xf32>
    %44 = tpu.matmul %41, %43, %cst_13 {dimension_numbers = #tpu.dot_dimension_numbers<[1], [0], [0], [1], [0, 0, 1, 1], [], []>} : vector<288x8xbf16>, vector<8x128xbf16>, vector<288x128xf32> -> vector<288x128xf32>
    %45 = arith.addf %39, %44 : vector<288x128xf32>
    %46 = vector.extract_strided_slice %0 {offsets = [0, 37, 0], sizes = [1, 288, 8], strides = [1, 1, 1]} : vector<1x326x8xbf16> to vector<1x288x8xbf16>
    %47 = vector.shape_cast %46 : vector<1x288x8xbf16> to vector<288x8xbf16>
    %48 = vector.extract_strided_slice %1 {offsets = [7, 0, 0], sizes = [1, 8, 128], strides = [1, 1, 1]} : vector<9x8x128xbf16> to vector<1x8x128xbf16>
    %49 = vector.shape_cast %48 : vector<1x8x128xbf16> to vector<8x128xbf16>
    %cst_14 = arith.constant dense<0.000000e+00> : vector<288x128xf32>
    %50 = tpu.matmul %47, %49, %cst_14 {dimension_numbers = #tpu.dot_dimension_numbers<[1], [0], [0], [1], [0, 0, 1, 1], [], []>} : vector<288x8xbf16>, vector<8x128xbf16>, vector<288x128xf32> -> vector<288x128xf32>
    %51 = arith.addf %45, %50 : vector<288x128xf32>
    %52 = vector.extract_strided_slice %0 {offsets = [0, 38, 0], sizes = [1, 288, 8], strides = [1, 1, 1]} : vector<1x326x8xbf16> to vector<1x288x8xbf16>
    %53 = vector.shape_cast %52 : vector<1x288x8xbf16> to vector<288x8xbf16>
    %54 = vector.extract_strided_slice %1 {offsets = [8, 0, 0], sizes = [1, 8, 128], strides = [1, 1, 1]} : vector<9x8x128xbf16> to vector<1x8x128xbf16>
    %55 = vector.shape_cast %54 : vector<1x8x128xbf16> to vector<8x128xbf16>
    %cst_15 = arith.constant dense<0.000000e+00> : vector<288x128xf32>
    %56 = tpu.matmul %53, %55, %cst_15 {dimension_numbers = #tpu.dot_dimension_numbers<[1], [0], [0], [1], [0, 0, 1, 1], [], []>} : vector<288x8xbf16>, vector<8x128xbf16>, vector<288x128xf32> -> vector<288x128xf32>
    %57 = arith.addf %51, %56 : vector<288x128xf32>
    %58 = vector.shape_cast %57 : vector<288x128xf32> to vector<1x288x128xf32>
    %c0_16 = arith.constant 0 : index
    %c0_17 = arith.constant 0 : index
    %c0_18 = arith.constant 0 : index
    %59 = vector.load %arg4[%c0_16, %c0_17, %c0_18] : memref<1x288x128xf32, #tpu.memory_space<vmem>>, vector<1x288x128xf32>
    tpu.vector_store %arg4[%c0_16, %c0_17, %c0_18], %58 {strides = array<i32>} : memref<1x288x128xf32, #tpu.memory_space<vmem>>, vector<1x288x128xf32>,
    %60 = vector.broadcast %2 : vector<288x1xf32> to vector<288x128xf32>
    %61 = arith.mulf %57, %60 : vector<288x128xf32>
    %cst_19 = arith.constant dense<0.000000e+00> : vector<128xf32>
    %62 = vector.multi_reduction <add>, %61, %cst_19 [0] : vector<288x128xf32> to vector<128xf32>
    %63 = vector.shape_cast %62 : vector<128xf32> to vector<1x128xf32>
    %64 = vector.shape_cast %63 : vector<1x128xf32> to vector<1x1x128xf32>
    %c0_20 = arith.constant 0 : index
    %c0_21 = arith.constant 0 : index
    %c0_22 = arith.constant 0 : index
    %65 = vector.load %arg5[%c0_20, %c0_21, %c0_22] : memref<1x1x128xf32, #tpu.memory_space<vmem>>, vector<1x1x128xf32>
    tpu.vector_store %arg5[%c0_20, %c0_21, %c0_22], %64 {strides = array<i32>} : memref<1x1x128xf32, #tpu.memory_space<vmem>>, vector<1x1x128xf32>,
    %66 = arith.mulf %57, %61 : vector<288x128xf32>
    %cst_23 = arith.constant dense<0.000000e+00> : vector<128xf32>
    %67 = vector.multi_reduction <add>, %66, %cst_23 [0] : vector<288x128xf32> to vector<128xf32>
    %68 = vector.shape_cast %67 : vector<128xf32> to vector<1x128xf32>
    %69 = vector.shape_cast %68 : vector<1x128xf32> to vector<1x1x128xf32>
    %c0_24 = arith.constant 0 : index
    %c0_25 = arith.constant 0 : index
    %c0_26 = arith.constant 0 : index
    %70 = vector.load %arg6[%c0_24, %c0_25, %c0_26] : memref<1x1x128xf32, #tpu.memory_space<vmem>>, vector<1x1x128xf32>
    tpu.vector_store %arg6[%c0_24, %c0_25, %c0_26], %69 {strides = array<i32>} : memref<1x1x128xf32, #tpu.memory_space<vmem>>, vector<1x1x128xf32>,
    return
  }
  func.func @transform_0(%arg0: i32) -> (i32, i32, i32) {
    %c0_i32 = arith.constant 0 : i32
    %c0_i32_0 = arith.constant 0 : i32
    %c0_i32_1 = arith.constant 0 : i32
    return %arg0, %c0_i32, %c0_i32_0 : i32, i32, i32
  }
  func.func @transform_1(%arg0: i32) -> (i32, i32, i32) {
    %c0_i32 = arith.constant 0 : i32
    %c0_i32_0 = arith.constant 0 : i32
    %c0_i32_1 = arith.constant 0 : i32
    %c0_i32_2 = arith.constant 0 : i32
    return %c0_i32, %c0_i32_0, %c0_i32_1 : i32, i32, i32
  }
  func.func @transform_2(%arg0: i32) -> (i32, i32) {
    %c0_i32 = arith.constant 0 : i32
    %c0_i32_0 = arith.constant 0 : i32
    %c0_i32_1 = arith.constant 0 : i32
    return %c0_i32, %c0_i32_0 : i32, i32
  }
  func.func @transform_3(%arg0: i32) -> (i32, i32, i32) {
    %c0_i32 = arith.constant 0 : i32
    %c0_i32_0 = arith.constant 0 : i32
    %c0_i32_1 = arith.constant 0 : i32
    return %arg0, %c0_i32, %c0_i32_0 : i32, i32, i32
  }
  func.func @transform_4(%arg0: i32) -> (i32, i32, i32) {
    %c0_i32 = arith.constant 0 : i32
    %c0_i32_0 = arith.constant 0 : i32
    %c0_i32_1 = arith.constant 0 : i32
    return %arg0, %c0_i32, %c0_i32_0 : i32, i32, i32
  }
  func.func @transform_5(%arg0: i32) -> (i32, i32, i32) {
    %c0_i32 = arith.constant 0 : i32
    %c0_i32_0 = arith.constant 0 : i32
    %c0_i32_1 = arith.constant 0 : i32
    return %arg0, %c0_i32, %c0_i32_0 : i32, i32, i32
  }
}

module attributes {stable_mosaic.version = 11 : i64} {
  func.func @_bn_relu_kernel(%arg0: i32, %arg1: memref<512x128xf32, #tpu.memory_space<vmem>>, %arg2: memref<1x128xf32, #tpu.memory_space<vmem>>, %arg3: memref<1x128xf32, #tpu.memory_space<vmem>>, %arg4: memref<512x128xf32, #tpu.memory_space<vmem>>) attributes {dimension_semantics = [#tpu.dimension_semantics<parallel>], iteration_bounds = array<i64: 2>, scalar_prefetch = 0 : i64, scratch_operands = 0 : i64, tpu.core_type = #tpu.core_type<tc>, window_params = [{transform_indices = @transform_0, window_bounds = array<i64: 512, 128>}, {pipeline_mode = #tpu.pipeline_mode<synchronous>, transform_indices = @transform_1, window_bounds = array<i64: 1, 128>}, {pipeline_mode = #tpu.pipeline_mode<synchronous>, transform_indices = @transform_2, window_bounds = array<i64: 1, 128>}, {transform_indices = @transform_3, window_bounds = array<i64: 512, 128>}]} {
    %c0 = arith.constant 0 : index
    %c0_0 = arith.constant 0 : index
    %0 = vector.load %arg1[%c0, %c0_0] : memref<512x128xf32, #tpu.memory_space<vmem>>, vector<512x128xf32>
    %c0_1 = arith.constant 0 : index
    %c0_2 = arith.constant 0 : index
    %1 = vector.load %arg2[%c0_1, %c0_2] : memref<1x128xf32, #tpu.memory_space<vmem>>, vector<1x128xf32>
    %2 = vector.broadcast %1 : vector<1x128xf32> to vector<512x128xf32>
    %3 = arith.mulf %0, %2 : vector<512x128xf32>
    %c0_3 = arith.constant 0 : index
    %c0_4 = arith.constant 0 : index
    %4 = vector.load %arg3[%c0_3, %c0_4] : memref<1x128xf32, #tpu.memory_space<vmem>>, vector<1x128xf32>
    %5 = vector.broadcast %4 : vector<1x128xf32> to vector<512x128xf32>
    %6 = arith.addf %3, %5 : vector<512x128xf32>
    %cst = arith.constant 0.000000e+00 : f32
    %7 = vector.broadcast %cst : f32 to vector<512x128xf32>
    %8 = arith.maximumf %6, %7 : vector<512x128xf32>
    %c0_5 = arith.constant 0 : index
    %c0_6 = arith.constant 0 : index
    %9 = vector.load %arg4[%c0_5, %c0_6] : memref<512x128xf32, #tpu.memory_space<vmem>>, vector<512x128xf32>
    tpu.vector_store %arg4[%c0_5, %c0_6], %8 {strides = array<i32>} : memref<512x128xf32, #tpu.memory_space<vmem>>, vector<512x128xf32>,
    return
  }
  func.func @transform_0(%arg0: i32) -> (i32, i32) {
    %c0_i32 = arith.constant 0 : i32
    %c0_i32_0 = arith.constant 0 : i32
    return %arg0, %c0_i32 : i32, i32
  }
  func.func @transform_1(%arg0: i32) -> (i32, i32) {
    %c0_i32 = arith.constant 0 : i32
    %c0_i32_0 = arith.constant 0 : i32
    %c0_i32_1 = arith.constant 0 : i32
    return %c0_i32, %c0_i32_0 : i32, i32
  }
  func.func @transform_2(%arg0: i32) -> (i32, i32) {
    %c0_i32 = arith.constant 0 : i32
    %c0_i32_0 = arith.constant 0 : i32
    %c0_i32_1 = arith.constant 0 : i32
    return %c0_i32, %c0_i32_0 : i32, i32
  }
  func.func @transform_3(%arg0: i32) -> (i32, i32) {
    %c0_i32 = arith.constant 0 : i32
    %c0_i32_0 = arith.constant 0 : i32
    return %arg0, %c0_i32 : i32, i32
  }
}

</mosaic_0001>

<llo_original>
// kernel: basic_conv2d.3
$region0: #{basic_conv2d.3}
  #allocation0 [shape = 'u32[]', space=smem, size = 0x4, offset = 0x4, fixed_abs, tag = 'smem constant byte address 0x4 - core index']
  #allocation1 [shape = 'u32[144,128]{1,0:T(1,128)}', space=vmem, size = 0x12000, scoped, tag = 'internal scratch']
  %s0 = inlined_call_operand.vmem [shape: f32[576,128], index: 0, kind: input, shape index: {}, may-alias: {0,3}]
  %s1 = inlined_call_operand.vmem [shape: f32[1,128], index: 1, kind: input, shape index: {}]
  %s2 = inlined_call_operand.vmem [shape: f32[1,128], index: 2, kind: input, shape index: {}]
  %s3 = inlined_call_operand.vmem [shape: f32[576,128], index: 3, kind: output, shape index: {}, may-alias: {0,3}]
  %s4 = sld [smem:[#allocation0]]
  $region93: #{basic_conv2d.3} parent=0
    _
  %s6 = ssub.s32 1, %s4
  %s7 = scalar_select 0, %s6, %s4
  $region1: #{basic_conv2d.3} parent=0
    #allocation2 [shape = 'u8[524288]{0}', space=vmem, size = 0x80000, scoped, tag = 'output window, operand 0']
    loop: start=0, step=1, limit=4
    $region2: #{basic_conv2d.3} parent=1 // loop_pre_header
      _
    $region3: #{basic_conv2d.3} parent=1 // loop_header
      %s9 = sphi 0, %s13
      %p10 = scmp.ge.s32.totalorder %s9, 4
      %s19 = sphi 0, %s21
      %s22 = sphi 0, %s19
      %s23 = sphi 0, %s22
      %s39 = sphi 0, %s23
      %s43 = sphi 0, %s43
      %s45 = sphi 0, %s43
      %s46 = sphi 0, %s45
      %s60 = sphi 0, %s46
      %s64 = sphi 0, %s64
      %s66 = sphi 0, %s64
      %s67 = sphi 0, %s66
      %s81 = sphi 0, %s67
      %s87 = sphi 0, %s89
      %s90 = sphi 0, %s87
      %s91 = sphi 0, %s90
      %s107 = sphi 0, %s91
    $region4: #{basic_conv2d.3} parent=1 // loop_header_branch
      %12 = sbr.rel (%p10) target = $region8
    $region5: #{basic_conv2d.3} parent=1 // loop_body
      %s14 = ssub.s32 %s9, 1
      %s15 = ssub.s32 %s9, 2
      %s16 = sadd.s32 %s9, 1
      %s17 = ssub.s32 %s9, %s16
      %p18 = scmp.eq.s32.totalorder %s17, 0
      %s20 = sadd.s32 %s19, 1
      %s21 = scalar_select %p18, %s19, %s20
      %p24 = pneg %p18
      %p25 = scmp.eq.s32.totalorder %s9, 1
      %p26 = por %p24, %p25
      %p27 = scmp.ne.s32.totalorder %s19, %s22
      %p28 = scmp.eq.s32.totalorder %s9, 0
      %p29 = por %p27, %p28
      %p30 = scmp.ne.s32.totalorder %s19, %s22
      %p31 = scmp.eq.s32.totalorder %s14, 1
      %p32 = por %p30, %p31
      %p33 = scmp.ne.s32.totalorder %s22, %s23
      %p34 = scmp.eq.s32.totalorder %s14, 0
      %p35 = por %p33, %p34
      %p36 = scmp.ne.s32.totalorder %s22, %s23
      %p37 = scmp.eq.s32.totalorder %s15, 1
      %p38 = por %p36, %p37
      %p40 = scmp.ne.s32.totalorder %s23, %s39
      %p41 = scmp.eq.s32.totalorder %s15, 0
      %p42 = por %p40, %p41
      %s44 = sadd.s32 %s43, 1
      %p47 = scmp.eq.s32.totalorder %s9, 1
      %p48 = scmp.ne.s32.totalorder %s43, %s45
      %p49 = scmp.eq.s32.totalorder %s9, 0
      %p50 = por %p48, %p49
      %p51 = scmp.ne.s32.totalorder %s43, %s45
      %p52 = scmp.eq.s32.totalorder %s14, 1
      %p53 = por %p51, %p52
      %p54 = scmp.ne.s32.totalorder %s45, %s46
      %p55 = scmp.eq.s32.totalorder %s14, 0
      %p56 = por %p54, %p55
      %p57 = scmp.ne.s32.totalorder %s45, %s46
      %p58 = scmp.eq.s32.totalorder %s15, 1
      %p59 = por %p57, %p58
      %p61 = scmp.ne.s32.totalorder %s46, %s60
      %p62 = scmp.eq.s32.totalorder %s15, 0
      %p63 = por %p61, %p62
      %s65 = sadd.s32 %s64, 1
      %p68 = scmp.eq.s32.totalorder %s9, 1
      %p69 = scmp.ne.s32.totalorder %s64, %s66
      %p70 = scmp.eq.s32.totalorder %s9, 0
      %p71 = por %p69, %p70
      %p72 = scmp.ne.s32.totalorder %s64, %s66
      %p73 = scmp.eq.s32.totalorder %s14, 1
      %p74 = por %p72, %p73
      %p75 = scmp.ne.s32.totalorder %s66, %s67
      %p76 = scmp.eq.s32.totalorder %s14, 0
      %p77 = por %p75, %p76
      %p78 = scmp.ne.s32.totalorder %s66, %s67
      %p79 = scmp.eq.s32.totalorder %s15, 1
      %p80 = por %p78, %p79
      %p82 = scmp.ne.s32.totalorder %s67, %s81
      %p83 = scmp.eq.s32.totalorder %s15, 0
      %p84 = por %p82, %p83
      %s85 = ssub.s32 %s9, %s16
      %p86 = scmp.eq.s32.totalorder %s85, 0
      %s88 = sadd.s32 %s87, 1
      %s89 = scalar_select %p86, %s87, %s88
      %p92 = pneg %p86
      %p93 = scmp.eq.s32.totalorder %s9, 1
      %p94 = por %p92, %p93
      %p95 = scmp.ne.s32.totalorder %s87, %s90
      %p96 = scmp.eq.s32.totalorder %s9, 0
      %p97 = por %p95, %p96
      %p98 = scmp.ne.s32.totalorder %s87, %s90
      %p99 = scmp.eq.s32.totalorder %s14, 1
      %p100 = por %p98, %p99
      %p101 = scmp.ne.s32.totalorder %s90, %s91
      %p102 = scmp.eq.s32.totalorder %s14, 0
      %p103 = por %p101, %p102
      %p104 = scmp.ne.s32.totalorder %s90, %s91
      %p105 = scmp.eq.s32.totalorder %s15, 1
      %p106 = por %p104, %p105
      %p108 = scmp.ne.s32.totalorder %s91, %s107
      %p109 = scmp.eq.s32.totalorder %s15, 0
      %p110 = por %p108, %p109
      %p111 = scmp.le.s32.totalorder 1, %s9
      %p112 = scmp.lt.s32.totalorder %s9, 3
      %p113 = pnand %p111, %p112
      %p114 = pneg %p113
      // Predicated region
      $region9: #{basic_conv2d.3} parent=5 // pred_check
        _
      $region10: #{basic_conv2d.3} parent=5 // pred_check_branch
        %116 = sbr.rel (%p113) target = $region12
      $region11: #{basic_conv2d.3} parent=5 // pred_region
        %s117 = ssub.s32 %s9, 1
        // Predicated region
        $region13: #{basic_conv2d.3} parent=11 // pred_check
          %p118 = pneg %p56
        $region14: #{basic_conv2d.3} parent=11 // pred_check_branch
          %120 = sbr.rel (%p118) target = $region16
        $region15: #{basic_conv2d.3} parent=11 // pred_region
          _
        $region16: #{basic_conv2d.3} parent=11 // pred_fallthru
          _
        // Predicated region
        $region17: #{basic_conv2d.3} parent=11 // pred_check
          %p121 = pneg %p77
        $region18: #{basic_conv2d.3} parent=11 // pred_check_branch
          %123 = sbr.rel (%p121) target = $region20
        $region19: #{basic_conv2d.3} parent=11 // pred_region
          _
        $region20: #{basic_conv2d.3} parent=11 // pred_fallthru
          _
      $region12: #{basic_conv2d.3} parent=5 // pred_fallthru
        _
      %p124 = scmp.lt.s32.totalorder %s9, 2
      // Predicated region
      $region21: #{basic_conv2d.3} parent=5 // pred_check
        %p125 = pneg %p124
      $region22: #{basic_conv2d.3} parent=5 // pred_check_branch
        %127 = sbr.rel (%p125) target = $region24
      $region23: #{basic_conv2d.3} parent=5 // pred_region
        // Predicated region
        $region25: #{basic_conv2d.3} parent=23 // pred_check
          %p128 = pneg %p29
        $region26: #{basic_conv2d.3} parent=23 // pred_check_branch
          %130 = sbr.rel (%p128) target = $region28
        $region27: #{basic_conv2d.3} parent=23 // pred_region
          %s131 = smul.u32 64, %s9
          %s132 = ssub.s32 72, %s131
          %p133 = scmp.lt.s32.totalorder %s132, 64
          %s134 = scalar_select %p133, %s132, 64
          %s135 = smul.u32 128, %s134
          %p136 = scmp.lt.s32.totalorder %s131, 71
          %s137 = scalar_select %p136, %s131, 71
          %s138 = smul.addr %s137, 8
          %s139 = scalar_lea.vmem %s0, %s138
          %s140 = smul.u32 64, %s9
          %s141 = ssub.s32 72, %s140
          %p142 = scmp.lt.s32.totalorder %s141, 64
          %s143 = scalar_select %p142, %s141, 64
          %s144 = smul.u32 128, %s143
        $region28: #{basic_conv2d.3} parent=23 // pred_fallthru
          _
      $region24: #{basic_conv2d.3} parent=5 // pred_fallthru
        _
      %p145 = scmp.le.s32.totalorder 1, %s9
      %p146 = scmp.lt.s32.totalorder %s9, 3
      %p147 = pnand %p145, %p146
      %p148 = pneg %p147
      // Predicated region
      $region29: #{basic_conv2d.3} parent=5 // pred_check
        _
      $region30: #{basic_conv2d.3} parent=5 // pred_check_branch
        %150 = sbr.rel (%p147) target = $region32
      $region31: #{basic_conv2d.3} parent=5 // pred_region
        %s151 = ssub.s32 %s9, 1
        %s152 = smul.u32 64, %s14
        %s153 = ssub.s32 72, %s152
        %p154 = scmp.lt.s32.totalorder %s153, 64
        %s155 = scalar_select %p154, %s153, 64
        %s156 = smul.u32 128, %s155
        %p157 = scmp.lt.s32.totalorder %s152, 71
        %s158 = scalar_select %p157, %s152, 71
        %s159 = smul.addr %s158, 8
        %s160 = scalar_lea.vmem %s0, %s159
        %p161 = pneg %p35
        %p162 = pneg %p32
        %p163 = pneg %p56
        %p164 = pneg %p53
        %p165 = pneg %p77
        %p166 = pneg %p74
        %p167 = pneg %p103
        %p168 = pneg %p100
        %s169 = sand.u32 %s90, 1
        %s170 = sand.u32 %s90, 1
        %s171 = smul.addr %s170, 512
        %s172 = scalar_lea.vmem [#allocation2], %s171
        %s173 = smul.u32 64, %s14
        %s174 = ssub.s32 72, %s173
        %p175 = scmp.lt.s32.totalorder %s174, 64
        %s176 = scalar_select %p175, %s174, 64
        %s177 = smul.u32 128, %s176
        %p178 = scmp.lt.s32.totalorder %s173, 71
        %s179 = scalar_select %p178, %s173, 71
        %s180 = smul.addr %s179, 8
        %s181 = scalar_lea.vmem %s0, %s180
        %s182 = smul.u32 64, %s14
        %s183 = ssub.s32 72, %s182
        %p184 = scmp.lt.s32.totalorder %s183, 64
        %s185 = scalar_select %p184, %s183, 64
        %s186 = smul.u32 128, %s185
        %s187 = smul.u32 64, %s14
        %s188 = ssub.s32 72, %s187
        %p189 = scmp.lt.s32.totalorder %s188, 64
        %s190 = scalar_select %p189, %s188, 64
        %s191 = smul.u32 128, %s190
        %v192 = vld [vmem:[%s181] sm:$0xff]
        %v193 = vld [vmem:[%s181 + $0x8] sm:$0xff]
        %v194 = vld [vmem:[%s181 + $0x10] sm:$0xff]
        %v195 = vld [vmem:[%s181 + $0x18] sm:$0xff]
        %v196 = vld [vmem:[%s181 + $0x20] sm:$0xff]
        %v197 = vld [vmem:[%s181 + $0x28] sm:$0xff]
        %v198 = vld [vmem:[%s181 + $0x30] sm:$0xff]
        %v199 = vld [vmem:[%s181 + $0x38] sm:$0xff]
        %v200 = vld [vmem:[%s181 + $0x40] sm:$0xff]
        %v201 = vld [vmem:[%s181 + $0x48] sm:$0xff]
        %v202 = vld [vmem:[%s181 + $0x50] sm:$0xff]
        %v203 = vld [vmem:[%s181 + $0x58] sm:$0xff]
        %v204 = vld [vmem:[%s181 + $0x60] sm:$0xff]
        %v205 = vld [vmem:[%s181 + $0x68] sm:$0xff]
        %v206 = vld [vmem:[%s181 + $0x70] sm:$0xff]
        %v207 = vld [vmem:[%s181 + $0x78] sm:$0xff]
        %v208 = vld [vmem:[%s181 + $0x80] sm:$0xff]
        %v209 = vld [vmem:[%s181 + $0x88] sm:$0xff]
        %v210 = vld [vmem:[%s181 + $0x90] sm:$0xff]
        %v211 = vld [vmem:[%s181 + $0x98] sm:$0xff]
        %v212 = vld [vmem:[%s181 + $0xa0] sm:$0xff]
        %v213 = vld [vmem:[%s181 + $0xa8] sm:$0xff]
        %v214 = vld [vmem:[%s181 + $0xb0] sm:$0xff]
        %v215 = vld [vmem:[%s181 + $0xb8] sm:$0xff]
        %v216 = vld [vmem:[%s181 + $0xc0] sm:$0xff]
        %v217 = vld [vmem:[%s181 + $0xc8] sm:$0xff]
        %v218 = vld [vmem:[%s181 + $0xd0] sm:$0xff]
        %v219 = vld [vmem:[%s181 + $0xd8] sm:$0xff]
        %v220 = vld [vmem:[%s181 + $0xe0] sm:$0xff]
        %v221 = vld [vmem:[%s181 + $0xe8] sm:$0xff]
        %v222 = vld [vmem:[%s181 + $0xf0] sm:$0xff]
        %v223 = vld [vmem:[%s181 + $0xf8] sm:$0xff]
        %v224 = vld [vmem:[%s181 + $0x100] sm:$0xff]
        %v225 = vld [vmem:[%s181 + $0x108] sm:$0xff]
        %v226 = vld [vmem:[%s181 + $0x110] sm:$0xff]
        %v227 = vld [vmem:[%s181 + $0x118] sm:$0xff]
        %v228 = vld [vmem:[%s181 + $0x120] sm:$0xff]
        %v229 = vld [vmem:[%s181 + $0x128] sm:$0xff]
        %v230 = vld [vmem:[%s181 + $0x130] sm:$0xff]
        %v231 = vld [vmem:[%s181 + $0x138] sm:$0xff]
        %v232 = vld [vmem:[%s181 + $0x140] sm:$0xff]
        %v233 = vld [vmem:[%s181 + $0x148] sm:$0xff]
        %v234 = vld [vmem:[%s181 + $0x150] sm:$0xff]
        %v235 = vld [vmem:[%s181 + $0x158] sm:$0xff]
        %v236 = vld [vmem:[%s181 + $0x160] sm:$0xff]
        %v237 = vld [vmem:[%s181 + $0x168] sm:$0xff]
        %v238 = vld [vmem:[%s181 + $0x170] sm:$0xff]
        %v239 = vld [vmem:[%s181 + $0x178] sm:$0xff]
        %v240 = vld [vmem:[%s181 + $0x180] sm:$0xff]
        %v241 = vld [vmem:[%s181 + $0x188] sm:$0xff]
        %v242 = vld [vmem:[%s181 + $0x190] sm:$0xff]
        %v243 = vld [vmem:[%s181 + $0x198] sm:$0xff]
        %v244 = vld [vmem:[%s181 + $0x1a0] sm:$0xff]
        %v245 = vld [vmem:[%s181 + $0x1a8] sm:$0xff]
        %v246 = vld [vmem:[%s181 + $0x1b0] sm:$0xff]
        %v247 = vld [vmem:[%s181 + $0x1b8] sm:$0xff]
        %v248 = vld [vmem:[%s181 + $0x1c0] sm:$0xff]
        %v249 = vld [vmem:[%s181 + $0x1c8] sm:$0xff]
        %v250 = vld [vmem:[%s181 + $0x1d0] sm:$0xff]
        %v251 = vld [vmem:[%s181 + $0x1d8] sm:$0xff]
        %v252 = vld [vmem:[%s181 + $0x1e0] sm:$0xff]
        %v253 = vld [vmem:[%s181 + $0x1e8] sm:$0xff]
        %v254 = vld [vmem:[%s181 + $0x1f0] sm:$0xff]
        %v255 = vld [vmem:[%s181 + $0x1f8] sm:$0xff]
        %v256 = vld [vmem:[%s1] sm:$0x1]
        %v258 = vlaneseq
        %v259 = vshrl.u32 %v258, 7
        %v260 = vsub.s32 0, %v259
        %v261 = vrot.slane %v256, %v260
        %v263 = vmul.f32 %v192, %v261
        %v264 = vmul.f32 %v193, %v261
        %v265 = vmul.f32 %v194, %v261
        %v266 = vmul.f32 %v195, %v261
        %v267 = vmul.f32 %v196, %v261
        %v268 = vmul.f32 %v197, %v261
        %v269 = vmul.f32 %v198, %v261
        %v270 = vmul.f32 %v199, %v261
        %v271 = vmul.f32 %v200, %v261
        %v272 = vmul.f32 %v201, %v261
        %v273 = vmul.f32 %v202, %v261
        %v274 = vmul.f32 %v203, %v261
        %v275 = vmul.f32 %v204, %v261
        %v276 = vmul.f32 %v205, %v261
        %v277 = vmul.f32 %v206, %v261
        %v278 = vmul.f32 %v207, %v261
        %v279 = vmul.f32 %v208, %v261
        %v280 = vmul.f32 %v209, %v261
        %v281 = vmul.f32 %v210, %v261
        %v282 = vmul.f32 %v211, %v261
        %v283 = vmul.f32 %v212, %v261
        %v284 = vmul.f32 %v213, %v261
        %v285 = vmul.f32 %v214, %v261
        %v286 = vmul.f32 %v215, %v261
        %v287 = vmul.f32 %v216, %v261
        %v288 = vmul.f32 %v217, %v261
        %v289 = vmul.f32 %v218, %v261
        %v290 = vmul.f32 %v219, %v261
        %v291 = vmul.f32 %v220, %v261
        %v292 = vmul.f32 %v221, %v261
        %v293 = vmul.f32 %v222, %v261
        %v294 = vmul.f32 %v223, %v261
        %v295 = vmul.f32 %v224, %v261
        %v296 = vmul.f32 %v225, %v261
        %v297 = vmul.f32 %v226, %v261
        %v298 = vmul.f32 %v227, %v261
        %v299 = vmul.f32 %v228, %v261
        %v300 = vmul.f32 %v229, %v261
        %v301 = vmul.f32 %v230, %v261
        %v302 = vmul.f32 %v231, %v261
        %v303 = vmul.f32 %v232, %v261
        %v304 = vmul.f32 %v233, %v261
        %v305 = vmul.f32 %v234, %v261
        %v306 = vmul.f32 %v235, %v261
        %v307 = vmul.f32 %v236, %v261
        %v308 = vmul.f32 %v237, %v261
        %v309 = vmul.f32 %v238, %v261
        %v310 = vmul.f32 %v239, %v261
        %v311 = vmul.f32 %v240, %v261
        %v312 = vmul.f32 %v241, %v261
        %v313 = vmul.f32 %v242, %v261
        %v314 = vmul.f32 %v243, %v261
        %v315 = vmul.f32 %v244, %v261
        %v316 = vmul.f32 %v245, %v261
        %v317 = vmul.f32 %v246, %v261
        %v318 = vmul.f32 %v247, %v261
        %v319 = vmul.f32 %v248, %v261
        %v320 = vmul.f32 %v249, %v261
        %v321 = vmul.f32 %v250, %v261
        %v322 = vmul.f32 %v251, %v261
        %v323 = vmul.f32 %v252, %v261
        %v324 = vmul.f32 %v253, %v261
        %v325 = vmul.f32 %v254, %v261
        %v326 = vmul.f32 %v255, %v261
        %v327 = vld [vmem:[%s2] sm:$0x1]
        %v329 = vlaneseq
        %v330 = vshrl.u32 %v329, 7
        %v331 = vsub.s32 0, %v330
        %v332 = vrot.slane %v327, %v331
        %v334 = vadd.f32 %v263, %v332
        %v335 = vadd.f32 %v264, %v332
        %v336 = vadd.f32 %v265, %v332
        %v337 = vadd.f32 %v266, %v332
        %v338 = vadd.f32 %v267, %v332
        %v339 = vadd.f32 %v268, %v332
        %v340 = vadd.f32 %v269, %v332
        %v341 = vadd.f32 %v270, %v332
        %v342 = vadd.f32 %v271, %v332
        %v343 = vadd.f32 %v272, %v332
        %v344 = vadd.f32 %v273, %v332
        %v345 = vadd.f32 %v274, %v332
        %v346 = vadd.f32 %v275, %v332
        %v347 = vadd.f32 %v276, %v332
        %v348 = vadd.f32 %v277, %v332
        %v349 = vadd.f32 %v278, %v332
        %v350 = vadd.f32 %v279, %v332
        %v351 = vadd.f32 %v280, %v332
        %v352 = vadd.f32 %v281, %v332
        %v353 = vadd.f32 %v282, %v332
        %v354 = vadd.f32 %v283, %v332
        %v355 = vadd.f32 %v284, %v332
        %v356 = vadd.f32 %v285, %v332
        %v357 = vadd.f32 %v286, %v332
        %v358 = vadd.f32 %v287, %v332
        %v359 = vadd.f32 %v288, %v332
        %v360 = vadd.f32 %v289, %v332
        %v361 = vadd.f32 %v290, %v332
        %v362 = vadd.f32 %v291, %v332
        %v363 = vadd.f32 %v292, %v332
        %v364 = vadd.f32 %v293, %v332
        %v365 = vadd.f32 %v294, %v332
        %v366 = vadd.f32 %v295, %v332
        %v367 = vadd.f32 %v296, %v332
        %v368 = vadd.f32 %v297, %v332
        %v369 = vadd.f32 %v298, %v332
        %v370 = vadd.f32 %v299, %v332
        %v371 = vadd.f32 %v300, %v332
        %v372 = vadd.f32 %v301, %v332
        %v373 = vadd.f32 %v302, %v332
        %v374 = vadd.f32 %v303, %v332
        %v375 = vadd.f32 %v304, %v332
        %v376 = vadd.f32 %v305, %v332
        %v377 = vadd.f32 %v306, %v332
        %v378 = vadd.f32 %v307, %v332
        %v379 = vadd.f32 %v308, %v332
        %v380 = vadd.f32 %v309, %v332
        %v381 = vadd.f32 %v310, %v332
        %v382 = vadd.f32 %v311, %v332
        %v383 = vadd.f32 %v312, %v332
        %v384 = vadd.f32 %v313, %v332
        %v385 = vadd.f32 %v314, %v332
        %v386 = vadd.f32 %v315, %v332
        %v387 = vadd.f32 %v316, %v332
        %v388 = vadd.f32 %v317, %v332
        %v389 = vadd.f32 %v318, %v332
        %v390 = vadd.f32 %v319, %v332
        %v391 = vadd.f32 %v320, %v332
        %v392 = vadd.f32 %v321, %v332
        %v393 = vadd.f32 %v322, %v332
        %v394 = vadd.f32 %v323, %v332
        %v395 = vadd.f32 %v324, %v332
        %v396 = vadd.f32 %v325, %v332
        %v397 = vadd.f32 %v326, %v332
        %v398 = vmax.f32 %v334, 0.0
        %v399 = vmax.f32 %v335, 0.0
        %v400 = vmax.f32 %v336, 0.0
        %v401 = vmax.f32 %v337, 0.0
        %v402 = vmax.f32 %v338, 0.0
        %v403 = vmax.f32 %v339, 0.0
        %v404 = vmax.f32 %v340, 0.0
        %v405 = vmax.f32 %v341, 0.0
        %v406 = vmax.f32 %v342, 0.0
        %v407 = vmax.f32 %v343, 0.0
        %v408 = vmax.f32 %v344, 0.0
        %v409 = vmax.f32 %v345, 0.0
        %v410 = vmax.f32 %v346, 0.0
        %v411 = vmax.f32 %v347, 0.0
        %v412 = vmax.f32 %v348, 0.0
        %v413 = vmax.f32 %v349, 0.0
        %v414 = vmax.f32 %v350, 0.0
        %v415 = vmax.f32 %v351, 0.0
        %v416 = vmax.f32 %v352, 0.0
        %v417 = vmax.f32 %v353, 0.0
        %v418 = vmax.f32 %v354, 0.0
        %v419 = vmax.f32 %v355, 0.0
        %v420 = vmax.f32 %v356, 0.0
        %v421 = vmax.f32 %v357, 0.0
        %v422 = vmax.f32 %v358, 0.0
        %v423 = vmax.f32 %v359, 0.0
        %v424 = vmax.f32 %v360, 0.0
        %v425 = vmax.f32 %v361, 0.0
        %v426 = vmax.f32 %v362, 0.0
        %v427 = vmax.f32 %v363, 0.0
        %v428 = vmax.f32 %v364, 0.0
        %v429 = vmax.f32 %v365, 0.0
        %v430 = vmax.f32 %v366, 0.0
        %v431 = vmax.f32 %v367, 0.0
        %v432 = vmax.f32 %v368, 0.0
        %v433 = vmax.f32 %v369, 0.0
        %v434 = vmax.f32 %v370, 0.0
        %v435 = vmax.f32 %v371, 0.0
        %v436 = vmax.f32 %v372, 0.0
        %v437 = vmax.f32 %v373, 0.0
        %v438 = vmax.f32 %v374, 0.0
        %v439 = vmax.f32 %v375, 0.0
        %v440 = vmax.f32 %v376, 0.0
        %v441 = vmax.f32 %v377, 0.0
        %v442 = vmax.f32 %v378, 0.0
        %v443 = vmax.f32 %v379, 0.0
        %v444 = vmax.f32 %v380, 0.0
        %v445 = vmax.f32 %v381, 0.0
        %v446 = vmax.f32 %v382, 0.0
        %v447 = vmax.f32 %v383, 0.0
        %v448 = vmax.f32 %v384, 0.0
        %v449 = vmax.f32 %v385, 0.0
        %v450 = vmax.f32 %v386, 0.0
        %v451 = vmax.f32 %v387, 0.0
        %v452 = vmax.f32 %v388, 0.0
        %v453 = vmax.f32 %v389, 0.0
        %v454 = vmax.f32 %v390, 0.0
        %v455 = vmax.f32 %v391, 0.0
        %v456 = vmax.f32 %v392, 0.0
        %v457 = vmax.f32 %v393, 0.0
        %v458 = vmax.f32 %v394, 0.0
        %v459 = vmax.f32 %v395, 0.0
        %v460 = vmax.f32 %v396, 0.0
        %v461 = vmax.f32 %v397, 0.0
        %462 = vst [vmem:[%s172] sm:$0xff] %v398
        %463 = vst [vmem:[%s172 + $0x8] sm:$0xff] %v399
        %464 = vst [vmem:[%s172 + $0x10] sm:$0xff] %v400
        %465 = vst [vmem:[%s172 + $0x18] sm:$0xff] %v401
        %466 = vst [vmem:[%s172 + $0x20] sm:$0xff] %v402
        %467 = vst [vmem:[%s172 + $0x28] sm:$0xff] %v403
        %468 = vst [vmem:[%s172 + $0x30] sm:$0xff] %v404
        %469 = vst [vmem:[%s172 + $0x38] sm:$0xff] %v405
        %470 = vst [vmem:[%s172 + $0x40] sm:$0xff] %v406
        %471 = vst [vmem:[%s172 + $0x48] sm:$0xff] %v407
        %472 = vst [vmem:[%s172 + $0x50] sm:$0xff] %v408
        %473 = vst [vmem:[%s172 + $0x58] sm:$0xff] %v409
        %474 = vst [vmem:[%s172 + $0x60] sm:$0xff] %v410
        %475 = vst [vmem:[%s172 + $0x68] sm:$0xff] %v411
        %476 = vst [vmem:[%s172 + $0x70] sm:$0xff] %v412
        %477 = vst [vmem:[%s172 + $0x78] sm:$0xff] %v413
        %478 = vst [vmem:[%s172 + $0x80] sm:$0xff] %v414
        %479 = vst [vmem:[%s172 + $0x88] sm:$0xff] %v415
        %480 = vst [vmem:[%s172 + $0x90] sm:$0xff] %v416
        %481 = vst [vmem:[%s172 + $0x98] sm:$0xff] %v417
        %482 = vst [vmem:[%s172 + $0xa0] sm:$0xff] %v418
        %483 = vst [vmem:[%s172 + $0xa8] sm:$0xff] %v419
        %484 = vst [vmem:[%s172 + $0xb0] sm:$0xff] %v420
        %485 = vst [vmem:[%s172 + $0xb8] sm:$0xff] %v421
        %486 = vst [vmem:[%s172 + $0xc0] sm:$0xff] %v422
        %487 = vst [vmem:[%s172 + $0xc8] sm:$0xff] %v423
        %488 = vst [vmem:[%s172 + $0xd0] sm:$0xff] %v424
        %489 = vst [vmem:[%s172 + $0xd8] sm:$0xff] %v425
        %490 = vst [vmem:[%s172 + $0xe0] sm:$0xff] %v426
        %491 = vst [vmem:[%s172 + $0xe8] sm:$0xff] %v427
        %492 = vst [vmem:[%s172 + $0xf0] sm:$0xff] %v428
        %493 = vst [vmem:[%s172 + $0xf8] sm:$0xff] %v429
        %494 = vst [vmem:[%s172 + $0x100] sm:$0xff] %v430
        %495 = vst [vmem:[%s172 + $0x108] sm:$0xff] %v431
        %496 = vst [vmem:[%s172 + $0x110] sm:$0xff] %v432
        %497 = vst [vmem:[%s172 + $0x118] sm:$0xff] %v433
        %498 = vst [vmem:[%s172 + $0x120] sm:$0xff] %v434
        %499 = vst [vmem:[%s172 + $0x128] sm:$0xff] %v435
        %500 = vst [vmem:[%s172 + $0x130] sm:$0xff] %v436
        %501 = vst [vmem:[%s172 + $0x138] sm:$0xff] %v437
        %502 = vst [vmem:[%s172 + $0x140] sm:$0xff] %v438
        %503 = vst [vmem:[%s172 + $0x148] sm:$0xff] %v439
        %504 = vst [vmem:[%s172 + $0x150] sm:$0xff] %v440
        %505 = vst [vmem:[%s172 + $0x158] sm:$0xff] %v441
        %506 = vst [vmem:[%s172 + $0x160] sm:$0xff] %v442
        %507 = vst [vmem:[%s172 + $0x168] sm:$0xff] %v443
        %508 = vst [vmem:[%s172 + $0x170] sm:$0xff] %v444
        %509 = vst [vmem:[%s172 + $0x178] sm:$0xff] %v445
        %510 = vst [vmem:[%s172 + $0x180] sm:$0xff] %v446
        %511 = vst [vmem:[%s172 + $0x188] sm:$0xff] %v447
        %512 = vst [vmem:[%s172 + $0x190] sm:$0xff] %v448
        %513 = vst [vmem:[%s172 + $0x198] sm:$0xff] %v449
        %514 = vst [vmem:[%s172 + $0x1a0] sm:$0xff] %v450
        %515 = vst [vmem:[%s172 + $0x1a8] sm:$0xff] %v451
        %516 = vst [vmem:[%s172 + $0x1b0] sm:$0xff] %v452
        %517 = vst [vmem:[%s172 + $0x1b8] sm:$0xff] %v453
        %518 = vst [vmem:[%s172 + $0x1c0] sm:$0xff] %v454
        %519 = vst [vmem:[%s172 + $0x1c8] sm:$0xff] %v455
        %520 = vst [vmem:[%s172 + $0x1d0] sm:$0xff] %v456
        %521 = vst [vmem:[%s172 + $0x1d8] sm:$0xff] %v457
        %522 = vst [vmem:[%s172 + $0x1e0] sm:$0xff] %v458
        %523 = vst [vmem:[%s172 + $0x1e8] sm:$0xff] %v459
        %524 = vst [vmem:[%s172 + $0x1f0] sm:$0xff] %v460
        %525 = vst [vmem:[%s172 + $0x1f8] sm:$0xff] %v461
        %s526 = sand.u32 %s90, 1
        %s527 = sand.u32 %s90, 1
        %s528 = smul.addr %s527, 512
        %s529 = scalar_lea.vmem [#allocation2], %s528
        // Predicated region
        $region33: #{basic_conv2d.3} parent=31 // pred_check
          %p530 = pneg %p100
        $region34: #{basic_conv2d.3} parent=31 // pred_check_branch
          %532 = sbr.rel (%p530) target = $region36
        $region35: #{basic_conv2d.3} parent=31 // pred_region
          %s533 = smul.u32 64, %s14
          %s534 = ssub.s32 72, %s533
          %p535 = scmp.lt.s32.totalorder %s534, 64
          %s536 = scalar_select %p535, %s534, 64
          %s537 = smul.u32 128, %s536
          %p538 = scmp.ne.s32.totalorder 0, %s537
          %s539 = smul.addr %s533, 8
          %s540 = scalar_lea.vmem %s3, %s539
          // Predicated region
          $region37: #{basic_conv2d.3} parent=35 // pred_check
            %p541 = pneg %p538
          $region38: #{basic_conv2d.3} parent=35 // pred_check_branch
            %543 = sbr.rel (%p541) target = $region40
          $region39: #{basic_conv2d.3} parent=35 // pred_region
            // Predicated region
            $region41: #{basic_conv2d.3} parent=39 // pred_check
              _
            $region42: #{basic_conv2d.3} parent=39 // pred_check_branch
              %545 = sbr.rel (0) target = $region44
            $region43: #{basic_conv2d.3} parent=39 // pred_region
              // Predicated region
              $region63: #{basic_conv2d.3} parent=43 // pred_check
                _
              $region64: #{basic_conv2d.3} parent=43 // pred_check_branch
                %721 = sbr.rel (0) target = $region66
              $region65: #{basic_conv2d.3} parent=43 // pred_region
                %s722 = sshrl.u32 %s536, 6
                // While loop
                $region67: #{basic_conv2d.3} parent=65 // loop_pre_header
                  _
                $region68: #{basic_conv2d.3} parent=65 // loop_header
                  %s724 = sphi 0, %s726
                  %p725 = scmp.ge.s32.totalorder %s724, %s722
                  %s729 = sphi 0, %s862
                  %s730 = sphi %s529, %s865
                  %s731 = sphi %s540, %s866
                $region69: #{basic_conv2d.3} parent=65 // loop_header_branch
                  %728 = sbr.rel (%p725) target = $region73
                $region70: #{basic_conv2d.3} parent=65 // loop_body
                  %v732 = vld [vmem:[%s730] sm:$0xff]
                  %733 = vst [vmem:[%s731] sm:$0xff] %v732
                  %v734 = vld [vmem:[%s730 + $0x8] sm:$0xff]
                  %735 = vst [vmem:[%s731 + $0x8] sm:$0xff] %v734
                  %v736 = vld [vmem:[%s730 + $0x10] sm:$0xff]
                  %737 = vst [vmem:[%s731 + $0x10] sm:$0xff] %v736
                  %v738 = vld [vmem:[%s730 + $0x18] sm:$0xff]
                  %739 = vst [vmem:[%s731 + $0x18] sm:$0xff] %v738
                  %v740 = vld [vmem:[%s730 + $0x20] sm:$0xff]
                  %741 = vst [vmem:[%s731 + $0x20] sm:$0xff] %v740
                  %v742 = vld [vmem:[%s730 + $0x28] sm:$0xff]
                  %743 = vst [vmem:[%s731 + $0x28] sm:$0xff] %v742
                  %v744 = vld [vmem:[%s730 + $0x30] sm:$0xff]
                  %745 = vst [vmem:[%s731 + $0x30] sm:$0xff] %v744
                  %v746 = vld [vmem:[%s730 + $0x38] sm:$0xff]
                  %747 = vst [vmem:[%s731 + $0x38] sm:$0xff] %v746
                  %v748 = vld [vmem:[%s730 + $0x40] sm:$0xff]
                  %749 = vst [vmem:[%s731 + $0x40] sm:$0xff] %v748
                  %v750 = vld [vmem:[%s730 + $0x48] sm:$0xff]
                  %751 = vst [vmem:[%s731 + $0x48] sm:$0xff] %v750
                  %v752 = vld [vmem:[%s730 + $0x50] sm:$0xff]
                  %753 = vst [vmem:[%s731 + $0x50] sm:$0xff] %v752
                  %v754 = vld [vmem:[%s730 + $0x58] sm:$0xff]
                  %755 = vst [vmem:[%s731 + $0x58] sm:$0xff] %v754
                  %v756 = vld [vmem:[%s730 + $0x60] sm:$0xff]
                  %757 = vst [vmem:[%s731 + $0x60] sm:$0xff] %v756
                  %v758 = vld [vmem:[%s730 + $0x68] sm:$0xff]
                  %759 = vst [vmem:[%s731 + $0x68] sm:$0xff] %v758
                  %v760 = vld [vmem:[%s730 + $0x70] sm:$0xff]
                  %761 = vst [vmem:[%s731 + $0x70] sm:$0xff] %v760
                  %v762 = vld [vmem:[%s730 + $0x78] sm:$0xff]
                  %763 = vst [vmem:[%s731 + $0x78] sm:$0xff] %v762
                  %v764 = vld [vmem:[%s730 + $0x80] sm:$0xff]
                  %765 = vst [vmem:[%s731 + $0x80] sm:$0xff] %v764
                  %v766 = vld [vmem:[%s730 + $0x88] sm:$0xff]
                  %767 = vst [vmem:[%s731 + $0x88] sm:$0xff] %v766
                  %v768 = vld [vmem:[%s730 + $0x90] sm:$0xff]
                  %769 = vst [vmem:[%s731 + $0x90] sm:$0xff] %v768
                  %v770 = vld [vmem:[%s730 + $0x98] sm:$0xff]
                  %771 = vst [vmem:[%s731 + $0x98] sm:$0xff] %v770
                  %v772 = vld [vmem:[%s730 + $0xa0] sm:$0xff]
                  %773 = vst [vmem:[%s731 + $0xa0] sm:$0xff] %v772
                  %v774 = vld [vmem:[%s730 + $0xa8] sm:$0xff]
                  %775 = vst [vmem:[%s731 + $0xa8] sm:$0xff] %v774
                  %v776 = vld [vmem:[%s730 + $0xb0] sm:$0xff]
                  %777 = vst [vmem:[%s731 + $0xb0] sm:$0xff] %v776
                  %v778 = vld [vmem:[%s730 + $0xb8] sm:$0xff]
                  %779 = vst [vmem:[%s731 + $0xb8] sm:$0xff] %v778
                  %v780 = vld [vmem:[%s730 + $0xc0] sm:$0xff]
                  %781 = vst [vmem:[%s731 + $0xc0] sm:$0xff] %v780
                  %v782 = vld [vmem:[%s730 + $0xc8] sm:$0xff]
                  %783 = vst [vmem:[%s731 + $0xc8] sm:$0xff] %v782
                  %v784 = vld [vmem:[%s730 + $0xd0] sm:$0xff]
                  %785 = vst [vmem:[%s731 + $0xd0] sm:$0xff] %v784
                  %v786 = vld [vmem:[%s730 + $0xd8] sm:$0xff]
                  %787 = vst [vmem:[%s731 + $0xd8] sm:$0xff] %v786
                  %v788 = vld [vmem:[%s730 + $0xe0] sm:$0xff]
                  %789 = vst [vmem:[%s731 + $0xe0] sm:$0xff] %v788
                  %v790 = vld [vmem:[%s730 + $0xe8] sm:$0xff]
                  %791 = vst [vmem:[%s731 + $0xe8] sm:$0xff] %v790
                  %v792 = vld [vmem:[%s730 + $0xf0] sm:$0xff]
                  %793 = vst [vmem:[%s731 + $0xf0] sm:$0xff] %v792
                  %v794 = vld [vmem:[%s730 + $0xf8] sm:$0xff]
                  %795 = vst [vmem:[%s731 + $0xf8] sm:$0xff] %v794
                  %v796 = vld [vmem:[%s730 + $0x100] sm:$0xff]
                  %797 = vst [vmem:[%s731 + $0x100] sm:$0xff] %v796
                  %v798 = vld [vmem:[%s730 + $0x108] sm:$0xff]
                  %799 = vst [vmem:[%s731 + $0x108] sm:$0xff] %v798
                  %v800 = vld [vmem:[%s730 + $0x110] sm:$0xff]
                  %801 = vst [vmem:[%s731 + $0x110] sm:$0xff] %v800
                  %v802 = vld [vmem:[%s730 + $0x118] sm:$0xff]
                  %803 = vst [vmem:[%s731 + $0x118] sm:$0xff] %v802
                  %v804 = vld [vmem:[%s730 + $0x120] sm:$0xff]
                  %805 = vst [vmem:[%s731 + $0x120] sm:$0xff] %v804
                  %v806 = vld [vmem:[%s730 + $0x128] sm:$0xff]
                  %807 = vst [vmem:[%s731 + $0x128] sm:$0xff] %v806
                  %v808 = vld [vmem:[%s730 + $0x130] sm:$0xff]
                  %809 = vst [vmem:[%s731 + $0x130] sm:$0xff] %v808
                  %v810 = vld [vmem:[%s730 + $0x138] sm:$0xff]
                  %811 = vst [vmem:[%s731 + $0x138] sm:$0xff] %v810
                  %v812 = vld [vmem:[%s730 + $0x140] sm:$0xff]
                  %813 = vst [vmem:[%s731 + $0x140] sm:$0xff] %v812
                  %v814 = vld [vmem:[%s730 + $0x148] sm:$0xff]
                  %815 = vst [vmem:[%s731 + $0x148] sm:$0xff] %v814
                  %v816 = vld [vmem:[%s730 + $0x150] sm:$0xff]
                  %817 = vst [vmem:[%s731 + $0x150] sm:$0xff] %v816
                  %v818 = vld [vmem:[%s730 + $0x158] sm:$0xff]
                  %819 = vst [vmem:[%s731 + $0x158] sm:$0xff] %v818
                  %v820 = vld [vmem:[%s730 + $0x160] sm:$0xff]
                  %821 = vst [vmem:[%s731 + $0x160] sm:$0xff] %v820
                  %v822 = vld [vmem:[%s730 + $0x168] sm:$0xff]
                  %823 = vst [vmem:[%s731 + $0x168] sm:$0xff] %v822
                  %v824 = vld [vmem:[%s730 + $0x170] sm:$0xff]
                  %825 = vst [vmem:[%s731 + $0x170] sm:$0xff] %v824
                  %v826 = vld [vmem:[%s730 + $0x178] sm:$0xff]
                  %827 = vst [vmem:[%s731 + $0x178] sm:$0xff] %v826
                  %v828 = vld [vmem:[%s730 + $0x180] sm:$0xff]
                  %829 = vst [vmem:[%s731 + $0x180] sm:$0xff] %v828
                  %v830 = vld [vmem:[%s730 + $0x188] sm:$0xff]
                  %831 = vst [vmem:[%s731 + $0x188] sm:$0xff] %v830
                  %v832 = vld [vmem:[%s730 + $0x190] sm:$0xff]
                  %833 = vst [vmem:[%s731 + $0x190] sm:$0xff] %v832
                  %v834 = vld [vmem:[%s730 + $0x198] sm:$0xff]
                  %835 = vst [vmem:[%s731 + $0x198] sm:$0xff] %v834
                  %v836 = vld [vmem:[%s730 + $0x1a0] sm:$0xff]
                  %837 = vst [vmem:[%s731 + $0x1a0] sm:$0xff] %v836
                  %v838 = vld [vmem:[%s730 + $0x1a8] sm:$0xff]
                  %839 = vst [vmem:[%s731 + $0x1a8] sm:$0xff] %v838
                  %v840 = vld [vmem:[%s730 + $0x1b0] sm:$0xff]
                  %841 = vst [vmem:[%s731 + $0x1b0] sm:$0xff] %v840
                  %v842 = vld [vmem:[%s730 + $0x1b8] sm:$0xff]
                  %843 = vst [vmem:[%s731 + $0x1b8] sm:$0xff] %v842
                  %v844 = vld [vmem:[%s730 + $0x1c0] sm:$0xff]
                  %845 = vst [vmem:[%s731 + $0x1c0] sm:$0xff] %v844
                  %v846 = vld [vmem:[%s730 + $0x1c8] sm:$0xff]
                  %847 = vst [vmem:[%s731 + $0x1c8] sm:$0xff] %v846
                  %v848 = vld [vmem:[%s730 + $0x1d0] sm:$0xff]
                  %849 = vst [vmem:[%s731 + $0x1d0] sm:$0xff] %v848
                  %v850 = vld [vmem:[%s730 + $0x1d8] sm:$0xff]
                  %851 = vst [vmem:[%s731 + $0x1d8] sm:$0xff] %v850
                  %v852 = vld [vmem:[%s730 + $0x1e0] sm:$0xff]
                  %853 = vst [vmem:[%s731 + $0x1e0] sm:$0xff] %v852
                  %v854 = vld [vmem:[%s730 + $0x1e8] sm:$0xff]
                  %855 = vst [vmem:[%s731 + $0x1e8] sm:$0xff] %v854
                  %v856 = vld [vmem:[%s730 + $0x1f0] sm:$0xff]
                  %857 = vst [vmem:[%s731 + $0x1f0] sm:$0xff] %v856
                  %v858 = vld [vmem:[%s730 + $0x1f8] sm:$0xff]
                  %859 = vst [vmem:[%s731 + $0x1f8] sm:$0xff] %v858
                  %s860 = sadd.s32 1, %s729
                  %p861 = scmp.ge.s32.totalorder %s860, %s722
                  %s862 = scalar_select %p861, 0, %s860
                  %s863 = smul.u32 %s862, 512
                  %s864 = smul.u32 %s862, 512
                  %s865 = scalar_lea.vmem %s529, %s863 [#allocation2]
                  %s866 = scalar_lea.vmem %s540, %s864
                $region71: #{basic_conv2d.3} parent=65 // loop_footer
                  %s726 = sadd.s32 %s724, 1
                $region72: #{basic_conv2d.3} parent=65 // loop_footer_branch
                  %723 = sbr.rel target = $region68
                $region73: #{basic_conv2d.3} parent=65 // loop_exit
                  _
                %s867 = sshrl.u32 %s536, 6
                %s868 = sand.u32 %s536, 63
                %s869 = smul.u32 %s867, 64
                %s870 = smul.u32 8, %s869
                %s871 = scalar_lea.vmem %s529, %s870 [#allocation2]
                %s872 = smul.u32 8, %s869
                %s873 = scalar_lea.vmem %s540, %s872
                // While loop
                $region74: #{basic_conv2d.3} parent=65 // loop_pre_header
                  _
                $region75: #{basic_conv2d.3} parent=65 // loop_header
                  %s875 = sphi 0, %s877
                  %p876 = scmp.ge.s32.totalorder %s875, %s868
                  %s880 = sphi 0, %s887
                  %s881 = sphi %s871, %s890
                  %s882 = sphi %s873, %s891
                $region76: #{basic_conv2d.3} parent=65 // loop_header_branch
                  %879 = sbr.rel (%p876) target = $region80
                $region77: #{basic_conv2d.3} parent=65 // loop_body
                  %v883 = vld [vmem:[%s881] sm:$0xff]
                  %884 = vst [vmem:[%s882] sm:$0xff] %v883
                  %s885 = sadd.s32 1, %s880
                  %p886 = scmp.ge.s32.totalorder %s885, %s868
                  %s887 = scalar_select %p886, 0, %s885
                  %s888 = smul.u32 %s887, 8
                  %s889 = smul.u32 %s887, 8
                  %s890 = scalar_lea.vmem %s871, %s888 [#allocation2]
                  %s891 = scalar_lea.vmem %s873, %s889
                $region78: #{basic_conv2d.3} parent=65 // loop_footer
                  %s877 = sadd.s32 %s875, 1
                $region79: #{basic_conv2d.3} parent=65 // loop_footer_branch
                  %874 = sbr.rel target = $region75
                $region80: #{basic_conv2d.3} parent=65 // loop_exit
                  _
              $region66: #{basic_conv2d.3} parent=43 // pred_fallthru
                _
              // Predicated region
              $region81: #{basic_conv2d.3} parent=43 // pred_check
                _
              $region82: #{basic_conv2d.3} parent=43 // pred_check_branch
                %893 = sbr.rel target = $region84
              $region83: #{basic_conv2d.3} parent=43 // pred_region
                _
              $region84: #{basic_conv2d.3} parent=43 // pred_fallthru
                _
            $region44: #{basic_conv2d.3} parent=39 // pred_fallthru
              _
            // Predicated region
            $region45: #{basic_conv2d.3} parent=39 // pred_check
              _
            $region46: #{basic_conv2d.3} parent=39 // pred_check_branch
              %547 = sbr.rel target = $region48
            $region47: #{basic_conv2d.3} parent=39 // pred_region
              %s549 = ssub.s32 256, 1
              %s550 = sshrl.u32 %s536, 6
              // While loop
              $region49: #{basic_conv2d.3} parent=47 // loop_pre_header
                _
              $region50: #{basic_conv2d.3} parent=47 // loop_header
                %s552 = sphi 0, %s554
                %p553 = scmp.ge.s32.totalorder %s552, %s550
                %s557 = sphi 0, %s690
                %s558 = sphi %s529, %s693
                %s559 = sphi %s540, %s694
              $region51: #{basic_conv2d.3} parent=47 // loop_header_branch
                %556 = sbr.rel (%p553) target = $region55
              $region52: #{basic_conv2d.3} parent=47 // loop_body
                %v560 = vld [vmem:[%s558] sm:%s549]
                %561 = vst [vmem:[%s559] sm:%s549] %v560
                %v562 = vld [vmem:[%s558 + $0x8] sm:%s549]
                %563 = vst [vmem:[%s559 + $0x8] sm:%s549] %v562
                %v564 = vld [vmem:[%s558 + $0x10] sm:%s549]
                %565 = vst [vmem:[%s559 + $0x10] sm:%s549] %v564
                %v566 = vld [vmem:[%s558 + $0x18] sm:%s549]
                %567 = vst [vmem:[%s559 + $0x18] sm:%s549] %v566
                %v568 = vld [vmem:[%s558 + $0x20] sm:%s549]
                %569 = vst [vmem:[%s559 + $0x20] sm:%s549] %v568
                %v570 = vld [vmem:[%s558 + $0x28] sm:%s549]
                %571 = vst [vmem:[%s559 + $0x28] sm:%s549] %v570
                %v572 = vld [vmem:[%s558 + $0x30] sm:%s549]
                %573 = vst [vmem:[%s559 + $0x30] sm:%s549] %v572
                %v574 = vld [vmem:[%s558 + $0x38] sm:%s549]
                %575 = vst [vmem:[%s559 + $0x38] sm:%s549] %v574
                %v576 = vld [vmem:[%s558 + $0x40] sm:%s549]
                %577 = vst [vmem:[%s559 + $0x40] sm:%s549] %v576
                %v578 = vld [vmem:[%s558 + $0x48] sm:%s549]
                %579 = vst [vmem:[%s559 + $0x48] sm:%s549] %v578
                %v580 = vld [vmem:[%s558 + $0x50] sm:%s549]
                %581 = vst [vmem:[%s559 + $0x50] sm:%s549] %v580
                %v582 = vld [vmem:[%s558 + $0x58] sm:%s549]
                %583 = vst [vmem:[%s559 + $0x58] sm:%s549] %v582
                %v584 = vld [vmem:[%s558 + $0x60] sm:%s549]
                %585 = vst [vmem:[%s559 + $0x60] sm:%s549] %v584
                %v586 = vld [vmem:[%s558 + $0x68] sm:%s549]
                %587 = vst [vmem:[%s559 + $0x68] sm:%s549] %v586
                %v588 = vld [vmem:[%s558 + $0x70] sm:%s549]
                %589 = vst [vmem:[%s559 + $0x70] sm:%s549] %v588
                %v590 = vld [vmem:[%s558 + $0x78] sm:%s549]
                %591 = vst [vmem:[%s559 + $0x78] sm:%s549] %v590
                %v592 = vld [vmem:[%s558 + $0x80] sm:%s549]
                %593 = vst [vmem:[%s559 + $0x80] sm:%s549] %v592
                %v594 = vld [vmem:[%s558 + $0x88] sm:%s549]
                %595 = vst [vmem:[%s559 + $0x88] sm:%s549] %v594
                %v596 = vld [vmem:[%s558 + $0x90] sm:%s549]
                %597 = vst [vmem:[%s559 + $0x90] sm:%s549] %v596
                %v598 = vld [vmem:[%s558 + $0x98] sm:%s549]
                %599 = vst [vmem:[%s559 + $0x98] sm:%s549] %v598
                %v600 = vld [vmem:[%s558 + $0xa0] sm:%s549]
                %601 = vst [vmem:[%s559 + $0xa0] sm:%s549] %v600
                %v602 = vld [vmem:[%s558 + $0xa8] sm:%s549]
                %603 = vst [vmem:[%s559 + $0xa8] sm:%s549] %v602
                %v604 = vld [vmem:[%s558 + $0xb0] sm:%s549]
                %605 = vst [vmem:[%s559 + $0xb0] sm:%s549] %v604
                %v606 = vld [vmem:[%s558 + $0xb8] sm:%s549]
                %607 = vst [vmem:[%s559 + $0xb8] sm:%s549] %v606
                %v608 = vld [vmem:[%s558 + $0xc0] sm:%s549]
                %609 = vst [vmem:[%s559 + $0xc0] sm:%s549] %v608
                %v610 = vld [vmem:[%s558 + $0xc8] sm:%s549]
                %611 = vst [vmem:[%s559 + $0xc8] sm:%s549] %v610
                %v612 = vld [vmem:[%s558 + $0xd0] sm:%s549]
                %613 = vst [vmem:[%s559 + $0xd0] sm:%s549] %v612
                %v614 = vld [vmem:[%s558 + $0xd8] sm:%s549]
                %615 = vst [vmem:[%s559 + $0xd8] sm:%s549] %v614
                %v616 = vld [vmem:[%s558 + $0xe0] sm:%s549]
                %617 = vst [vmem:[%s559 + $0xe0] sm:%s549] %v616
                %v618 = vld [vmem:[%s558 + $0xe8] sm:%s549]
                %619 = vst [vmem:[%s559 + $0xe8] sm:%s549] %v618
                %v620 = vld [vmem:[%s558 + $0xf0] sm:%s549]
                %621 = vst [vmem:[%s559 + $0xf0] sm:%s549] %v620
                %v622 = vld [vmem:[%s558 + $0xf8] sm:%s549]
                %623 = vst [vmem:[%s559 + $0xf8] sm:%s549] %v622
                %v624 = vld [vmem:[%s558 + $0x100] sm:%s549]
                %625 = vst [vmem:[%s559 + $0x100] sm:%s549] %v624
                %v626 = vld [vmem:[%s558 + $0x108] sm:%s549]
                %627 = vst [vmem:[%s559 + $0x108] sm:%s549] %v626
                %v628 = vld [vmem:[%s558 + $0x110] sm:%s549]
                %629 = vst [vmem:[%s559 + $0x110] sm:%s549] %v628
                %v630 = vld [vmem:[%s558 + $0x118] sm:%s549]
                %631 = vst [vmem:[%s559 + $0x118] sm:%s549] %v630
                %v632 = vld [vmem:[%s558 + $0x120] sm:%s549]
                %633 = vst [vmem:[%s559 + $0x120] sm:%s549] %v632
                %v634 = vld [vmem:[%s558 + $0x128] sm:%s549]
                %635 = vst [vmem:[%s559 + $0x128] sm:%s549] %v634
                %v636 = vld [vmem:[%s558 + $0x130] sm:%s549]
                %637 = vst [vmem:[%s559 + $0x130] sm:%s549] %v636
                %v638 = vld [vmem:[%s558 + $0x138] sm:%s549]
                %639 = vst [vmem:[%s559 + $0x138] sm:%s549] %v638
                %v640 = vld [vmem:[%s558 + $0x140] sm:%s549]
                %641 = vst [vmem:[%s559 + $0x140] sm:%s549] %v640
                %v642 = vld [vmem:[%s558 + $0x148] sm:%s549]
                %643 = vst [vmem:[%s559 + $0x148] sm:%s549] %v642
                %v644 = vld [vmem:[%s558 + $0x150] sm:%s549]
                %645 = vst [vmem:[%s559 + $0x150] sm:%s549] %v644
                %v646 = vld [vmem:[%s558 + $0x158] sm:%s549]
                %647 = vst [vmem:[%s559 + $0x158] sm:%s549] %v646
                %v648 = vld [vmem:[%s558 + $0x160] sm:%s549]
                %649 = vst [vmem:[%s559 + $0x160] sm:%s549] %v648
                %v650 = vld [vmem:[%s558 + $0x168] sm:%s549]
                %651 = vst [vmem:[%s559 + $0x168] sm:%s549] %v650
                %v652 = vld [vmem:[%s558 + $0x170] sm:%s549]
                %653 = vst [vmem:[%s559 + $0x170] sm:%s549] %v652
                %v654 = vld [vmem:[%s558 + $0x178] sm:%s549]
                %655 = vst [vmem:[%s559 + $0x178] sm:%s549] %v654
                %v656 = vld [vmem:[%s558 + $0x180] sm:%s549]
                %657 = vst [vmem:[%s559 + $0x180] sm:%s549] %v656
                %v658 = vld [vmem:[%s558 + $0x188] sm:%s549]
                %659 = vst [vmem:[%s559 + $0x188] sm:%s549] %v658
                %v660 = vld [vmem:[%s558 + $0x190] sm:%s549]
                %661 = vst [vmem:[%s559 + $0x190] sm:%s549] %v660
                %v662 = vld [vmem:[%s558 + $0x198] sm:%s549]
                %663 = vst [vmem:[%s559 + $0x198] sm:%s549] %v662
                %v664 = vld [vmem:[%s558 + $0x1a0] sm:%s549]
                %665 = vst [vmem:[%s559 + $0x1a0] sm:%s549] %v664
                %v666 = vld [vmem:[%s558 + $0x1a8] sm:%s549]
                %667 = vst [vmem:[%s559 + $0x1a8] sm:%s549] %v666
                %v668 = vld [vmem:[%s558 + $0x1b0] sm:%s549]
                %669 = vst [vmem:[%s559 + $0x1b0] sm:%s549] %v668
                %v670 = vld [vmem:[%s558 + $0x1b8] sm:%s549]
                %671 = vst [vmem:[%s559 + $0x1b8] sm:%s549] %v670
                %v672 = vld [vmem:[%s558 + $0x1c0] sm:%s549]
                %673 = vst [vmem:[%s559 + $0x1c0] sm:%s549] %v672
                %v674 = vld [vmem:[%s558 + $0x1c8] sm:%s549]
                %675 = vst [vmem:[%s559 + $0x1c8] sm:%s549] %v674
                %v676 = vld [vmem:[%s558 + $0x1d0] sm:%s549]
                %677 = vst [vmem:[%s559 + $0x1d0] sm:%s549] %v676
                %v678 = vld [vmem:[%s558 + $0x1d8] sm:%s549]
                %679 = vst [vmem:[%s559 + $0x1d8] sm:%s549] %v678
                %v680 = vld [vmem:[%s558 + $0x1e0] sm:%s549]
                %681 = vst [vmem:[%s559 + $0x1e0] sm:%s549] %v680
                %v682 = vld [vmem:[%s558 + $0x1e8] sm:%s549]
                %683 = vst [vmem:[%s559 + $0x1e8] sm:%s549] %v682
                %v684 = vld [vmem:[%s558 + $0x1f0] sm:%s549]
                %685 = vst [vmem:[%s559 + $0x1f0] sm:%s549] %v684
                %v686 = vld [vmem:[%s558 + $0x1f8] sm:%s549]
                %687 = vst [vmem:[%s559 + $0x1f8] sm:%s549] %v686
                %s688 = sadd.s32 1, %s557
                %p689 = scmp.ge.s32.totalorder %s688, %s550
                %s690 = scalar_select %p689, 0, %s688
                %s691 = smul.u32 %s690, 512
                %s692 = smul.u32 %s690, 512
                %s693 = scalar_lea.vmem %s529, %s691 [#allocation2]
                %s694 = scalar_lea.vmem %s540, %s692
              $region53: #{basic_conv2d.3} parent=47 // loop_footer
                %s554 = sadd.s32 %s552, 1
              $region54: #{basic_conv2d.3} parent=47 // loop_footer_branch
                %551 = sbr.rel target = $region50
              $region55: #{basic_conv2d.3} parent=47 // loop_exit
                _
              %s695 = sshrl.u32 %s536, 6
              %s696 = sand.u32 %s536, 63
              %s697 = smul.u32 %s695, 64
              %s698 = smul.u32 8, %s697
              %s699 = scalar_lea.vmem %s529, %s698 [#allocation2]
              %s700 = smul.u32 8, %s697
              %s701 = scalar_lea.vmem %s540, %s700
              // While loop
              $region56: #{basic_conv2d.3} parent=47 // loop_pre_header
                _
              $region57: #{basic_conv2d.3} parent=47 // loop_header
                %s703 = sphi 0, %s705
                %p704 = scmp.ge.s32.totalorder %s703, %s696
                %s708 = sphi 0, %s715
                %s709 = sphi %s699, %s718
                %s710 = sphi %s701, %s719
              $region58: #{basic_conv2d.3} parent=47 // loop_header_branch
                %707 = sbr.rel (%p704) target = $region62
              $region59: #{basic_conv2d.3} parent=47 // loop_body
                %v711 = vld [vmem:[%s709] sm:%s549]
                %712 = vst [vmem:[%s710] sm:%s549] %v711
                %s713 = sadd.s32 1, %s708
                %p714 = scmp.ge.s32.totalorder %s713, %s696
                %s715 = scalar_select %p714, 0, %s713
                %s716 = smul.u32 %s715, 8
                %s717 = smul.u32 %s715, 8
                %s718 = scalar_lea.vmem %s699, %s716 [#allocation2]
                %s719 = scalar_lea.vmem %s701, %s717
              $region60: #{basic_conv2d.3} parent=47 // loop_footer
                %s705 = sadd.s32 %s703, 1
              $region61: #{basic_conv2d.3} parent=47 // loop_footer_branch
                %702 = sbr.rel target = $region57
              $region62: #{basic_conv2d.3} parent=47 // loop_exit
                _
            $region48: #{basic_conv2d.3} parent=39 // pred_fallthru
              _
          $region40: #{basic_conv2d.3} parent=35 // pred_fallthru
            _
          %894 = vnop
        $region36: #{basic_conv2d.3} parent=31 // pred_fallthru
          _
      $region32: #{basic_conv2d.3} parent=5 // pred_fallthru
        _
      %p895 = scmp.le.s32.totalorder 2, %s9
      // Predicated region
      $region85: #{basic_conv2d.3} parent=5 // pred_check
        %p896 = pneg %p895
      $region86: #{basic_conv2d.3} parent=5 // pred_check_branch
        %898 = sbr.rel (%p896) target = $region88
      $region87: #{basic_conv2d.3} parent=5 // pred_region
        %s899 = ssub.s32 %s9, 2
        // Predicated region
        $region89: #{basic_conv2d.3} parent=87 // pred_check
          %p900 = pneg %p106
        $region90: #{basic_conv2d.3} parent=87 // pred_check_branch
          %902 = sbr.rel (%p900) target = $region92
        $region91: #{basic_conv2d.3} parent=87 // pred_region
          %s903 = sand.u32 %s91, 1
          %s904 = sand.u32 %s91, 1
          %s905 = smul.addr %s904, 512
          %s906 = scalar_lea.vmem [#allocation2], %s905
        $region92: #{basic_conv2d.3} parent=87 // pred_fallthru
          _
      $region88: #{basic_conv2d.3} parent=5 // pred_fallthru
        _
    $region6: #{basic_conv2d.3} parent=1 // loop_footer
      %s13 = sadd.s32 1, %s9
    $region7: #{basic_conv2d.3} parent=1 // loop_footer_branch
      %8 = sbr.rel target = $region3
    $region8: #{basic_conv2d.3} parent=1 // loop_exit
      _

// kernel: basic_conv2d.2
$region0: #{basic_conv2d.2}
  #allocation0 [shape = 'u32[]', space=smem, size = 0x4, offset = 0x4, fixed_abs, tag = 'smem constant byte address 0x4 - core index']
  #allocation1 [shape = 'u32[144,128]{1,0:T(1,128)}', space=vmem, size = 0x12000, scoped, tag = 'internal scratch']
  %s0 = inlined_call_operand.vmem [shape: bf16[2,326,8], index: 0, kind: input, shape index: {}]
  %s1 = inlined_call_operand.vmem [shape: bf16[9,8,128], index: 1, kind: input, shape index: {}]
  %s2 = inlined_call_operand.vmem [shape: f32[288,1], index: 2, kind: input, shape index: {}]
  %s3 = inlined_call_operand.vmem [shape: f32[2,288,128], index: 3, kind: output, shape index: {0}]
  %s4 = inlined_call_operand.vmem [shape: f32[2,1,128], index: 4, kind: output, shape index: {1}]
  %s5 = inlined_call_operand.vmem [shape: f32[2,1,128], index: 5, kind: output, shape index: {2}]
  %6 = xla_tuple %s3, %s4, %s5
  %s7 = sld [smem:[#allocation0]]
  $region61: #{basic_conv2d.2} parent=0
    _
  %s9 = ssub.s32 1, %s7
  %s10 = scalar_select 0, %s9, %s7
  loop: start=0, step=1, limit=4
  $region2: #{basic_conv2d.2} parent=0 // loop_pre_header
    _
  $region3: #{basic_conv2d.2} parent=0 // loop_header
    %s12 = sphi 0, %s16
    %p13 = scmp.ge.s32.totalorder %s12, 4
    %s22 = sphi 0, %s24
    %s25 = sphi 0, %s22
    %s26 = sphi 0, %s25
    %s42 = sphi 0, %s26
    %s46 = sphi 0, %s46
    %s48 = sphi 0, %s46
    %s49 = sphi 0, %s48
    %s63 = sphi 0, %s49
    %s67 = sphi 0, %s67
    %s69 = sphi 0, %s67
    %s70 = sphi 0, %s69
    %s84 = sphi 0, %s70
    %s90 = sphi 0, %s92
    %s93 = sphi 0, %s90
    %s94 = sphi 0, %s93
    %s110 = sphi 0, %s94
    %s116 = sphi 0, %s118
    %s119 = sphi 0, %s116
    %s120 = sphi 0, %s119
    %s136 = sphi 0, %s120
    %s142 = sphi 0, %s144
    %s145 = sphi 0, %s142
    %s146 = sphi 0, %s145
    %s162 = sphi 0, %s146
  $region4: #{basic_conv2d.2} parent=0 // loop_header_branch
    %15 = sbr.rel (%p13) target = $region8
  $region5: #{basic_conv2d.2} parent=0 // loop_body
    %s17 = ssub.s32 %s12, 1
    %s18 = ssub.s32 %s12, 2
    %s19 = sadd.s32 %s12, 1
    %s20 = ssub.s32 %s12, %s19
    %p21 = scmp.eq.s32.totalorder %s20, 0
    %s23 = sadd.s32 %s22, 1
    %s24 = scalar_select %p21, %s22, %s23
    %p27 = pneg %p21
    %p28 = scmp.eq.s32.totalorder %s12, 1
    %p29 = por %p27, %p28
    %p30 = scmp.ne.s32.totalorder %s22, %s25
    %p31 = scmp.eq.s32.totalorder %s12, 0
    %p32 = por %p30, %p31
    %p33 = scmp.ne.s32.totalorder %s22, %s25
    %p34 = scmp.eq.s32.totalorder %s17, 1
    %p35 = por %p33, %p34
    %p36 = scmp.ne.s32.totalorder %s25, %s26
    %p37 = scmp.eq.s32.totalorder %s17, 0
    %p38 = por %p36, %p37
    %p39 = scmp.ne.s32.totalorder %s25, %s26
    %p40 = scmp.eq.s32.totalorder %s18, 1
    %p41 = por %p39, %p40
    %p43 = scmp.ne.s32.totalorder %s26, %s42
    %p44 = scmp.eq.s32.totalorder %s18, 0
    %p45 = por %p43, %p44
    %s47 = sadd.s32 %s46, 1
    %p50 = scmp.eq.s32.totalorder %s12, 1
    %p51 = scmp.ne.s32.totalorder %s46, %s48
    %p52 = scmp.eq.s32.totalorder %s12, 0
    %p53 = por %p51, %p52
    %p54 = scmp.ne.s32.totalorder %s46, %s48
    %p55 = scmp.eq.s32.totalorder %s17, 1
    %p56 = por %p54, %p55
    %p57 = scmp.ne.s32.totalorder %s48, %s49
    %p58 = scmp.eq.s32.totalorder %s17, 0
    %p59 = por %p57, %p58
    %p60 = scmp.ne.s32.totalorder %s48, %s49
    %p61 = scmp.eq.s32.totalorder %s18, 1
    %p62 = por %p60, %p61
    %p64 = scmp.ne.s32.totalorder %s49, %s63
    %p65 = scmp.eq.s32.totalorder %s18, 0
    %p66 = por %p64, %p65
    %s68 = sadd.s32 %s67, 1
    %p71 = scmp.eq.s32.totalorder %s12, 1
    %p72 = scmp.ne.s32.totalorder %s67, %s69
    %p73 = scmp.eq.s32.totalorder %s12, 0
    %p74 = por %p72, %p73
    %p75 = scmp.ne.s32.totalorder %s67, %s69
    %p76 = scmp.eq.s32.totalorder %s17, 1
    %p77 = por %p75, %p76
    %p78 = scmp.ne.s32.totalorder %s69, %s70
    %p79 = scmp.eq.s32.totalorder %s17, 0
    %p80 = por %p78, %p79
    %p81 = scmp.ne.s32.totalorder %s69, %s70
    %p82 = scmp.eq.s32.totalorder %s18, 1
    %p83 = por %p81, %p82
    %p85 = scmp.ne.s32.totalorder %s70, %s84
    %p86 = scmp.eq.s32.totalorder %s18, 0
    %p87 = por %p85, %p86
    %s88 = ssub.s32 %s12, %s19
    %p89 = scmp.eq.s32.totalorder %s88, 0
    %s91 = sadd.s32 %s90, 1
    %s92 = scalar_select %p89, %s90, %s91
    %p95 = pneg %p89
    %p96 = scmp.eq.s32.totalorder %s12, 1
    %p97 = por %p95, %p96
    %p98 = scmp.ne.s32.totalorder %s90, %s93
    %p99 = scmp.eq.s32.totalorder %s12, 0
    %p100 = por %p98, %p99
    %p101 = scmp.ne.s32.totalorder %s90, %s93
    %p102 = scmp.eq.s32.totalorder %s17, 1
    %p103 = por %p101, %p102
    %p104 = scmp.ne.s32.totalorder %s93, %s94
    %p105 = scmp.eq.s32.totalorder %s17, 0
    %p106 = por %p104, %p105
    %p107 = scmp.ne.s32.totalorder %s93, %s94
    %p108 = scmp.eq.s32.totalorder %s18, 1
    %p109 = por %p107, %p108
    %p111 = scmp.ne.s32.totalorder %s94, %s110
    %p112 = scmp.eq.s32.totalorder %s18, 0
    %p113 = por %p111, %p112
    %s114 = ssub.s32 %s12, %s19
    %p115 = scmp.eq.s32.totalorder %s114, 0
    %s117 = sadd.s32 %s116, 1
    %s118 = scalar_select %p115, %s116, %s117
    %p121 = pneg %p115
    %p122 = scmp.eq.s32.totalorder %s12, 1
    %p123 = por %p121, %p122
    %p124 = scmp.ne.s32.totalorder %s116, %s119
    %p125 = scmp.eq.s32.totalorder %s12, 0
    %p126 = por %p124, %p125
    %p127 = scmp.ne.s32.totalorder %s116, %s119
    %p128 = scmp.eq.s32.totalorder %s17, 1
    %p129 = por %p127, %p128
    %p130 = scmp.ne.s32.totalorder %s119, %s120
    %p131 = scmp.eq.s32.totalorder %s17, 0
    %p132 = por %p130, %p131
    %p133 = scmp.ne.s32.totalorder %s119, %s120
    %p134 = scmp.eq.s32.totalorder %s18, 1
    %p135 = por %p133, %p134
    %p137 = scmp.ne.s32.totalorder %s120, %s136
    %p138 = scmp.eq.s32.totalorder %s18, 0
    %p139 = por %p137, %p138
    %s140 = ssub.s32 %s12, %s19
    %p141 = scmp.eq.s32.totalorder %s140, 0
    %s143 = sadd.s32 %s142, 1
    %s144 = scalar_select %p141, %s142, %s143
    %p147 = pneg %p141
    %p148 = scmp.eq.s32.totalorder %s12, 1
    %p149 = por %p147, %p148
    %p150 = scmp.ne.s32.totalorder %s142, %s145
    %p151 = scmp.eq.s32.totalorder %s12, 0
    %p152 = por %p150, %p151
    %p153 = scmp.ne.s32.totalorder %s142, %s145
    %p154 = scmp.eq.s32.totalorder %s17, 1
    %p155 = por %p153, %p154
    %p156 = scmp.ne.s32.totalorder %s145, %s146
    %p157 = scmp.eq.s32.totalorder %s17, 0
    %p158 = por %p156, %p157
    %p159 = scmp.ne.s32.totalorder %s145, %s146
    %p160 = scmp.eq.s32.totalorder %s18, 1
    %p161 = por %p159, %p160
    %p163 = scmp.ne.s32.totalorder %s146, %s162
    %p164 = scmp.eq.s32.totalorder %s18, 0
    %p165 = por %p163, %p164
    %p166 = scmp.le.s32.totalorder 1, %s12
    %p167 = scmp.lt.s32.totalorder %s12, 3
    %p168 = pnand %p166, %p167
    %p169 = pneg %p168
    // Predicated region
    $region9: #{basic_conv2d.2} parent=5 // pred_check
      _
    $region10: #{basic_conv2d.2} parent=5 // pred_check_branch
      %171 = sbr.rel (%p168) target = $region12
    $region11: #{basic_conv2d.2} parent=5 // pred_region
      %s172 = ssub.s32 %s12, 1
      // Predicated region
      $region13: #{basic_conv2d.2} parent=11 // pred_check
        %p173 = pneg %p59
      $region14: #{basic_conv2d.2} parent=11 // pred_check_branch
        %175 = sbr.rel (%p173) target = $region16
      $region15: #{basic_conv2d.2} parent=11 // pred_region
        _
      $region16: #{basic_conv2d.2} parent=11 // pred_fallthru
        _
      // Predicated region
      $region17: #{basic_conv2d.2} parent=11 // pred_check
        %p176 = pneg %p80
      $region18: #{basic_conv2d.2} parent=11 // pred_check_branch
        %178 = sbr.rel (%p176) target = $region20
      $region19: #{basic_conv2d.2} parent=11 // pred_region
        _
      $region20: #{basic_conv2d.2} parent=11 // pred_fallthru
        _
    $region12: #{basic_conv2d.2} parent=5 // pred_fallthru
      _
    %p179 = scmp.lt.s32.totalorder %s12, 2
    // Predicated region
    $region21: #{basic_conv2d.2} parent=5 // pred_check
      %p180 = pneg %p179
    $region22: #{basic_conv2d.2} parent=5 // pred_check_branch
      %182 = sbr.rel (%p180) target = $region24
    $region23: #{basic_conv2d.2} parent=5 // pred_region
      // Predicated region
      $region25: #{basic_conv2d.2} parent=23 // pred_check
        %p183 = pneg %p32
      $region26: #{basic_conv2d.2} parent=23 // pred_check_branch
        %185 = sbr.rel (%p183) target = $region28
      $region27: #{basic_conv2d.2} parent=23 // pred_region
        %p186 = scmp.lt.s32.totalorder %s12, 1
        %s187 = scalar_select %p186, %s12, 1
        %s188 = smul.addr %s187, 41
        %s189 = smul.addr %s188, 4
        %s190 = scalar_lea.vmem %s0, %s189
      $region28: #{basic_conv2d.2} parent=23 // pred_fallthru
        _
    $region24: #{basic_conv2d.2} parent=5 // pred_fallthru
      _
    %p191 = scmp.le.s32.totalorder 1, %s12
    %p192 = scmp.lt.s32.totalorder %s12, 3
    %p193 = pnand %p191, %p192
    %p194 = pneg %p193
    // Predicated region
    $region29: #{basic_conv2d.2} parent=5 // pred_check
      _
    $region30: #{basic_conv2d.2} parent=5 // pred_check_branch
      %196 = sbr.rel (%p193) target = $region32
    $region31: #{basic_conv2d.2} parent=5 // pred_region
      %s197 = ssub.s32 %s12, 1
      %p198 = scmp.lt.s32.totalorder %s17, 1
      %s199 = scalar_select %p198, %s17, 1
      %s200 = smul.addr %s199, 41
      %s201 = smul.addr %s200, 4
      %s202 = scalar_lea.vmem %s0, %s201
      %p203 = pneg %p38
      %p204 = pneg %p35
      %p205 = pneg %p59
      %p206 = pneg %p56
      %p207 = pneg %p80
      %p208 = pneg %p77
      %p209 = pneg %p106
      %p210 = pneg %p103
      %p211 = scmp.lt.s32.totalorder %s17, 1
      %s212 = scalar_select %p211, %s17, 1
      %s213 = smul.addr %s212, 36
      %s214 = smul.addr %s213, 8
      %s215 = scalar_lea.vmem %s3, %s214
      %p216 = pneg %p132
      %p217 = pneg %p129
      %p218 = scmp.lt.s32.totalorder %s17, 1
      %s219 = scalar_select %p218, %s17, 1
      %s220 = scalar_lea.vmem %s4, %s219
      %p221 = pneg %p158
      %p222 = pneg %p155
      %p223 = scmp.lt.s32.totalorder %s17, 1
      %s224 = scalar_select %p223, %s17, 1
      %s225 = scalar_lea.vmem %s5, %s224
      %p226 = scmp.lt.s32.totalorder %s17, 1
      %s227 = scalar_select %p226, %s17, 1
      %s228 = smul.addr %s227, 41
      %s229 = smul.addr %s228, 4
      %s230 = scalar_lea.vmem %s0, %s229
      %p231 = scmp.lt.s32.totalorder %s17, 1
      %s232 = scalar_select %p231, %s17, 1
      %s233 = smul.addr %s232, 36
      %s234 = smul.addr %s233, 8
      %s235 = scalar_lea.vmem %s3, %s234
      %p236 = scmp.lt.s32.totalorder %s17, 1
      %s237 = scalar_select %p236, %s17, 1
      %s238 = scalar_lea.vmem %s4, %s237
      %p239 = scmp.lt.s32.totalorder %s17, 1
      %s240 = scalar_select %p239, %s17, 1
      %s241 = scalar_lea.vmem %s5, %s240
      %v243 = vld [vmem:[%s230] sm:$0xf]
      %v244 = vld [vmem:[%s230 + $0x4] sm:$0xf]
      %v245 = vld [vmem:[%s230 + $0x8] sm:$0xf]
      %v246 = vld [vmem:[%s230 + $0xc] sm:$0xf]
      %v247 = vld [vmem:[%s230 + $0x10] sm:$0xf]
      %v248 = vld [vmem:[%s230 + $0x14] sm:$0xf]
      %v249 = vld [vmem:[%s230 + $0x18] sm:$0xf]
      %v250 = vld [vmem:[%s230 + $0x1c] sm:$0xf]
      %v251 = vld [vmem:[%s230 + $0x20] sm:$0xf]
      %v252 = vld [vmem:[%s230 + $0x24] sm:$0xf]
      %v253 = vld [vmem:[%s230 + $0x28] sm:$0xf]
      %v254 = vld [vmem:[%s230 + $0x2c] sm:$0xf]
      %v255 = vld [vmem:[%s230 + $0x30] sm:$0xf]
      %v256 = vld [vmem:[%s230 + $0x34] sm:$0xf]
      %v257 = vld [vmem:[%s230 + $0x38] sm:$0xf]
      %v258 = vld [vmem:[%s230 + $0x3c] sm:$0xf]
      %v259 = vld [vmem:[%s230 + $0x40] sm:$0xf]
      %v260 = vld [vmem:[%s230 + $0x44] sm:$0xf]
      %v261 = vld [vmem:[%s230 + $0x48] sm:$0xf]
      %v262 = vld [vmem:[%s230 + $0x4c] sm:$0xf]
      %v263 = vld [vmem:[%s230 + $0x50] sm:$0xf]
      %v264 = vld [vmem:[%s230 + $0x54] sm:$0xf]
      %v265 = vld [vmem:[%s230 + $0x58] sm:$0xf]
      %v266 = vld [vmem:[%s230 + $0x5c] sm:$0xf]
      %v267 = vld [vmem:[%s230 + $0x60] sm:$0xf]
      %v268 = vld [vmem:[%s230 + $0x64] sm:$0xf]
      %v269 = vld [vmem:[%s230 + $0x68] sm:$0xf]
      %v270 = vld [vmem:[%s230 + $0x6c] sm:$0xf]
      %v271 = vld [vmem:[%s230 + $0x70] sm:$0xf]
      %v272 = vld [vmem:[%s230 + $0x74] sm:$0xf]
      %v273 = vld [vmem:[%s230 + $0x78] sm:$0xf]
      %v274 = vld [vmem:[%s230 + $0x7c] sm:$0xf]
      %v275 = vld [vmem:[%s230 + $0x80] sm:$0xf]
      %v276 = vld [vmem:[%s230 + $0x84] sm:$0xf]
      %v277 = vld [vmem:[%s230 + $0x88] sm:$0xf]
      %v278 = vld [vmem:[%s230 + $0x8c] sm:$0xf]
      %v279 = vld [vmem:[%s230 + $0x90] sm:$0xf]
      %v280 = vld [vmem:[%s230 + $0x94] sm:$0xf]
      %v281 = vld [vmem:[%s230 + $0x98] sm:$0xf]
      %v282 = vld [vmem:[%s230 + $0x9c] sm:$0xf]
      %v283 = vld [vmem:[%s230 + $0xa0] sm:$0x7]
      %v284 = vld [vmem:[%s1] sm:$0xf]
      %v285 = vld [vmem:[%s1 + $0x4] sm:$0xf]
      %v286 = vld [vmem:[%s1 + $0x8] sm:$0xf]
      %v287 = vld [vmem:[%s1 + $0xc] sm:$0xf]
      %v288 = vld [vmem:[%s1 + $0x10] sm:$0xf]
      %v289 = vld [vmem:[%s1 + $0x14] sm:$0xf]
      %v290 = vld [vmem:[%s1 + $0x18] sm:$0xf]
      %v291 = vld [vmem:[%s1 + $0x1c] sm:$0xf]
      %v292 = vld [vmem:[%s1 + $0x20] sm:$0xf]
      %v293 = vld [vmem:[%s2] sm:$0xff]
      %v294 = vld [vmem:[%s2 + $0x8] sm:$0xff]
      %v295 = vld [vmem:[%s2 + $0x10] sm:$0xff]
      %v296 = vld [vmem:[%s2 + $0x18] sm:$0xff]
      %v297 = vld [vmem:[%s2 + $0x20] sm:$0xff]
      %v298 = vld [vmem:[%s2 + $0x28] sm:$0xff]
      %v299 = vld [vmem:[%s2 + $0x30] sm:$0xff]
      %v300 = vld [vmem:[%s2 + $0x38] sm:$0xff]
      %v301 = vld [vmem:[%s2 + $0x40] sm:$0xff]
      %v302 = vld [vmem:[%s2 + $0x48] sm:$0xff]
      %v303 = vld [vmem:[%s2 + $0x50] sm:$0xff]
      %v304 = vld [vmem:[%s2 + $0x58] sm:$0xff]
      %v305 = vld [vmem:[%s2 + $0x60] sm:$0xff]
      %v306 = vld [vmem:[%s2 + $0x68] sm:$0xff]
      %v307 = vld [vmem:[%s2 + $0x70] sm:$0xff]
      %v308 = vld [vmem:[%s2 + $0x78] sm:$0xff]
      %v309 = vld [vmem:[%s2 + $0x80] sm:$0xff]
      %v310 = vld [vmem:[%s2 + $0x88] sm:$0xff]
      %v311 = vld [vmem:[%s2 + $0x90] sm:$0xff]
      %v312 = vld [vmem:[%s2 + $0x98] sm:$0xff]
      %v313 = vld [vmem:[%s2 + $0xa0] sm:$0xff]
      %v314 = vld [vmem:[%s2 + $0xa8] sm:$0xff]
      %v315 = vld [vmem:[%s2 + $0xb0] sm:$0xff]
      %v316 = vld [vmem:[%s2 + $0xb8] sm:$0xff]
      %v317 = vld [vmem:[%s2 + $0xc0] sm:$0xff]
      %v318 = vld [vmem:[%s2 + $0xc8] sm:$0xff]
      %v319 = vld [vmem:[%s2 + $0xd0] sm:$0xff]
      %v320 = vld [vmem:[%s2 + $0xd8] sm:$0xff]
      %v321 = vld [vmem:[%s2 + $0xe0] sm:$0xff]
      %v322 = vld [vmem:[%s2 + $0xe8] sm:$0xff]
      %v323 = vld [vmem:[%s2 + $0xf0] sm:$0xff]
      %v324 = vld [vmem:[%s2 + $0xf8] sm:$0xff]
      %v325 = vld [vmem:[%s2 + $0x100] sm:$0xff]
      %v326 = vld [vmem:[%s2 + $0x108] sm:$0xff]
      %v327 = vld [vmem:[%s2 + $0x110] sm:$0xff]
      %v328 = vld [vmem:[%s2 + $0x118] sm:$0xff]
      %v366 = vunpack.c.l.b16 %v243
      %v367 = vunpack.c.l.b16 %v244
      %v368 = vunpack.c.l.b16 %v245
      %v369 = vunpack.c.l.b16 %v246
      %v370 = vunpack.c.l.b16 %v247
      %v371 = vunpack.c.l.b16 %v248
      %v372 = vunpack.c.l.b16 %v249
      %v373 = vunpack.c.l.b16 %v250
      %v374 = vunpack.c.l.b16 %v251
      %v375 = vunpack.c.l.b16 %v252
      %v376 = vunpack.c.l.b16 %v253
      %v377 = vunpack.c.l.b16 %v254
      %v378 = vunpack.c.l.b16 %v255
      %v379 = vunpack.c.l.b16 %v256
      %v380 = vunpack.c.l.b16 %v257
      %v381 = vunpack.c.l.b16 %v258
      %v382 = vunpack.c.l.b16 %v259
      %v383 = vunpack.c.l.b16 %v260
      %v384 = vunpack.c.l.b16 %v261
      %v385 = vunpack.c.l.b16 %v262
      %v386 = vunpack.c.l.b16 %v263
      %v387 = vunpack.c.l.b16 %v264
      %v388 = vunpack.c.l.b16 %v265
      %v389 = vunpack.c.l.b16 %v266
      %v390 = vunpack.c.l.b16 %v267
      %v391 = vunpack.c.l.b16 %v268
      %v392 = vunpack.c.l.b16 %v269
      %v393 = vunpack.c.l.b16 %v270
      %v394 = vunpack.c.l.b16 %v271
      %v395 = vunpack.c.l.b16 %v272
      %v396 = vunpack.c.l.b16 %v273
      %v397 = vunpack.c.l.b16 %v274
      %v398 = vunpack.c.l.b16 %v275
      %v399 = vunpack.c.l.b16 %v276
      %v400 = vunpack.c.l.b16 %v277
      %v401 = vunpack.c.l.b16 %v278
      %v402 = vunpack.c.l.b16 %v279
      %v403 = vpack.c.b16 %v367, %v366
      %v404 = vpack.c.b16 %v369, %v368
      %v405 = vpack.c.b16 %v371, %v370
      %v406 = vpack.c.b16 %v373, %v372
      %v407 = vpack.c.b16 %v375, %v374
      %v408 = vpack.c.b16 %v377, %v376
      %v409 = vpack.c.b16 %v379, %v378
      %v410 = vpack.c.b16 %v381, %v380
      %v411 = vpack.c.b16 %v383, %v382
      %v412 = vpack.c.b16 %v385, %v384
      %v413 = vpack.c.b16 %v387, %v386
      %v414 = vpack.c.b16 %v389, %v388
      %v415 = vpack.c.b16 %v391, %v390
      %v416 = vpack.c.b16 %v393, %v392
      %v417 = vpack.c.b16 %v395, %v394
      %v418 = vpack.c.b16 %v397, %v396
      %v419 = vpack.c.b16 %v399, %v398
      %v420 = vpack.c.b16 %v401, %v400
      %v421 = vpack.c.b16 %v402, %v402
      %vm422 = vsmask.f32 7424
      %v424 = vshrl.u32 %v403, 16
      %v426 = vshll.u32 %v403, 16
      %v428 = vrot.slane %v426, 1
      %v429 = vor.u32 %v424, %v428
      %v431 = vshll.u32 %v404, 16
      %v433 = vrot.slane %v431, 1
      %v434 = vsel %vm422, %v429, %v433
      %v435 = vshrl.u32 %v404, 16
      %v437 = vor.u32 %v435, %v433
      %v439 = vshll.u32 %v405, 16
      %v441 = vrot.slane %v439, 1
      %v442 = vsel %vm422, %v437, %v441
      %v443 = vshrl.u32 %v405, 16
      %v445 = vor.u32 %v443, %v441
      %v447 = vshll.u32 %v406, 16
      %v449 = vrot.slane %v447, 1
      %v450 = vsel %vm422, %v445, %v449
      %v451 = vshrl.u32 %v406, 16
      %v453 = vor.u32 %v451, %v449
      %v455 = vshll.u32 %v407, 16
      %v457 = vrot.slane %v455, 1
      %v458 = vsel %vm422, %v453, %v457
      %v459 = vshrl.u32 %v407, 16
      %v461 = vor.u32 %v459, %v457
      %v463 = vshll.u32 %v408, 16
      %v465 = vrot.slane %v463, 1
      %v466 = vsel %vm422, %v461, %v465
      %v467 = vshrl.u32 %v408, 16
      %v469 = vor.u32 %v467, %v465
      %v471 = vshll.u32 %v409, 16
      %v473 = vrot.slane %v471, 1
      %v474 = vsel %vm422, %v469, %v473
      %v475 = vshrl.u32 %v409, 16
      %v477 = vor.u32 %v475, %v473
      %v479 = vshll.u32 %v410, 16
      %v481 = vrot.slane %v479, 1
      %v482 = vsel %vm422, %v477, %v481
      %v483 = vshrl.u32 %v410, 16
      %v485 = vor.u32 %v483, %v481
      %v487 = vshll.u32 %v411, 16
      %v489 = vrot.slane %v487, 1
      %v490 = vsel %vm422, %v485, %v489
      %v491 = vshrl.u32 %v411, 16
      %v493 = vor.u32 %v491, %v489
      %v495 = vshll.u32 %v412, 16
      %v497 = vrot.slane %v495, 1
      %v498 = vsel %vm422, %v493, %v497
      %v499 = vshrl.u32 %v412, 16
      %v501 = vor.u32 %v499, %v497
      %v503 = vshll.u32 %v413, 16
      %v505 = vrot.slane %v503, 1
      %v506 = vsel %vm422, %v501, %v505
      %v507 = vshrl.u32 %v413, 16
      %v509 = vor.u32 %v507, %v505
      %v511 = vshll.u32 %v414, 16
      %v513 = vrot.slane %v511, 1
      %v514 = vsel %vm422, %v509, %v513
      %v515 = vshrl.u32 %v414, 16
      %v517 = vor.u32 %v515, %v513
      %v519 = vshll.u32 %v415, 16
      %v521 = vrot.slane %v519, 1
      %v522 = vsel %vm422, %v517, %v521
      %v523 = vshrl.u32 %v415, 16
      %v525 = vor.u32 %v523, %v521
      %v527 = vshll.u32 %v416, 16
      %v529 = vrot.slane %v527, 1
      %v530 = vsel %vm422, %v525, %v529
      %v531 = vshrl.u32 %v416, 16
      %v533 = vor.u32 %v531, %v529
      %v535 = vshll.u32 %v417, 16
      %v537 = vrot.slane %v535, 1
      %v538 = vsel %vm422, %v533, %v537
      %v539 = vshrl.u32 %v417, 16
      %v541 = vor.u32 %v539, %v537
      %v543 = vshll.u32 %v418, 16
      %v545 = vrot.slane %v543, 1
      %v546 = vsel %vm422, %v541, %v545
      %v547 = vshrl.u32 %v418, 16
      %v549 = vor.u32 %v547, %v545
      %v551 = vshll.u32 %v419, 16
      %v553 = vrot.slane %v551, 1
      %v554 = vsel %vm422, %v549, %v553
      %v555 = vshrl.u32 %v419, 16
      %v557 = vor.u32 %v555, %v553
      %v559 = vshll.u32 %v420, 16
      %v561 = vrot.slane %v559, 1
      %v562 = vsel %vm422, %v557, %v561
      %v563 = vshrl.u32 %v420, 16
      %v565 = vor.u32 %v563, %v561
      %v567 = vshll.u32 %v421, 16
      %v569 = vrot.slane %v567, 1
      %v570 = vsel %vm422, %v565, %v569
      %vm571 = vcmask 64512
      %v573 = vsel %vm571, %v434, 0
      %v576 = vsel %vm571, %v442, 0
      %v579 = vsel %vm571, %v450, 0
      %v582 = vsel %vm571, %v458, 0
      %v585 = vsel %vm571, %v466, 0
      %v588 = vsel %vm571, %v474, 0
      %v591 = vsel %vm571, %v482, 0
      %v594 = vsel %vm571, %v490, 0
      %v597 = vsel %vm571, %v498, 0
      %v600 = vsel %vm571, %v506, 0
      %v603 = vsel %vm571, %v514, 0
      %v606 = vsel %vm571, %v522, 0
      %v609 = vsel %vm571, %v530, 0
      %v612 = vsel %vm571, %v538, 0
      %v615 = vsel %vm571, %v546, 0
      %v618 = vsel %vm571, %v554, 0
      %v621 = vsel %vm571, %v562, 0
      %v624 = vsel %vm571, %v570, 0
      %vm626 = vcmask 1043456
      %v628 = vsel %vm626, %v285, 0
      %630 = vmatprep.subr.bf16.mxu0 0
      %631 = vmatpush1.bf16.msra.mxu0 0
      %632 = vmatprep.subr.bf16.mxu0 0
      %633 = vmatpush1.bf16.msra.mxu0 0
      %634 = vmatprep.subr.bf16.mxu0 0
      %635 = vmatpush1.bf16.msra.mxu0 0
      %636 = vmatprep.subr.bf16.mxu0 0
      %637 = vmatpush1.bf16.msra.mxu0 0
      %638 = vmatprep.subr.bf16.mxu0 0
      %639 = vmatpush1.bf16.msra.mxu0 0
      %640 = vmatprep.subr.bf16.mxu0 0
      %641 = vmatpush1.bf16.msra.mxu0 0
      %642 = vmatprep.subr.bf16.mxu0 0
      %643 = vmatpush1.bf16.msra.mxu0 0
      %644 = vmatprep.subr.bf16.mxu0 0
      %645 = vmatpush1.bf16.msra.mxu0 %v628
      %646 = vmatprep.subr.bf16.mxu0 0
      %647 = vmatpush2.bf16.msra.mxu0 0
      %648 = vmatprep.subr.bf16.mxu0 0
      %649 = vmatpush2.bf16.msra.mxu0 0
      %650 = vmatprep.subr.bf16.mxu0 0
      %651 = vmatpush2.bf16.msra.mxu0 0
      %652 = vmatprep.subr.bf16.mxu0 0
      %653 = vmatpush2.bf16.msra.mxu0 0
      %654 = vmatprep.subr.bf16.mxu0 0
      %655 = vmatpush2.bf16.msra.mxu0 0
      %656 = vmatprep.subr.bf16.mxu0 0
      %657 = vmatpush2.bf16.msra.mxu0 0
      %658 = vmatprep.subr.bf16.mxu0 0
      %659 = vmatpush2.bf16.msra.mxu0 0
      %660 = vmatprep.subr.bf16.mxu0 0
      %661 = vmatpush2.bf16.msra.mxu0 0
      %662 = vmatprep.mubr.bf16.mxu0 0
      %663 = vmatmul.mubr.bf16.gmra.mxu0 %v573
      %v664 = vpop.f32.mrf.mxu0
      %v665 = vadd.f32 0.0, %v664
      %v666 = vpop.f32.mrf.mxu0
      %v667 = vpop.f32.mrf.mxu0
      %v668 = vadd.f32 0.0, %v667
      %v669 = vpop.f32.mrf.mxu0
      %670 = vmatprep.mubr.bf16.mxu0 0
      %671 = vmatmul.mubr.bf16.gmra.mxu0 %v576
      %v672 = vpop.f32.mrf.mxu0
      %v673 = vadd.f32 0.0, %v672
      %v674 = vpop.f32.mrf.mxu0
      %v675 = vpop.f32.mrf.mxu0
      %v676 = vadd.f32 0.0, %v675
      %v677 = vpop.f32.mrf.mxu0
      %678 = vmatprep.mubr.bf16.mxu0 0
      %679 = vmatmul.mubr.bf16.gmra.mxu0 %v579
      %v680 = vpop.f32.mrf.mxu0
      %v681 = vadd.f32 0.0, %v680
      %v682 = vpop.f32.mrf.mxu0
      %v683 = vpop.f32.mrf.mxu0
      %v684 = vadd.f32 0.0, %v683
      %v685 = vpop.f32.mrf.mxu0
      %686 = vmatprep.mubr.bf16.mxu0 0
      %687 = vmatmul.mubr.bf16.gmra.mxu0 %v582
      %v688 = vpop.f32.mrf.mxu0
      %v689 = vadd.f32 0.0, %v688
      %v690 = vpop.f32.mrf.mxu0
      %v691 = vpop.f32.mrf.mxu0
      %v692 = vadd.f32 0.0, %v691
      %v693 = vpop.f32.mrf.mxu0
      %694 = vmatprep.mubr.bf16.mxu0 0
      %695 = vmatmul.mubr.bf16.gmra.mxu0 %v585
      %v696 = vpop.f32.mrf.mxu0
      %v697 = vadd.f32 0.0, %v696
      %v698 = vpop.f32.mrf.mxu0
      %v699 = vpop.f32.mrf.mxu0
      %v700 = vadd.f32 0.0, %v699
      %v701 = vpop.f32.mrf.mxu0
      %702 = vmatprep.mubr.bf16.mxu0 0
      %703 = vmatmul.mubr.bf16.gmra.mxu0 %v588
      %v704 = vpop.f32.mrf.mxu0
      %v705 = vadd.f32 0.0, %v704
      %v706 = vpop.f32.mrf.mxu0
      %v707 = vpop.f32.mrf.mxu0
      %v708 = vadd.f32 0.0, %v707
      %v709 = vpop.f32.mrf.mxu0
      %710 = vmatprep.mubr.bf16.mxu0 0
      %711 = vmatmul.mubr.bf16.gmra.mxu0 %v591
      %v712 = vpop.f32.mrf.mxu0
      %v713 = vadd.f32 0.0, %v712
      %v714 = vpop.f32.mrf.mxu0
      %v715 = vpop.f32.mrf.mxu0
      %v716 = vadd.f32 0.0, %v715
      %v717 = vpop.f32.mrf.mxu0
      %718 = vmatprep.mubr.bf16.mxu0 0
      %719 = vmatmul.mubr.bf16.gmra.mxu0 %v594
      %v720 = vpop.f32.mrf.mxu0
      %v721 = vadd.f32 0.0, %v720
      %v722 = vpop.f32.mrf.mxu0
      %v723 = vpop.f32.mrf.mxu0
      %v724 = vadd.f32 0.0, %v723
      %v725 = vpop.f32.mrf.mxu0
      %726 = vmatprep.mubr.bf16.mxu0 0
      %727 = vmatmul.mubr.bf16.gmra.mxu0 %v597
      %v728 = vpop.f32.mrf.mxu0
      %v729 = vadd.f32 0.0, %v728
      %v730 = vpop.f32.mrf.mxu0
      %v731 = vpop.f32.mrf.mxu0
      %v732 = vadd.f32 0.0, %v731
      %v733 = vpop.f32.mrf.mxu0
      %734 = vmatprep.mubr.bf16.mxu0 0
      %735 = vmatmul.mubr.bf16.gmra.mxu0 %v600
      %v736 = vpop.f32.mrf.mxu0
      %v737 = vadd.f32 0.0, %v736
      %v738 = vpop.f32.mrf.mxu0
      %v739 = vpop.f32.mrf.mxu0
      %v740 = vadd.f32 0.0, %v739
      %v741 = vpop.f32.mrf.mxu0
      %742 = vmatprep.mubr.bf16.mxu0 0
      %743 = vmatmul.mubr.bf16.gmra.mxu0 %v603
      %v744 = vpop.f32.mrf.mxu0
      %v745 = vadd.f32 0.0, %v744
      %v746 = vpop.f32.mrf.mxu0
      %v747 = vpop.f32.mrf.mxu0
      %v748 = vadd.f32 0.0, %v747
      %v749 = vpop.f32.mrf.mxu0
      %750 = vmatprep.mubr.bf16.mxu0 0
      %751 = vmatmul.mubr.bf16.gmra.mxu0 %v606
      %v752 = vpop.f32.mrf.mxu0
      %v753 = vadd.f32 0.0, %v752
      %v754 = vpop.f32.mrf.mxu0
      %v755 = vpop.f32.mrf.mxu0
      %v756 = vadd.f32 0.0, %v755
      %v757 = vpop.f32.mrf.mxu0
      %758 = vmatprep.mubr.bf16.mxu0 0
      %759 = vmatmul.mubr.bf16.gmra.mxu0 %v609
      %v760 = vpop.f32.mrf.mxu0
      %v761 = vadd.f32 0.0, %v760
      %v762 = vpop.f32.mrf.mxu0
      %v763 = vpop.f32.mrf.mxu0
      %v764 = vadd.f32 0.0, %v763
      %v765 = vpop.f32.mrf.mxu0
      %766 = vmatprep.mubr.bf16.mxu0 0
      %767 = vmatmul.mubr.bf16.gmra.mxu0 %v612
      %v768 = vpop.f32.mrf.mxu0
      %v769 = vadd.f32 0.0, %v768
      %v770 = vpop.f32.mrf.mxu0
      %v771 = vpop.f32.mrf.mxu0
      %v772 = vadd.f32 0.0, %v771
      %v773 = vpop.f32.mrf.mxu0
      %774 = vmatprep.mubr.bf16.mxu0 0
      %775 = vmatmul.mubr.bf16.gmra.mxu0 %v615
      %v776 = vpop.f32.mrf.mxu0
      %v777 = vadd.f32 0.0, %v776
      %v778 = vpop.f32.mrf.mxu0
      %v779 = vpop.f32.mrf.mxu0
      %v780 = vadd.f32 0.0, %v779
      %v781 = vpop.f32.mrf.mxu0
      %782 = vmatprep.mubr.bf16.mxu0 0
      %783 = vmatmul.mubr.bf16.gmra.mxu0 %v618
      %v784 = vpop.f32.mrf.mxu0
      %v785 = vadd.f32 0.0, %v784
      %v786 = vpop.f32.mrf.mxu0
      %v787 = vpop.f32.mrf.mxu0
      %v788 = vadd.f32 0.0, %v787
      %v789 = vpop.f32.mrf.mxu0
      %790 = vmatprep.mubr.bf16.mxu0 0
      %791 = vmatmul.mubr.bf16.gmra.mxu0 %v621
      %v792 = vpop.f32.mrf.mxu0
      %v793 = vadd.f32 0.0, %v792
      %v794 = vpop.f32.mrf.mxu0
      %v795 = vpop.f32.mrf.mxu0
      %v796 = vadd.f32 0.0, %v795
      %v797 = vpop.f32.mrf.mxu0
      %798 = vmatprep.mubr.bf16.mxu0 0
      %799 = vmatmul.mubr.bf16.gmra.mxu0 %v624
      %v800 = vpop.f32.mrf.mxu0
      %v801 = vadd.f32 0.0, %v800
      %v802 = vpop.f32.mrf.mxu0
      %v803 = vpop.f32.mrf.mxu0
      %v804 = vadd.f32 0.0, %v803
      %v805 = vpop.f32.mrf.mxu0
      %806 = vdwg.mxu0
      %v807 = vsel %vm571, %v403, 0
      %v809 = vsel %vm571, %v404, 0
      %v811 = vsel %vm571, %v405, 0
      %v813 = vsel %vm571, %v406, 0
      %v815 = vsel %vm571, %v407, 0
      %v817 = vsel %vm571, %v408, 0
      %v819 = vsel %vm571, %v409, 0
      %v821 = vsel %vm571, %v410, 0
      %v823 = vsel %vm571, %v411, 0
      %v825 = vsel %vm571, %v412, 0
      %v827 = vsel %vm571, %v413, 0
      %v829 = vsel %vm571, %v414, 0
      %v831 = vsel %vm571, %v415, 0
      %v833 = vsel %vm571, %v416, 0
      %v835 = vsel %vm571, %v417, 0
      %v837 = vsel %vm571, %v418, 0
      %v839 = vsel %vm571, %v419, 0
      %v841 = vsel %vm571, %v420, 0
      %v844 = vsel %vm626, %v284, 0
      %846 = vmatprep.subr.bf16.mxu0 0
      %847 = vmatpush1.bf16.msra.mxu0 0
      %848 = vmatprep.subr.bf16.mxu0 0
      %849 = vmatpush1.bf16.msra.mxu0 0
      %850 = vmatprep.subr.bf16.mxu0 0
      %851 = vmatpush1.bf16.msra.mxu0 0
      %852 = vmatprep.subr.bf16.mxu0 0
      %853 = vmatpush1.bf16.msra.mxu0 0
      %854 = vmatprep.subr.bf16.mxu0 0
      %855 = vmatpush1.bf16.msra.mxu0 0
      %856 = vmatprep.subr.bf16.mxu0 0
      %857 = vmatpush1.bf16.msra.mxu0 0
      %858 = vmatprep.subr.bf16.mxu0 0
      %859 = vmatpush1.bf16.msra.mxu0 0
      %860 = vmatprep.subr.bf16.mxu0 0
      %861 = vmatpush1.bf16.msra.mxu0 %v844
      %862 = vmatprep.subr.bf16.mxu0 0
      %863 = vmatpush2.bf16.msra.mxu0 0
      %864 = vmatprep.subr.bf16.mxu0 0
      %865 = vmatpush2.bf16.msra.mxu0 0
      %866 = vmatprep.subr.bf16.mxu0 0
      %867 = vmatpush2.bf16.msra.mxu0 0
      %868 = vmatprep.subr.bf16.mxu0 0
      %869 = vmatpush2.bf16.msra.mxu0 0
      %870 = vmatprep.subr.bf16.mxu0 0
      %871 = vmatpush2.bf16.msra.mxu0 0
      %872 = vmatprep.subr.bf16.mxu0 0
      %873 = vmatpush2.bf16.msra.mxu0 0
      %874 = vmatprep.subr.bf16.mxu0 0
      %875 = vmatpush2.bf16.msra.mxu0 0
      %876 = vmatprep.subr.bf16.mxu0 0
      %877 = vmatpush2.bf16.msra.mxu0 0
      %878 = vmatprep.mubr.bf16.mxu0 0
      %879 = vmatmul.mubr.bf16.gmra.mxu0 %v807
      %v880 = vpop.f32.mrf.mxu0
      %v881 = vadd.f32 %v665, %v880
      %v882 = vpop.f32.mrf.mxu0
      %v883 = vpop.f32.mrf.mxu0
      %v884 = vadd.f32 %v668, %v883
      %v885 = vpop.f32.mrf.mxu0
      %886 = vmatprep.mubr.bf16.mxu0 0
      %887 = vmatmul.mubr.bf16.gmra.mxu0 %v809
      %v888 = vpop.f32.mrf.mxu0
      %v889 = vadd.f32 %v673, %v888
      %v890 = vpop.f32.mrf.mxu0
      %v891 = vpop.f32.mrf.mxu0
      %v892 = vadd.f32 %v676, %v891
      %v893 = vpop.f32.mrf.mxu0
      %894 = vmatprep.mubr.bf16.mxu0 0
      %895 = vmatmul.mubr.bf16.gmra.mxu0 %v811
      %v896 = vpop.f32.mrf.mxu0
      %v897 = vadd.f32 %v681, %v896
      %v898 = vpop.f32.mrf.mxu0
      %v899 = vpop.f32.mrf.mxu0
      %v900 = vadd.f32 %v684, %v899
      %v901 = vpop.f32.mrf.mxu0
      %902 = vmatprep.mubr.bf16.mxu0 0
      %903 = vmatmul.mubr.bf16.gmra.mxu0 %v813
      %v904 = vpop.f32.mrf.mxu0
      %v905 = vadd.f32 %v689, %v904
      %v906 = vpop.f32.mrf.mxu0
      %v907 = vpop.f32.mrf.mxu0
      %v908 = vadd.f32 %v692, %v907
      %v909 = vpop.f32.mrf.mxu0
      %910 = vmatprep.mubr.bf16.mxu0 0
      %911 = vmatmul.mubr.bf16.gmra.mxu0 %v815
      %v912 = vpop.f32.mrf.mxu0
      %v913 = vadd.f32 %v697, %v912
      %v914 = vpop.f32.mrf.mxu0
      %v915 = vpop.f32.mrf.mxu0
      %v916 = vadd.f32 %v700, %v915
      %v917 = vpop.f32.mrf.mxu0
      %918 = vmatprep.mubr.bf16.mxu0 0
      %919 = vmatmul.mubr.bf16.gmra.mxu0 %v817
      %v920 = vpop.f32.mrf.mxu0
      %v921 = vadd.f32 %v705, %v920
      %v922 = vpop.f32.mrf.mxu0
      %v923 = vpop.f32.mrf.mxu0
      %v924 = vadd.f32 %v708, %v923
      %v925 = vpop.f32.mrf.mxu0
      %926 = vmatprep.mubr.bf16.mxu0 0
      %927 = vmatmul.mubr.bf16.gmra.mxu0 %v819
      %v928 = vpop.f32.mrf.mxu0
      %v929 = vadd.f32 %v713, %v928
      %v930 = vpop.f32.mrf.mxu0
      %v931 = vpop.f32.mrf.mxu0
      %v932 = vadd.f32 %v716, %v931
      %v933 = vpop.f32.mrf.mxu0
      %934 = vmatprep.mubr.bf16.mxu0 0
      %935 = vmatmul.mubr.bf16.gmra.mxu0 %v821
      %v936 = vpop.f32.mrf.mxu0
      %v937 = vadd.f32 %v721, %v936
      %v938 = vpop.f32.mrf.mxu0
      %v939 = vpop.f32.mrf.mxu0
      %v940 = vadd.f32 %v724, %v939
      %v941 = vpop.f32.mrf.mxu0
      %942 = vmatprep.mubr.bf16.mxu0 0
      %943 = vmatmul.mubr.bf16.gmra.mxu0 %v823
      %v944 = vpop.f32.mrf.mxu0
      %v945 = vadd.f32 %v729, %v944
      %v946 = vpop.f32.mrf.mxu0
      %v947 = vpop.f32.mrf.mxu0
      %v948 = vadd.f32 %v732, %v947
      %v949 = vpop.f32.mrf.mxu0
      %950 = vmatprep.mubr.bf16.mxu0 0
      %951 = vmatmul.mubr.bf16.gmra.mxu0 %v825
      %v952 = vpop.f32.mrf.mxu0
      %v953 = vadd.f32 %v737, %v952
      %v954 = vpop.f32.mrf.mxu0
      %v955 = vpop.f32.mrf.mxu0
      %v956 = vadd.f32 %v740, %v955
      %v957 = vpop.f32.mrf.mxu0
      %958 = vmatprep.mubr.bf16.mxu0 0
      %959 = vmatmul.mubr.bf16.gmra.mxu0 %v827
      %v960 = vpop.f32.mrf.mxu0
      %v961 = vadd.f32 %v745, %v960
      %v962 = vpop.f32.mrf.mxu0
      %v963 = vpop.f32.mrf.mxu0
      %v964 = vadd.f32 %v748, %v963
      %v965 = vpop.f32.mrf.mxu0
      %966 = vmatprep.mubr.bf16.mxu0 0
      %967 = vmatmul.mubr.bf16.gmra.mxu0 %v829
      %v968 = vpop.f32.mrf.mxu0
      %v969 = vadd.f32 %v753, %v968
      %v970 = vpop.f32.mrf.mxu0
      %v971 = vpop.f32.mrf.mxu0
      %v972 = vadd.f32 %v756, %v971
      %v973 = vpop.f32.mrf.mxu0
      %974 = vmatprep.mubr.bf16.mxu0 0
      %975 = vmatmul.mubr.bf16.gmra.mxu0 %v831
      %v976 = vpop.f32.mrf.mxu0
      %v977 = vadd.f32 %v761, %v976
      %v978 = vpop.f32.mrf.mxu0
      %v979 = vpop.f32.mrf.mxu0
      %v980 = vadd.f32 %v764, %v979
      %v981 = vpop.f32.mrf.mxu0
      %982 = vmatprep.mubr.bf16.mxu0 0
      %983 = vmatmul.mubr.bf16.gmra.mxu0 %v833
      %v984 = vpop.f32.mrf.mxu0
      %v985 = vadd.f32 %v769, %v984
      %v986 = vpop.f32.mrf.mxu0
      %v987 = vpop.f32.mrf.mxu0
      %v988 = vadd.f32 %v772, %v987
      %v989 = vpop.f32.mrf.mxu0
      %990 = vmatprep.mubr.bf16.mxu0 0
      %991 = vmatmul.mubr.bf16.gmra.mxu0 %v835
      %v992 = vpop.f32.mrf.mxu0
      %v993 = vadd.f32 %v777, %v992
      %v994 = vpop.f32.mrf.mxu0
      %v995 = vpop.f32.mrf.mxu0
      %v996 = vadd.f32 %v780, %v995
      %v997 = vpop.f32.mrf.mxu0
      %998 = vmatprep.mubr.bf16.mxu0 0
      %999 = vmatmul.mubr.bf16.gmra.mxu0 %v837
      %v1000 = vpop.f32.mrf.mxu0
      %v1001 = vadd.f32 %v785, %v1000
      %v1002 = vpop.f32.mrf.mxu0
      %v1003 = vpop.f32.mrf.mxu0
      %v1004 = vadd.f32 %v788, %v1003
      %v1005 = vpop.f32.mrf.mxu0
      %1006 = vmatprep.mubr.bf16.mxu0 0
      %1007 = vmatmul.mubr.bf16.gmra.mxu0 %v839
      %v1008 = vpop.f32.mrf.mxu0
      %v1009 = vadd.f32 %v793, %v1008
      %v1010 = vpop.f32.mrf.mxu0
      %v1011 = vpop.f32.mrf.mxu0
      %v1012 = vadd.f32 %v796, %v1011
      %v1013 = vpop.f32.mrf.mxu0
      %1014 = vmatprep.mubr.bf16.mxu0 0
      %1015 = vmatmul.mubr.bf16.gmra.mxu0 %v841
      %v1016 = vpop.f32.mrf.mxu0
      %v1017 = vadd.f32 %v801, %v1016
      %v1018 = vpop.f32.mrf.mxu0
      %v1019 = vpop.f32.mrf.mxu0
      %v1020 = vadd.f32 %v804, %v1019
      %v1021 = vpop.f32.mrf.mxu0
      %1022 = vdwg.mxu0
      %vm1023 = vcmask 1046528
      %v1024 = vrot.slane %v403, 1
      %v1025 = vrot.slane %v404, 1
      %v1026 = vsel %vm1023, %v1024, %v1025
      %v1027 = vrot.slane %v405, 1
      %v1028 = vsel %vm1023, %v1025, %v1027
      %v1029 = vrot.slane %v406, 1
      %v1030 = vsel %vm1023, %v1027, %v1029
      %v1031 = vrot.slane %v407, 1
      %v1032 = vsel %vm1023, %v1029, %v1031
      %v1033 = vrot.slane %v408, 1
      %v1034 = vsel %vm1023, %v1031, %v1033
      %v1035 = vrot.slane %v409, 1
      %v1036 = vsel %vm1023, %v1033, %v1035
      %v1037 = vrot.slane %v410, 1
      %v1038 = vsel %vm1023, %v1035, %v1037
      %v1039 = vrot.slane %v411, 1
      %v1040 = vsel %vm1023, %v1037, %v1039
      %v1041 = vrot.slane %v412, 1
      %v1042 = vsel %vm1023, %v1039, %v1041
      %v1043 = vrot.slane %v413, 1
      %v1044 = vsel %vm1023, %v1041, %v1043
      %v1045 = vrot.slane %v414, 1
      %v1046 = vsel %vm1023, %v1043, %v1045
      %v1047 = vrot.slane %v415, 1
      %v1048 = vsel %vm1023, %v1045, %v1047
      %v1049 = vrot.slane %v416, 1
      %v1050 = vsel %vm1023, %v1047, %v1049
      %v1051 = vrot.slane %v417, 1
      %v1052 = vsel %vm1023, %v1049, %v1051
      %v1053 = vrot.slane %v418, 1
      %v1054 = vsel %vm1023, %v1051, %v1053
      %v1055 = vrot.slane %v419, 1
      %v1056 = vsel %vm1023, %v1053, %v1055
      %v1057 = vrot.slane %v420, 1
      %v1058 = vsel %vm1023, %v1055, %v1057
      %v1059 = vrot.slane %v421, 1
      %v1060 = vsel %vm1023, %v1057, %v1059
      %v1062 = vsel %vm571, %v1026, 0
      %v1065 = vsel %vm571, %v1028, 0
      %v1068 = vsel %vm571, %v1030, 0
      %v1071 = vsel %vm571, %v1032, 0
      %v1074 = vsel %vm571, %v1034, 0
      %v1077 = vsel %vm571, %v1036, 0
      %v1080 = vsel %vm571, %v1038, 0
      %v1083 = vsel %vm571, %v1040, 0
      %v1086 = vsel %vm571, %v1042, 0
      %v1089 = vsel %vm571, %v1044, 0
      %v1092 = vsel %vm571, %v1046, 0
      %v1095 = vsel %vm571, %v1048, 0
      %v1098 = vsel %vm571, %v1050, 0
      %v1101 = vsel %vm571, %v1052, 0
      %v1104 = vsel %vm571, %v1054, 0
      %v1107 = vsel %vm571, %v1056, 0
      %v1110 = vsel %vm571, %v1058, 0
      %v1113 = vsel %vm571, %v1060, 0
      %v1116 = vsel %vm626, %v286, 0
      %1118 = vmatprep.subr.bf16.mxu0 0
      %1119 = vmatpush1.bf16.msra.mxu0 0
      %1120 = vmatprep.subr.bf16.mxu0 0
      %1121 = vmatpush1.bf16.msra.mxu0 0
      %1122 = vmatprep.subr.bf16.mxu0 0
      %1123 = vmatpush1.bf16.msra.mxu0 0
      %1124 = vmatprep.subr.bf16.mxu0 0
      %1125 = vmatpush1.bf16.msra.mxu0 0
      %1126 = vmatprep.subr.bf16.mxu0 0
      %1127 = vmatpush1.bf16.msra.mxu0 0
      %1128 = vmatprep.subr.bf16.mxu0 0
      %1129 = vmatpush1.bf16.msra.mxu0 0
      %1130 = vmatprep.subr.bf16.mxu0 0
      %1131 = vmatpush1.bf16.msra.mxu0 0
      %1132 = vmatprep.subr.bf16.mxu0 0
      %1133 = vmatpush1.bf16.msra.mxu0 %v1116
      %1134 = vmatprep.subr.bf16.mxu0 0
      %1135 = vmatpush2.bf16.msra.mxu0 0
      %1136 = vmatprep.subr.bf16.mxu0 0
      %1137 = vmatpush2.bf16.msra.mxu0 0
      %1138 = vmatprep.subr.bf16.mxu0 0
      %1139 = vmatpush2.bf16.msra.mxu0 0
      %1140 = vmatprep.subr.bf16.mxu0 0
      %1141 = vmatpush2.bf16.msra.mxu0 0
      %1142 = vmatprep.subr.bf16.mxu0 0
      %1143 = vmatpush2.bf16.msra.mxu0 0
      %1144 = vmatprep.subr.bf16.mxu0 0
      %1145 = vmatpush2.bf16.msra.mxu0 0
      %1146 = vmatprep.subr.bf16.mxu0 0
      %1147 = vmatpush2.bf16.msra.mxu0 0
      %1148 = vmatprep.subr.bf16.mxu0 0
      %1149 = vmatpush2.bf16.msra.mxu0 0
      %1150 = vmatprep.mubr.bf16.mxu0 0
      %1151 = vmatmul.mubr.bf16.gmra.mxu0 %v1062
      %v1152 = vpop.f32.mrf.mxu0
      %v1153 = vadd.f32 0.0, %v1152
      %v1154 = vpop.f32.mrf.mxu0
      %v1155 = vpop.f32.mrf.mxu0
      %v1156 = vadd.f32 0.0, %v1155
      %v1157 = vpop.f32.mrf.mxu0
      %1158 = vmatprep.mubr.bf16.mxu0 0
      %1159 = vmatmul.mubr.bf16.gmra.mxu0 %v1065
      %v1160 = vpop.f32.mrf.mxu0
      %v1161 = vadd.f32 0.0, %v1160
      %v1162 = vpop.f32.mrf.mxu0
      %v1163 = vpop.f32.mrf.mxu0
      %v1164 = vadd.f32 0.0, %v1163
      %v1165 = vpop.f32.mrf.mxu0
      %1166 = vmatprep.mubr.bf16.mxu0 0
      %1167 = vmatmul.mubr.bf16.gmra.mxu0 %v1068
      %v1168 = vpop.f32.mrf.mxu0
      %v1169 = vadd.f32 0.0, %v1168
      %v1170 = vpop.f32.mrf.mxu0
      %v1171 = vpop.f32.mrf.mxu0
      %v1172 = vadd.f32 0.0, %v1171
      %v1173 = vpop.f32.mrf.mxu0
      %1174 = vmatprep.mubr.bf16.mxu0 0
      %1175 = vmatmul.mubr.bf16.gmra.mxu0 %v1071
      %v1176 = vpop.f32.mrf.mxu0
      %v1177 = vadd.f32 0.0, %v1176
      %v1178 = vpop.f32.mrf.mxu0
      %v1179 = vpop.f32.mrf.mxu0
      %v1180 = vadd.f32 0.0, %v1179
      %v1181 = vpop.f32.mrf.mxu0
      %1182 = vmatprep.mubr.bf16.mxu0 0
      %1183 = vmatmul.mubr.bf16.gmra.mxu0 %v1074
      %v1184 = vpop.f32.mrf.mxu0
      %v1185 = vadd.f32 0.0, %v1184
      %v1186 = vpop.f32.mrf.mxu0
      %v1187 = vpop.f32.mrf.mxu0
      %v1188 = vadd.f32 0.0, %v1187
      %v1189 = vpop.f32.mrf.mxu0
      %1190 = vmatprep.mubr.bf16.mxu0 0
      %1191 = vmatmul.mubr.bf16.gmra.mxu0 %v1077
      %v1192 = vpop.f32.mrf.mxu0
      %v1193 = vadd.f32 0.0, %v1192
      %v1194 = vpop.f32.mrf.mxu0
      %v1195 = vpop.f32.mrf.mxu0
      %v1196 = vadd.f32 0.0, %v1195
      %v1197 = vpop.f32.mrf.mxu0
      %1198 = vmatprep.mubr.bf16.mxu0 0
      %1199 = vmatmul.mubr.bf16.gmra.mxu0 %v1080
      %v1200 = vpop.f32.mrf.mxu0
      %v1201 = vadd.f32 0.0, %v1200
      %v1202 = vpop.f32.mrf.mxu0
      %v1203 = vpop.f32.mrf.mxu0
      %v1204 = vadd.f32 0.0, %v1203
      %v1205 = vpop.f32.mrf.mxu0
      %1206 = vmatprep.mubr.bf16.mxu0 0
      %1207 = vmatmul.mubr.bf16.gmra.mxu0 %v1083
      %v1208 = vpop.f32.mrf.mxu0
      %v1209 = vadd.f32 0.0, %v1208
      %v1210 = vpop.f32.mrf.mxu0
      %v1211 = vpop.f32.mrf.mxu0
      %v1212 = vadd.f32 0.0, %v1211
      %v1213 = vpop.f32.mrf.mxu0
      %1214 = vmatprep.mubr.bf16.mxu0 0
      %1215 = vmatmul.mubr.bf16.gmra.mxu0 %v1086
      %v1216 = vpop.f32.mrf.mxu0
      %v1217 = vadd.f32 0.0, %v1216
      %v1218 = vpop.f32.mrf.mxu0
      %v1219 = vpop.f32.mrf.mxu0
      %v1220 = vadd.f32 0.0, %v1219
      %v1221 = vpop.f32.mrf.mxu0
      %1222 = vmatprep.mubr.bf16.mxu0 0
      %1223 = vmatmul.mubr.bf16.gmra.mxu0 %v1089
      %v1224 = vpop.f32.mrf.mxu0
      %v1225 = vadd.f32 0.0, %v1224
      %v1226 = vpop.f32.mrf.mxu0
      %v1227 = vpop.f32.mrf.mxu0
      %v1228 = vadd.f32 0.0, %v1227
      %v1229 = vpop.f32.mrf.mxu0
      %1230 = vmatprep.mubr.bf16.mxu0 0
      %1231 = vmatmul.mubr.bf16.gmra.mxu0 %v1092
      %v1232 = vpop.f32.mrf.mxu0
      %v1233 = vadd.f32 0.0, %v1232
      %v1234 = vpop.f32.mrf.mxu0
      %v1235 = vpop.f32.mrf.mxu0
      %v1236 = vadd.f32 0.0, %v1235
      %v1237 = vpop.f32.mrf.mxu0
      %1238 = vmatprep.mubr.bf16.mxu0 0
      %1239 = vmatmul.mubr.bf16.gmra.mxu0 %v1095
      %v1240 = vpop.f32.mrf.mxu0
      %v1241 = vadd.f32 0.0, %v1240
      %v1242 = vpop.f32.mrf.mxu0
      %v1243 = vpop.f32.mrf.mxu0
      %v1244 = vadd.f32 0.0, %v1243
      %v1245 = vpop.f32.mrf.mxu0
      %1246 = vmatprep.mubr.bf16.mxu0 0
      %1247 = vmatmul.mubr.bf16.gmra.mxu0 %v1098
      %v1248 = vpop.f32.mrf.mxu0
      %v1249 = vadd.f32 0.0, %v1248
      %v1250 = vpop.f32.mrf.mxu0
      %v1251 = vpop.f32.mrf.mxu0
      %v1252 = vadd.f32 0.0, %v1251
      %v1253 = vpop.f32.mrf.mxu0
      %1254 = vmatprep.mubr.bf16.mxu0 0
      %1255 = vmatmul.mubr.bf16.gmra.mxu0 %v1101
      %v1256 = vpop.f32.mrf.mxu0
      %v1257 = vadd.f32 0.0, %v1256
      %v1258 = vpop.f32.mrf.mxu0
      %v1259 = vpop.f32.mrf.mxu0
      %v1260 = vadd.f32 0.0, %v1259
      %v1261 = vpop.f32.mrf.mxu0
      %1262 = vmatprep.mubr.bf16.mxu0 0
      %1263 = vmatmul.mubr.bf16.gmra.mxu0 %v1104
      %v1264 = vpop.f32.mrf.mxu0
      %v1265 = vadd.f32 0.0, %v1264
      %v1266 = vpop.f32.mrf.mxu0
      %v1267 = vpop.f32.mrf.mxu0
      %v1268 = vadd.f32 0.0, %v1267
      %v1269 = vpop.f32.mrf.mxu0
      %1270 = vmatprep.mubr.bf16.mxu0 0
      %1271 = vmatmul.mubr.bf16.gmra.mxu0 %v1107
      %v1272 = vpop.f32.mrf.mxu0
      %v1273 = vadd.f32 0.0, %v1272
      %v1274 = vpop.f32.mrf.mxu0
      %v1275 = vpop.f32.mrf.mxu0
      %v1276 = vadd.f32 0.0, %v1275
      %v1277 = vpop.f32.mrf.mxu0
      %1278 = vmatprep.mubr.bf16.mxu0 0
      %1279 = vmatmul.mubr.bf16.gmra.mxu0 %v1110
      %v1280 = vpop.f32.mrf.mxu0
      %v1281 = vadd.f32 0.0, %v1280
      %v1282 = vpop.f32.mrf.mxu0
      %v1283 = vpop.f32.mrf.mxu0
      %v1284 = vadd.f32 0.0, %v1283
      %v1285 = vpop.f32.mrf.mxu0
      %1286 = vmatprep.mubr.bf16.mxu0 0
      %1287 = vmatmul.mubr.bf16.gmra.mxu0 %v1113
      %v1288 = vpop.f32.mrf.mxu0
      %v1289 = vadd.f32 0.0, %v1288
      %v1290 = vpop.f32.mrf.mxu0
      %v1291 = vpop.f32.mrf.mxu0
      %v1292 = vadd.f32 0.0, %v1291
      %v1293 = vpop.f32.mrf.mxu0
      %1294 = vdwg.mxu0
      %v1295 = vadd.f32 %v881, %v1153
      %v1296 = vadd.f32 %v884, %v1156
      %v1297 = vadd.f32 %v889, %v1161
      %v1298 = vadd.f32 %v892, %v1164
      %v1299 = vadd.f32 %v897, %v1169
      %v1300 = vadd.f32 %v900, %v1172
      %v1301 = vadd.f32 %v905, %v1177
      %v1302 = vadd.f32 %v908, %v1180
      %v1303 = vadd.f32 %v913, %v1185
      %v1304 = vadd.f32 %v916, %v1188
      %v1305 = vadd.f32 %v921, %v1193
      %v1306 = vadd.f32 %v924, %v1196
      %v1307 = vadd.f32 %v929, %v1201
      %v1308 = vadd.f32 %v932, %v1204
      %v1309 = vadd.f32 %v937, %v1209
      %v1310 = vadd.f32 %v940, %v1212
      %v1311 = vadd.f32 %v945, %v1217
      %v1312 = vadd.f32 %v948, %v1220
      %v1313 = vadd.f32 %v953, %v1225
      %v1314 = vadd.f32 %v956, %v1228
      %v1315 = vadd.f32 %v961, %v1233
      %v1316 = vadd.f32 %v964, %v1236
      %v1317 = vadd.f32 %v969, %v1241
      %v1318 = vadd.f32 %v972, %v1244
      %v1319 = vadd.f32 %v977, %v1249
      %v1320 = vadd.f32 %v980, %v1252
      %v1321 = vadd.f32 %v985, %v1257
      %v1322 = vadd.f32 %v988, %v1260
      %v1323 = vadd.f32 %v993, %v1265
      %v1324 = vadd.f32 %v996, %v1268
      %v1325 = vadd.f32 %v1001, %v1273
      %v1326 = vadd.f32 %v1004, %v1276
      %v1327 = vadd.f32 %v1009, %v1281
      %v1328 = vadd.f32 %v1012, %v1284
      %v1329 = vadd.f32 %v1017, %v1289
      %v1330 = vadd.f32 %v1020, %v1292
      %v1333 = vunpack.c.l.b16 %v280
      %v1334 = vunpack.c.l.b16 %v281
      %v1335 = vpack.c.b16 %v1333, %v402
      %v1336 = vpack.c.b16 %v1334, %v1334
      %v1337 = vrot.slane %v1335, 1
      %v1338 = vsel %vm1023, %v1057, %v1337
      %v1339 = vrot.slane %v1336, 1
      %v1340 = vsel %vm1023, %v1337, %v1339
      %v1342 = vsel %vm571, %v1338, 0
      %v1345 = vsel %vm571, %v1340, 0
      %v1348 = vsel %vm626, %v287, 0
      %1350 = vmatprep.subr.bf16.mxu0 0
      %1351 = vmatpush1.bf16.msra.mxu0 0
      %1352 = vmatprep.subr.bf16.mxu0 0
      %1353 = vmatpush1.bf16.msra.mxu0 0
      %1354 = vmatprep.subr.bf16.mxu0 0
      %1355 = vmatpush1.bf16.msra.mxu0 0
      %1356 = vmatprep.subr.bf16.mxu0 0
      %1357 = vmatpush1.bf16.msra.mxu0 0
      %1358 = vmatprep.subr.bf16.mxu0 0
      %1359 = vmatpush1.bf16.msra.mxu0 0
      %1360 = vmatprep.subr.bf16.mxu0 0
      %1361 = vmatpush1.bf16.msra.mxu0 0
      %1362 = vmatprep.subr.bf16.mxu0 0
      %1363 = vmatpush1.bf16.msra.mxu0 0
      %1364 = vmatprep.subr.bf16.mxu0 0
      %1365 = vmatpush1.bf16.msra.mxu0 %v1348
      %1366 = vmatprep.subr.bf16.mxu0 0
      %1367 = vmatpush2.bf16.msra.mxu0 0
      %1368 = vmatprep.subr.bf16.mxu0 0
      %1369 = vmatpush2.bf16.msra.mxu0 0
      %1370 = vmatprep.subr.bf16.mxu0 0
      %1371 = vmatpush2.bf16.msra.mxu0 0
      %1372 = vmatprep.subr.bf16.mxu0 0
      %1373 = vmatpush2.bf16.msra.mxu0 0
      %1374 = vmatprep.subr.bf16.mxu0 0
      %1375 = vmatpush2.bf16.msra.mxu0 0
      %1376 = vmatprep.subr.bf16.mxu0 0
      %1377 = vmatpush2.bf16.msra.mxu0 0
      %1378 = vmatprep.subr.bf16.mxu0 0
      %1379 = vmatpush2.bf16.msra.mxu0 0
      %1380 = vmatprep.subr.bf16.mxu0 0
      %1381 = vmatpush2.bf16.msra.mxu0 0
      %1382 = vmatprep.mubr.bf16.mxu0 0
      %1383 = vmatmul.mubr.bf16.gmra.mxu0 %v1065
      %v1384 = vpop.f32.mrf.mxu0
      %v1385 = vadd.f32 0.0, %v1384
      %v1386 = vpop.f32.mrf.mxu0
      %v1387 = vpop.f32.mrf.mxu0
      %v1388 = vadd.f32 0.0, %v1387
      %v1389 = vpop.f32.mrf.mxu0
      %1390 = vmatprep.mubr.bf16.mxu0 0
      %1391 = vmatmul.mubr.bf16.gmra.mxu0 %v1068
      %v1392 = vpop.f32.mrf.mxu0
      %v1393 = vadd.f32 0.0, %v1392
      %v1394 = vpop.f32.mrf.mxu0
      %v1395 = vpop.f32.mrf.mxu0
      %v1396 = vadd.f32 0.0, %v1395
      %v1397 = vpop.f32.mrf.mxu0
      %1398 = vmatprep.mubr.bf16.mxu0 0
      %1399 = vmatmul.mubr.bf16.gmra.mxu0 %v1071
      %v1400 = vpop.f32.mrf.mxu0
      %v1401 = vadd.f32 0.0, %v1400
      %v1402 = vpop.f32.mrf.mxu0
      %v1403 = vpop.f32.mrf.mxu0
      %v1404 = vadd.f32 0.0, %v1403
      %v1405 = vpop.f32.mrf.mxu0
      %1406 = vmatprep.mubr.bf16.mxu0 0
      %1407 = vmatmul.mubr.bf16.gmra.mxu0 %v1074
      %v1408 = vpop.f32.mrf.mxu0
      %v1409 = vadd.f32 0.0, %v1408
      %v1410 = vpop.f32.mrf.mxu0
      %v1411 = vpop.f32.mrf.mxu0
      %v1412 = vadd.f32 0.0, %v1411
      %v1413 = vpop.f32.mrf.mxu0
      %1414 = vmatprep.mubr.bf16.mxu0 0
      %1415 = vmatmul.mubr.bf16.gmra.mxu0 %v1077
      %v1416 = vpop.f32.mrf.mxu0
      %v1417 = vadd.f32 0.0, %v1416
      %v1418 = vpop.f32.mrf.mxu0
      %v1419 = vpop.f32.mrf.mxu0
      %v1420 = vadd.f32 0.0, %v1419
      %v1421 = vpop.f32.mrf.mxu0
      %1422 = vmatprep.mubr.bf16.mxu0 0
      %1423 = vmatmul.mubr.bf16.gmra.mxu0 %v1080
      %v1424 = vpop.f32.mrf.mxu0
      %v1425 = vadd.f32 0.0, %v1424
      %v1426 = vpop.f32.mrf.mxu0
      %v1427 = vpop.f32.mrf.mxu0
      %v1428 = vadd.f32 0.0, %v1427
      %v1429 = vpop.f32.mrf.mxu0
      %1430 = vmatprep.mubr.bf16.mxu0 0
      %1431 = vmatmul.mubr.bf16.gmra.mxu0 %v1083
      %v1432 = vpop.f32.mrf.mxu0
      %v1433 = vadd.f32 0.0, %v1432
      %v1434 = vpop.f32.mrf.mxu0
      %v1435 = vpop.f32.mrf.mxu0
      %v1436 = vadd.f32 0.0, %v1435
      %v1437 = vpop.f32.mrf.mxu0
      %1438 = vmatprep.mubr.bf16.mxu0 0
      %1439 = vmatmul.mubr.bf16.gmra.mxu0 %v1086
      %v1440 = vpop.f32.mrf.mxu0
      %v1441 = vadd.f32 0.0, %v1440
      %v1442 = vpop.f32.mrf.mxu0
      %v1443 = vpop.f32.mrf.mxu0
      %v1444 = vadd.f32 0.0, %v1443
      %v1445 = vpop.f32.mrf.mxu0
      %1446 = vmatprep.mubr.bf16.mxu0 0
      %1447 = vmatmul.mubr.bf16.gmra.mxu0 %v1089
      %v1448 = vpop.f32.mrf.mxu0
      %v1449 = vadd.f32 0.0, %v1448
      %v1450 = vpop.f32.mrf.mxu0
      %v1451 = vpop.f32.mrf.mxu0
      %v1452 = vadd.f32 0.0, %v1451
      %v1453 = vpop.f32.mrf.mxu0
      %1454 = vmatprep.mubr.bf16.mxu0 0
      %1455 = vmatmul.mubr.bf16.gmra.mxu0 %v1092
      %v1456 = vpop.f32.mrf.mxu0
      %v1457 = vadd.f32 0.0, %v1456
      %v1458 = vpop.f32.mrf.mxu0
      %v1459 = vpop.f32.mrf.mxu0
      %v1460 = vadd.f32 0.0, %v1459
      %v1461 = vpop.f32.mrf.mxu0
      %1462 = vmatprep.mubr.bf16.mxu0 0
      %1463 = vmatmul.mubr.bf16.gmra.mxu0 %v1095
      %v1464 = vpop.f32.mrf.mxu0
      %v1465 = vadd.f32 0.0, %v1464
      %v1466 = vpop.f32.mrf.mxu0
      %v1467 = vpop.f32.mrf.mxu0
      %v1468 = vadd.f32 0.0, %v1467
      %v1469 = vpop.f32.mrf.mxu0
      %1470 = vmatprep.mubr.bf16.mxu0 0
      %1471 = vmatmul.mubr.bf16.gmra.mxu0 %v1098
      %v1472 = vpop.f32.mrf.mxu0
      %v1473 = vadd.f32 0.0, %v1472
      %v1474 = vpop.f32.mrf.mxu0
      %v1475 = vpop.f32.mrf.mxu0
      %v1476 = vadd.f32 0.0, %v1475
      %v1477 = vpop.f32.mrf.mxu0
      %1478 = vmatprep.mubr.bf16.mxu0 0
      %1479 = vmatmul.mubr.bf16.gmra.mxu0 %v1101
      %v1480 = vpop.f32.mrf.mxu0
      %v1481 = vadd.f32 0.0, %v1480
      %v1482 = vpop.f32.mrf.mxu0
      %v1483 = vpop.f32.mrf.mxu0
      %v1484 = vadd.f32 0.0, %v1483
      %v1485 = vpop.f32.mrf.mxu0
      %1486 = vmatprep.mubr.bf16.mxu0 0
      %1487 = vmatmul.mubr.bf16.gmra.mxu0 %v1104
      %v1488 = vpop.f32.mrf.mxu0
      %v1489 = vadd.f32 0.0, %v1488
      %v1490 = vpop.f32.mrf.mxu0
      %v1491 = vpop.f32.mrf.mxu0
      %v1492 = vadd.f32 0.0, %v1491
      %v1493 = vpop.f32.mrf.mxu0
      %1494 = vmatprep.mubr.bf16.mxu0 0
      %1495 = vmatmul.mubr.bf16.gmra.mxu0 %v1107
      %v1496 = vpop.f32.mrf.mxu0
      %v1497 = vadd.f32 0.0, %v1496
      %v1498 = vpop.f32.mrf.mxu0
      %v1499 = vpop.f32.mrf.mxu0
      %v1500 = vadd.f32 0.0, %v1499
      %v1501 = vpop.f32.mrf.mxu0
      %1502 = vmatprep.mubr.bf16.mxu0 0
      %1503 = vmatmul.mubr.bf16.gmra.mxu0 %v1110
      %v1504 = vpop.f32.mrf.mxu0
      %v1505 = vadd.f32 0.0, %v1504
      %v1506 = vpop.f32.mrf.mxu0
      %v1507 = vpop.f32.mrf.mxu0
      %v1508 = vadd.f32 0.0, %v1507
      %v1509 = vpop.f32.mrf.mxu0
      %1510 = vmatprep.mubr.bf16.mxu0 0
      %1511 = vmatmul.mubr.bf16.gmra.mxu0 %v1342
      %v1512 = vpop.f32.mrf.mxu0
      %v1513 = vadd.f32 0.0, %v1512
      %v1514 = vpop.f32.mrf.mxu0
      %v1515 = vpop.f32.mrf.mxu0
      %v1516 = vadd.f32 0.0, %v1515
      %v1517 = vpop.f32.mrf.mxu0
      %1518 = vmatprep.mubr.bf16.mxu0 0
      %1519 = vmatmul.mubr.bf16.gmra.mxu0 %v1345
      %v1520 = vpop.f32.mrf.mxu0
      %v1521 = vadd.f32 0.0, %v1520
      %v1522 = vpop.f32.mrf.mxu0
      %v1523 = vpop.f32.mrf.mxu0
      %v1524 = vadd.f32 0.0, %v1523
      %v1525 = vpop.f32.mrf.mxu0
      %1526 = vdwg.mxu0
      %v1527 = vadd.f32 %v1295, %v1385
      %v1528 = vadd.f32 %v1296, %v1388
      %v1529 = vadd.f32 %v1297, %v1393
      %v1530 = vadd.f32 %v1298, %v1396
      %v1531 = vadd.f32 %v1299, %v1401
      %v1532 = vadd.f32 %v1300, %v1404
      %v1533 = vadd.f32 %v1301, %v1409
      %v1534 = vadd.f32 %v1302, %v1412
      %v1535 = vadd.f32 %v1303, %v1417
      %v1536 = vadd.f32 %v1304, %v1420
      %v1537 = vadd.f32 %v1305, %v1425
      %v1538 = vadd.f32 %v1306, %v1428
      %v1539 = vadd.f32 %v1307, %v1433
      %v1540 = vadd.f32 %v1308, %v1436
      %v1541 = vadd.f32 %v1309, %v1441
      %v1542 = vadd.f32 %v1310, %v1444
      %v1543 = vadd.f32 %v1311, %v1449
      %v1544 = vadd.f32 %v1312, %v1452
      %v1545 = vadd.f32 %v1313, %v1457
      %v1546 = vadd.f32 %v1314, %v1460
      %v1547 = vadd.f32 %v1315, %v1465
      %v1548 = vadd.f32 %v1316, %v1468
      %v1549 = vadd.f32 %v1317, %v1473
      %v1550 = vadd.f32 %v1318, %v1476
      %v1551 = vadd.f32 %v1319, %v1481
      %v1552 = vadd.f32 %v1320, %v1484
      %v1553 = vadd.f32 %v1321, %v1489
      %v1554 = vadd.f32 %v1322, %v1492
      %v1555 = vadd.f32 %v1323, %v1497
      %v1556 = vadd.f32 %v1324, %v1500
      %v1557 = vadd.f32 %v1325, %v1505
      %v1558 = vadd.f32 %v1326, %v1508
      %v1559 = vadd.f32 %v1327, %v1513
      %v1560 = vadd.f32 %v1328, %v1516
      %v1561 = vadd.f32 %v1329, %v1521
      %v1562 = vadd.f32 %v1330, %v1524
      %vm1563 = vsmask.f32 6400
      %v1564 = vrot.slane %v435, 1
      %v1565 = vrot.slane %v431, 2
      %v1566 = vor.u32 %v1564, %v1565
      %v1567 = vrot.slane %v443, 1
      %v1568 = vrot.slane %v439, 2
      %v1569 = vor.u32 %v1567, %v1568
      %v1570 = vsel %vm1563, %v1566, %v1569
      %v1571 = vrot.slane %v451, 1
      %v1572 = vrot.slane %v447, 2
      %v1573 = vor.u32 %v1571, %v1572
      %v1574 = vsel %vm1563, %v1569, %v1573
      %v1575 = vrot.slane %v459, 1
      %v1576 = vrot.slane %v455, 2
      %v1577 = vor.u32 %v1575, %v1576
      %v1578 = vsel %vm1563, %v1573, %v1577
      %v1579 = vrot.slane %v467, 1
      %v1580 = vrot.slane %v463, 2
      %v1581 = vor.u32 %v1579, %v1580
      %v1582 = vsel %vm1563, %v1577, %v1581
      %v1583 = vrot.slane %v475, 1
      %v1584 = vrot.slane %v471, 2
      %v1585 = vor.u32 %v1583, %v1584
      %v1586 = vsel %vm1563, %v1581, %v1585
      %v1587 = vrot.slane %v483, 1
      %v1588 = vrot.slane %v479, 2
      %v1589 = vor.u32 %v1587, %v1588
      %v1590 = vsel %vm1563, %v1585, %v1589
      %v1591 = vrot.slane %v491, 1
      %v1592 = vrot.slane %v487, 2
      %v1593 = vor.u32 %v1591, %v1592
      %v1594 = vsel %vm1563, %v1589, %v1593
      %v1595 = vrot.slane %v499, 1
      %v1596 = vrot.slane %v495, 2
      %v1597 = vor.u32 %v1595, %v1596
      %v1598 = vsel %vm1563, %v1593, %v1597
      %v1599 = vrot.slane %v507, 1
      %v1600 = vrot.slane %v503, 2
      %v1601 = vor.u32 %v1599, %v1600
      %v1602 = vsel %vm1563, %v1597, %v1601
      %v1603 = vrot.slane %v515, 1
      %v1604 = vrot.slane %v511, 2
      %v1605 = vor.u32 %v1603, %v1604
      %v1606 = vsel %vm1563, %v1601, %v1605
      %v1607 = vrot.slane %v523, 1
      %v1608 = vrot.slane %v519, 2
      %v1609 = vor.u32 %v1607, %v1608
      %v1610 = vsel %vm1563, %v1605, %v1609
      %v1611 = vrot.slane %v531, 1
      %v1612 = vrot.slane %v527, 2
      %v1613 = vor.u32 %v1611, %v1612
      %v1614 = vsel %vm1563, %v1609, %v1613
      %v1615 = vrot.slane %v539, 1
      %v1616 = vrot.slane %v535, 2
      %v1617 = vor.u32 %v1615, %v1616
      %v1618 = vsel %vm1563, %v1613, %v1617
      %v1619 = vrot.slane %v547, 1
      %v1620 = vrot.slane %v543, 2
      %v1621 = vor.u32 %v1619, %v1620
      %v1622 = vsel %vm1563, %v1617, %v1621
      %v1623 = vrot.slane %v555, 1
      %v1624 = vrot.slane %v551, 2
      %v1625 = vor.u32 %v1623, %v1624
      %v1626 = vsel %vm1563, %v1621, %v1625
      %v1627 = vrot.slane %v563, 1
      %v1628 = vrot.slane %v559, 2
      %v1629 = vor.u32 %v1627, %v1628
      %v1630 = vsel %vm1563, %v1625, %v1629
      %v1632 = vshrl.u32 %v1335, 16
      %v1634 = vrot.slane %v1632, 1
      %v1635 = vshll.u32 %v1335, 16
      %v1637 = vrot.slane %v1635, 2
      %v1638 = vor.u32 %v1634, %v1637
      %v1639 = vsel %vm1563, %v1629, %v1638
      %v1641 = vshrl.u32 %v1336, 16
      %v1643 = vrot.slane %v1641, 1
      %v1644 = vshll.u32 %v1336, 16
      %v1646 = vrot.slane %v1644, 2
      %v1647 = vor.u32 %v1643, %v1646
      %v1648 = vsel %vm1563, %v1638, %v1647
      %v1650 = vsel %vm571, %v1570, 0
      %v1653 = vsel %vm571, %v1574, 0
      %v1656 = vsel %vm571, %v1578, 0
      %v1659 = vsel %vm571, %v1582, 0
      %v1662 = vsel %vm571, %v1586, 0
      %v1665 = vsel %vm571, %v1590, 0
      %v1668 = vsel %vm571, %v1594, 0
      %v1671 = vsel %vm571, %v1598, 0
      %v1674 = vsel %vm571, %v1602, 0
      %v1677 = vsel %vm571, %v1606, 0
      %v1680 = vsel %vm571, %v1610, 0
      %v1683 = vsel %vm571, %v1614, 0
      %v1686 = vsel %vm571, %v1618, 0
      %v1689 = vsel %vm571, %v1622, 0
      %v1692 = vsel %vm571, %v1626, 0
      %v1695 = vsel %vm571, %v1630, 0
      %v1698 = vsel %vm571, %v1639, 0
      %v1701 = vsel %vm571, %v1648, 0
      %v1704 = vsel %vm626, %v288, 0
      %1706 = vmatprep.subr.bf16.mxu0 0
      %1707 = vmatpush1.bf16.msra.mxu0 0
      %1708 = vmatprep.subr.bf16.mxu0 0
      %1709 = vmatpush1.bf16.msra.mxu0 0
      %1710 = vmatprep.subr.bf16.mxu0 0
      %1711 = vmatpush1.bf16.msra.mxu0 0
      %1712 = vmatprep.subr.bf16.mxu0 0
      %1713 = vmatpush1.bf16.msra.mxu0 0
      %1714 = vmatprep.subr.bf16.mxu0 0
      %1715 = vmatpush1.bf16.msra.mxu0 0
      %1716 = vmatprep.subr.bf16.mxu0 0
      %1717 = vmatpush1.bf16.msra.mxu0 0
      %1718 = vmatprep.subr.bf16.mxu0 0
      %1719 = vmatpush1.bf16.msra.mxu0 0
      %1720 = vmatprep.subr.bf16.mxu0 0
      %1721 = vmatpush1.bf16.msra.mxu0 %v1704
      %1722 = vmatprep.subr.bf16.mxu0 0
      %1723 = vmatpush2.bf16.msra.mxu0 0
      %1724 = vmatprep.subr.bf16.mxu0 0
      %1725 = vmatpush2.bf16.msra.mxu0 0
      %1726 = vmatprep.subr.bf16.mxu0 0
      %1727 = vmatpush2.bf16.msra.mxu0 0
      %1728 = vmatprep.subr.bf16.mxu0 0
      %1729 = vmatpush2.bf16.msra.mxu0 0
      %1730 = vmatprep.subr.bf16.mxu0 0
      %1731 = vmatpush2.bf16.msra.mxu0 0
      %1732 = vmatprep.subr.bf16.mxu0 0
      %1733 = vmatpush2.bf16.msra.mxu0 0
      %1734 = vmatprep.subr.bf16.mxu0 0
      %1735 = vmatpush2.bf16.msra.mxu0 0
      %1736 = vmatprep.subr.bf16.mxu0 0
      %1737 = vmatpush2.bf16.msra.mxu0 0
      %1738 = vmatprep.mubr.bf16.mxu0 0
      %1739 = vmatmul.mubr.bf16.gmra.mxu0 %v1650
      %v1740 = vpop.f32.mrf.mxu0
      %v1741 = vadd.f32 0.0, %v1740
      %v1742 = vpop.f32.mrf.mxu0
      %v1743 = vpop.f32.mrf.mxu0
      %v1744 = vadd.f32 0.0, %v1743
      %v1745 = vpop.f32.mrf.mxu0
      %1746 = vmatprep.mubr.bf16.mxu0 0
      %1747 = vmatmul.mubr.bf16.gmra.mxu0 %v1653
      %v1748 = vpop.f32.mrf.mxu0
      %v1749 = vadd.f32 0.0, %v1748
      %v1750 = vpop.f32.mrf.mxu0
      %v1751 = vpop.f32.mrf.mxu0
      %v1752 = vadd.f32 0.0, %v1751
      %v1753 = vpop.f32.mrf.mxu0
      %1754 = vmatprep.mubr.bf16.mxu0 0
      %1755 = vmatmul.mubr.bf16.gmra.mxu0 %v1656
      %v1756 = vpop.f32.mrf.mxu0
      %v1757 = vadd.f32 0.0, %v1756
      %v1758 = vpop.f32.mrf.mxu0
      %v1759 = vpop.f32.mrf.mxu0
      %v1760 = vadd.f32 0.0, %v1759
      %v1761 = vpop.f32.mrf.mxu0
      %1762 = vmatprep.mubr.bf16.mxu0 0
      %1763 = vmatmul.mubr.bf16.gmra.mxu0 %v1659
      %v1764 = vpop.f32.mrf.mxu0
      %v1765 = vadd.f32 0.0, %v1764
      %v1766 = vpop.f32.mrf.mxu0
      %v1767 = vpop.f32.mrf.mxu0
      %v1768 = vadd.f32 0.0, %v1767
      %v1769 = vpop.f32.mrf.mxu0
      %1770 = vmatprep.mubr.bf16.mxu0 0
      %1771 = vmatmul.mubr.bf16.gmra.mxu0 %v1662
      %v1772 = vpop.f32.mrf.mxu0
      %v1773 = vadd.f32 0.0, %v1772
      %v1774 = vpop.f32.mrf.mxu0
      %v1775 = vpop.f32.mrf.mxu0
      %v1776 = vadd.f32 0.0, %v1775
      %v1777 = vpop.f32.mrf.mxu0
      %1778 = vmatprep.mubr.bf16.mxu0 0
      %1779 = vmatmul.mubr.bf16.gmra.mxu0 %v1665
      %v1780 = vpop.f32.mrf.mxu0
      %v1781 = vadd.f32 0.0, %v1780
      %v1782 = vpop.f32.mrf.mxu0
      %v1783 = vpop.f32.mrf.mxu0
      %v1784 = vadd.f32 0.0, %v1783
      %v1785 = vpop.f32.mrf.mxu0
      %1786 = vmatprep.mubr.bf16.mxu0 0
      %1787 = vmatmul.mubr.bf16.gmra.mxu0 %v1668
      %v1788 = vpop.f32.mrf.mxu0
      %v1789 = vadd.f32 0.0, %v1788
      %v1790 = vpop.f32.mrf.mxu0
      %v1791 = vpop.f32.mrf.mxu0
      %v1792 = vadd.f32 0.0, %v1791
      %v1793 = vpop.f32.mrf.mxu0
      %1794 = vmatprep.mubr.bf16.mxu0 0
      %1795 = vmatmul.mubr.bf16.gmra.mxu0 %v1671
      %v1796 = vpop.f32.mrf.mxu0
      %v1797 = vadd.f32 0.0, %v1796
      %v1798 = vpop.f32.mrf.mxu0
      %v1799 = vpop.f32.mrf.mxu0
      %v1800 = vadd.f32 0.0, %v1799
      %v1801 = vpop.f32.mrf.mxu0
      %1802 = vmatprep.mubr.bf16.mxu0 0
      %1803 = vmatmul.mubr.bf16.gmra.mxu0 %v1674
      %v1804 = vpop.f32.mrf.mxu0
      %v1805 = vadd.f32 0.0, %v1804
      %v1806 = vpop.f32.mrf.mxu0
      %v1807 = vpop.f32.mrf.mxu0
      %v1808 = vadd.f32 0.0, %v1807
      %v1809 = vpop.f32.mrf.mxu0
      %1810 = vmatprep.mubr.bf16.mxu0 0
      %1811 = vmatmul.mubr.bf16.gmra.mxu0 %v1677
      %v1812 = vpop.f32.mrf.mxu0
      %v1813 = vadd.f32 0.0, %v1812
      %v1814 = vpop.f32.mrf.mxu0
      %v1815 = vpop.f32.mrf.mxu0
      %v1816 = vadd.f32 0.0, %v1815
      %v1817 = vpop.f32.mrf.mxu0
      %1818 = vmatprep.mubr.bf16.mxu0 0
      %1819 = vmatmul.mubr.bf16.gmra.mxu0 %v1680
      %v1820 = vpop.f32.mrf.mxu0
      %v1821 = vadd.f32 0.0, %v1820
      %v1822 = vpop.f32.mrf.mxu0
      %v1823 = vpop.f32.mrf.mxu0
      %v1824 = vadd.f32 0.0, %v1823
      %v1825 = vpop.f32.mrf.mxu0
      %1826 = vmatprep.mubr.bf16.mxu0 0
      %1827 = vmatmul.mubr.bf16.gmra.mxu0 %v1683
      %v1828 = vpop.f32.mrf.mxu0
      %v1829 = vadd.f32 0.0, %v1828
      %v1830 = vpop.f32.mrf.mxu0
      %v1831 = vpop.f32.mrf.mxu0
      %v1832 = vadd.f32 0.0, %v1831
      %v1833 = vpop.f32.mrf.mxu0
      %1834 = vmatprep.mubr.bf16.mxu0 0
      %1835 = vmatmul.mubr.bf16.gmra.mxu0 %v1686
      %v1836 = vpop.f32.mrf.mxu0
      %v1837 = vadd.f32 0.0, %v1836
      %v1838 = vpop.f32.mrf.mxu0
      %v1839 = vpop.f32.mrf.mxu0
      %v1840 = vadd.f32 0.0, %v1839
      %v1841 = vpop.f32.mrf.mxu0
      %1842 = vmatprep.mubr.bf16.mxu0 0
      %1843 = vmatmul.mubr.bf16.gmra.mxu0 %v1689
      %v1844 = vpop.f32.mrf.mxu0
      %v1845 = vadd.f32 0.0, %v1844
      %v1846 = vpop.f32.mrf.mxu0
      %v1847 = vpop.f32.mrf.mxu0
      %v1848 = vadd.f32 0.0, %v1847
      %v1849 = vpop.f32.mrf.mxu0
      %1850 = vmatprep.mubr.bf16.mxu0 0
      %1851 = vmatmul.mubr.bf16.gmra.mxu0 %v1692
      %v1852 = vpop.f32.mrf.mxu0
      %v1853 = vadd.f32 0.0, %v1852
      %v1854 = vpop.f32.mrf.mxu0
      %v1855 = vpop.f32.mrf.mxu0
      %v1856 = vadd.f32 0.0, %v1855
      %v1857 = vpop.f32.mrf.mxu0
      %1858 = vmatprep.mubr.bf16.mxu0 0
      %1859 = vmatmul.mubr.bf16.gmra.mxu0 %v1695
      %v1860 = vpop.f32.mrf.mxu0
      %v1861 = vadd.f32 0.0, %v1860
      %v1862 = vpop.f32.mrf.mxu0
      %v1863 = vpop.f32.mrf.mxu0
      %v1864 = vadd.f32 0.0, %v1863
      %v1865 = vpop.f32.mrf.mxu0
      %1866 = vmatprep.mubr.bf16.mxu0 0
      %1867 = vmatmul.mubr.bf16.gmra.mxu0 %v1698
      %v1868 = vpop.f32.mrf.mxu0
      %v1869 = vadd.f32 0.0, %v1868
      %v1870 = vpop.f32.mrf.mxu0
      %v1871 = vpop.f32.mrf.mxu0
      %v1872 = vadd.f32 0.0, %v1871
      %v1873 = vpop.f32.mrf.mxu0
      %1874 = vmatprep.mubr.bf16.mxu0 0
      %1875 = vmatmul.mubr.bf16.gmra.mxu0 %v1701
      %v1876 = vpop.f32.mrf.mxu0
      %v1877 = vadd.f32 0.0, %v1876
      %v1878 = vpop.f32.mrf.mxu0
      %v1879 = vpop.f32.mrf.mxu0
      %v1880 = vadd.f32 0.0, %v1879
      %v1881 = vpop.f32.mrf.mxu0
      %1882 = vdwg.mxu0
      %v1883 = vadd.f32 %v1527, %v1741
      %v1884 = vadd.f32 %v1528, %v1744
      %v1885 = vadd.f32 %v1529, %v1749
      %v1886 = vadd.f32 %v1530, %v1752
      %v1887 = vadd.f32 %v1531, %v1757
      %v1888 = vadd.f32 %v1532, %v1760
      %v1889 = vadd.f32 %v1533, %v1765
      %v1890 = vadd.f32 %v1534, %v1768
      %v1891 = vadd.f32 %v1535, %v1773
      %v1892 = vadd.f32 %v1536, %v1776
      %v1893 = vadd.f32 %v1537, %v1781
      %v1894 = vadd.f32 %v1538, %v1784
      %v1895 = vadd.f32 %v1539, %v1789
      %v1896 = vadd.f32 %v1540, %v1792
      %v1897 = vadd.f32 %v1541, %v1797
      %v1898 = vadd.f32 %v1542, %v1800
      %v1899 = vadd.f32 %v1543, %v1805
      %v1900 = vadd.f32 %v1544, %v1808
      %v1901 = vadd.f32 %v1545, %v1813
      %v1902 = vadd.f32 %v1546, %v1816
      %v1903 = vadd.f32 %v1547, %v1821
      %v1904 = vadd.f32 %v1548, %v1824
      %v1905 = vadd.f32 %v1549, %v1829
      %v1906 = vadd.f32 %v1550, %v1832
      %v1907 = vadd.f32 %v1551, %v1837
      %v1908 = vadd.f32 %v1552, %v1840
      %v1909 = vadd.f32 %v1553, %v1845
      %v1910 = vadd.f32 %v1554, %v1848
      %v1911 = vadd.f32 %v1555, %v1853
      %v1912 = vadd.f32 %v1556, %v1856
      %v1913 = vadd.f32 %v1557, %v1861
      %v1914 = vadd.f32 %v1558, %v1864
      %v1915 = vadd.f32 %v1559, %v1869
      %v1916 = vadd.f32 %v1560, %v1872
      %v1917 = vadd.f32 %v1561, %v1877
      %v1918 = vadd.f32 %v1562, %v1880
      %vm1919 = vcmask 1045504
      %v1920 = vrot.slane %v404, 2
      %v1921 = vrot.slane %v405, 2
      %v1922 = vsel %vm1919, %v1920, %v1921
      %v1923 = vrot.slane %v406, 2
      %v1924 = vsel %vm1919, %v1921, %v1923
      %v1925 = vrot.slane %v407, 2
      %v1926 = vsel %vm1919, %v1923, %v1925
      %v1927 = vrot.slane %v408, 2
      %v1928 = vsel %vm1919, %v1925, %v1927
      %v1929 = vrot.slane %v409, 2
      %v1930 = vsel %vm1919, %v1927, %v1929
      %v1931 = vrot.slane %v410, 2
      %v1932 = vsel %vm1919, %v1929, %v1931
      %v1933 = vrot.slane %v411, 2
      %v1934 = vsel %vm1919, %v1931, %v1933
      %v1935 = vrot.slane %v412, 2
      %v1936 = vsel %vm1919, %v1933, %v1935
      %v1937 = vrot.slane %v413, 2
      %v1938 = vsel %vm1919, %v1935, %v1937
      %v1939 = vrot.slane %v414, 2
      %v1940 = vsel %vm1919, %v1937, %v1939
      %v1941 = vrot.slane %v415, 2
      %v1942 = vsel %vm1919, %v1939, %v1941
      %v1943 = vrot.slane %v416, 2
      %v1944 = vsel %vm1919, %v1941, %v1943
      %v1945 = vrot.slane %v417, 2
      %v1946 = vsel %vm1919, %v1943, %v1945
      %v1947 = vrot.slane %v418, 2
      %v1948 = vsel %vm1919, %v1945, %v1947
      %v1949 = vrot.slane %v419, 2
      %v1950 = vsel %vm1919, %v1947, %v1949
      %v1951 = vrot.slane %v420, 2
      %v1952 = vsel %vm1919, %v1949, %v1951
      %v1953 = vrot.slane %v1335, 2
      %v1954 = vsel %vm1919, %v1951, %v1953
      %v1955 = vrot.slane %v1336, 2
      %v1956 = vsel %vm1919, %v1953, %v1955
      %v1958 = vsel %vm571, %v1922, 0
      %v1961 = vsel %vm571, %v1924, 0
      %v1964 = vsel %vm571, %v1926, 0
      %v1967 = vsel %vm571, %v1928, 0
      %v1970 = vsel %vm571, %v1930, 0
      %v1973 = vsel %vm571, %v1932, 0
      %v1976 = vsel %vm571, %v1934, 0
      %v1979 = vsel %vm571, %v1936, 0
      %v1982 = vsel %vm571, %v1938, 0
      %v1985 = vsel %vm571, %v1940, 0
      %v1988 = vsel %vm571, %v1942, 0
      %v1991 = vsel %vm571, %v1944, 0
      %v1994 = vsel %vm571, %v1946, 0
      %v1997 = vsel %vm571, %v1948, 0
      %v2000 = vsel %vm571, %v1950, 0
      %v2003 = vsel %vm571, %v1952, 0
      %v2006 = vsel %vm571, %v1954, 0
      %v2009 = vsel %vm571, %v1956, 0
      %v2012 = vsel %vm626, %v289, 0
      %2014 = vmatprep.subr.bf16.mxu0 0
      %2015 = vmatpush1.bf16.msra.mxu0 0
      %2016 = vmatprep.subr.bf16.mxu0 0
      %2017 = vmatpush1.bf16.msra.mxu0 0
      %2018 = vmatprep.subr.bf16.mxu0 0
      %2019 = vmatpush1.bf16.msra.mxu0 0
      %2020 = vmatprep.subr.bf16.mxu0 0
      %2021 = vmatpush1.bf16.msra.mxu0 0
      %2022 = vmatprep.subr.bf16.mxu0 0
      %2023 = vmatpush1.bf16.msra.mxu0 0
      %2024 = vmatprep.subr.bf16.mxu0 0
      %2025 = vmatpush1.bf16.msra.mxu0 0
      %2026 = vmatprep.subr.bf16.mxu0 0
      %2027 = vmatpush1.bf16.msra.mxu0 0
      %2028 = vmatprep.subr.bf16.mxu0 0
      %2029 = vmatpush1.bf16.msra.mxu0 %v2012
      %2030 = vmatprep.subr.bf16.mxu0 0
      %2031 = vmatpush2.bf16.msra.mxu0 0
      %2032 = vmatprep.subr.bf16.mxu0 0
      %2033 = vmatpush2.bf16.msra.mxu0 0
      %2034 = vmatprep.subr.bf16.mxu0 0
      %2035 = vmatpush2.bf16.msra.mxu0 0
      %2036 = vmatprep.subr.bf16.mxu0 0
      %2037 = vmatpush2.bf16.msra.mxu0 0
      %2038 = vmatprep.subr.bf16.mxu0 0
      %2039 = vmatpush2.bf16.msra.mxu0 0
      %2040 = vmatprep.subr.bf16.mxu0 0
      %2041 = vmatpush2.bf16.msra.mxu0 0
      %2042 = vmatprep.subr.bf16.mxu0 0
      %2043 = vmatpush2.bf16.msra.mxu0 0
      %2044 = vmatprep.subr.bf16.mxu0 0
      %2045 = vmatpush2.bf16.msra.mxu0 0
      %2046 = vmatprep.mubr.bf16.mxu0 0
      %2047 = vmatmul.mubr.bf16.gmra.mxu0 %v1958
      %v2048 = vpop.f32.mrf.mxu0
      %v2049 = vadd.f32 0.0, %v2048
      %v2050 = vpop.f32.mrf.mxu0
      %v2051 = vpop.f32.mrf.mxu0
      %v2052 = vadd.f32 0.0, %v2051
      %v2053 = vpop.f32.mrf.mxu0
      %2054 = vmatprep.mubr.bf16.mxu0 0
      %2055 = vmatmul.mubr.bf16.gmra.mxu0 %v1961
      %v2056 = vpop.f32.mrf.mxu0
      %v2057 = vadd.f32 0.0, %v2056
      %v2058 = vpop.f32.mrf.mxu0
      %v2059 = vpop.f32.mrf.mxu0
      %v2060 = vadd.f32 0.0, %v2059
      %v2061 = vpop.f32.mrf.mxu0
      %2062 = vmatprep.mubr.bf16.mxu0 0
      %2063 = vmatmul.mubr.bf16.gmra.mxu0 %v1964
      %v2064 = vpop.f32.mrf.mxu0
      %v2065 = vadd.f32 0.0, %v2064
      %v2066 = vpop.f32.mrf.mxu0
      %v2067 = vpop.f32.mrf.mxu0
      %v2068 = vadd.f32 0.0, %v2067
      %v2069 = vpop.f32.mrf.mxu0
      %2070 = vmatprep.mubr.bf16.mxu0 0
      %2071 = vmatmul.mubr.bf16.gmra.mxu0 %v1967
      %v2072 = vpop.f32.mrf.mxu0
      %v2073 = vadd.f32 0.0, %v2072
      %v2074 = vpop.f32.mrf.mxu0
      %v2075 = vpop.f32.mrf.mxu0
      %v2076 = vadd.f32 0.0, %v2075
      %v2077 = vpop.f32.mrf.mxu0
      %2078 = vmatprep.mubr.bf16.mxu0 0
      %2079 = vmatmul.mubr.bf16.gmra.mxu0 %v1970
      %v2080 = vpop.f32.mrf.mxu0
      %v2081 = vadd.f32 0.0, %v2080
      %v2082 = vpop.f32.mrf.mxu0
      %v2083 = vpop.f32.mrf.mxu0
      %v2084 = vadd.f32 0.0, %v2083
      %v2085 = vpop.f32.mrf.mxu0
      %2086 = vmatprep.mubr.bf16.mxu0 0
      %2087 = vmatmul.mubr.bf16.gmra.mxu0 %v1973
      %v2088 = vpop.f32.mrf.mxu0
      %v2089 = vadd.f32 0.0, %v2088
      %v2090 = vpop.f32.mrf.mxu0
      %v2091 = vpop.f32.mrf.mxu0
      %v2092 = vadd.f32 0.0, %v2091
      %v2093 = vpop.f32.mrf.mxu0
      %2094 = vmatprep.mubr.bf16.mxu0 0
      %2095 = vmatmul.mubr.bf16.gmra.mxu0 %v1976
      %v2096 = vpop.f32.mrf.mxu0
      %v2097 = vadd.f32 0.0, %v2096
      %v2098 = vpop.f32.mrf.mxu0
      %v2099 = vpop.f32.mrf.mxu0
      %v2100 = vadd.f32 0.0, %v2099
      %v2101 = vpop.f32.mrf.mxu0
      %2102 = vmatprep.mubr.bf16.mxu0 0
      %2103 = vmatmul.mubr.bf16.gmra.mxu0 %v1979
      %v2104 = vpop.f32.mrf.mxu0
      %v2105 = vadd.f32 0.0, %v2104
      %v2106 = vpop.f32.mrf.mxu0
      %v2107 = vpop.f32.mrf.mxu0
      %v2108 = vadd.f32 0.0, %v2107
      %v2109 = vpop.f32.mrf.mxu0
      %2110 = vmatprep.mubr.bf16.mxu0 0
      %2111 = vmatmul.mubr.bf16.gmra.mxu0 %v1982
      %v2112 = vpop.f32.mrf.mxu0
      %v2113 = vadd.f32 0.0, %v2112
      %v2114 = vpop.f32.mrf.mxu0
      %v2115 = vpop.f32.mrf.mxu0
      %v2116 = vadd.f32 0.0, %v2115
      %v2117 = vpop.f32.mrf.mxu0
      %2118 = vmatprep.mubr.bf16.mxu0 0
      %2119 = vmatmul.mubr.bf16.gmra.mxu0 %v1985
      %v2120 = vpop.f32.mrf.mxu0
      %v2121 = vadd.f32 0.0, %v2120
      %v2122 = vpop.f32.mrf.mxu0
      %v2123 = vpop.f32.mrf.mxu0
      %v2124 = vadd.f32 0.0, %v2123
      %v2125 = vpop.f32.mrf.mxu0
      %2126 = vmatprep.mubr.bf16.mxu0 0
      %2127 = vmatmul.mubr.bf16.gmra.mxu0 %v1988
      %v2128 = vpop.f32.mrf.mxu0
      %v2129 = vadd.f32 0.0, %v2128
      %v2130 = vpop.f32.mrf.mxu0
      %v2131 = vpop.f32.mrf.mxu0
      %v2132 = vadd.f32 0.0, %v2131
      %v2133 = vpop.f32.mrf.mxu0
      %2134 = vmatprep.mubr.bf16.mxu0 0
      %2135 = vmatmul.mubr.bf16.gmra.mxu0 %v1991
      %v2136 = vpop.f32.mrf.mxu0
      %v2137 = vadd.f32 0.0, %v2136
      %v2138 = vpop.f32.mrf.mxu0
      %v2139 = vpop.f32.mrf.mxu0
      %v2140 = vadd.f32 0.0, %v2139
      %v2141 = vpop.f32.mrf.mxu0
      %2142 = vmatprep.mubr.bf16.mxu0 0
      %2143 = vmatmul.mubr.bf16.gmra.mxu0 %v1994
      %v2144 = vpop.f32.mrf.mxu0
      %v2145 = vadd.f32 0.0, %v2144
      %v2146 = vpop.f32.mrf.mxu0
      %v2147 = vpop.f32.mrf.mxu0
      %v2148 = vadd.f32 0.0, %v2147
      %v2149 = vpop.f32.mrf.mxu0
      %2150 = vmatprep.mubr.bf16.mxu0 0
      %2151 = vmatmul.mubr.bf16.gmra.mxu0 %v1997
      %v2152 = vpop.f32.mrf.mxu0
      %v2153 = vadd.f32 0.0, %v2152
      %v2154 = vpop.f32.mrf.mxu0
      %v2155 = vpop.f32.mrf.mxu0
      %v2156 = vadd.f32 0.0, %v2155
      %v2157 = vpop.f32.mrf.mxu0
      %2158 = vmatprep.mubr.bf16.mxu0 0
      %2159 = vmatmul.mubr.bf16.gmra.mxu0 %v2000
      %v2160 = vpop.f32.mrf.mxu0
      %v2161 = vadd.f32 0.0, %v2160
      %v2162 = vpop.f32.mrf.mxu0
      %v2163 = vpop.f32.mrf.mxu0
      %v2164 = vadd.f32 0.0, %v2163
      %v2165 = vpop.f32.mrf.mxu0
      %2166 = vmatprep.mubr.bf16.mxu0 0
      %2167 = vmatmul.mubr.bf16.gmra.mxu0 %v2003
      %v2168 = vpop.f32.mrf.mxu0
      %v2169 = vadd.f32 0.0, %v2168
      %v2170 = vpop.f32.mrf.mxu0
      %v2171 = vpop.f32.mrf.mxu0
      %v2172 = vadd.f32 0.0, %v2171
      %v2173 = vpop.f32.mrf.mxu0
      %2174 = vmatprep.mubr.bf16.mxu0 0
      %2175 = vmatmul.mubr.bf16.gmra.mxu0 %v2006
      %v2176 = vpop.f32.mrf.mxu0
      %v2177 = vadd.f32 0.0, %v2176
      %v2178 = vpop.f32.mrf.mxu0
      %v2179 = vpop.f32.mrf.mxu0
      %v2180 = vadd.f32 0.0, %v2179
      %v2181 = vpop.f32.mrf.mxu0
      %2182 = vmatprep.mubr.bf16.mxu0 0
      %2183 = vmatmul.mubr.bf16.gmra.mxu0 %v2009
      %v2184 = vpop.f32.mrf.mxu0
      %v2185 = vadd.f32 0.0, %v2184
      %v2186 = vpop.f32.mrf.mxu0
      %v2187 = vpop.f32.mrf.mxu0
      %v2188 = vadd.f32 0.0, %v2187
      %v2189 = vpop.f32.mrf.mxu0
      %2190 = vdwg.mxu0
      %v2191 = vadd.f32 %v1883, %v2049
      %v2192 = vadd.f32 %v1884, %v2052
      %v2193 = vadd.f32 %v1885, %v2057
      %v2194 = vadd.f32 %v1886, %v2060
      %v2195 = vadd.f32 %v1887, %v2065
      %v2196 = vadd.f32 %v1888, %v2068
      %v2197 = vadd.f32 %v1889, %v2073
      %v2198 = vadd.f32 %v1890, %v2076
      %v2199 = vadd.f32 %v1891, %v2081
      %v2200 = vadd.f32 %v1892, %v2084
      %v2201 = vadd.f32 %v1893, %v2089
      %v2202 = vadd.f32 %v1894, %v2092
      %v2203 = vadd.f32 %v1895, %v2097
      %v2204 = vadd.f32 %v1896, %v2100
      %v2205 = vadd.f32 %v1897, %v2105
      %v2206 = vadd.f32 %v1898, %v2108
      %v2207 = vadd.f32 %v1899, %v2113
      %v2208 = vadd.f32 %v1900, %v2116
      %v2209 = vadd.f32 %v1901, %v2121
      %v2210 = vadd.f32 %v1902, %v2124
      %v2211 = vadd.f32 %v1903, %v2129
      %v2212 = vadd.f32 %v1904, %v2132
      %v2213 = vadd.f32 %v1905, %v2137
      %v2214 = vadd.f32 %v1906, %v2140
      %v2215 = vadd.f32 %v1907, %v2145
      %v2216 = vadd.f32 %v1908, %v2148
      %v2217 = vadd.f32 %v1909, %v2153
      %v2218 = vadd.f32 %v1910, %v2156
      %v2219 = vadd.f32 %v1911, %v2161
      %v2220 = vadd.f32 %v1912, %v2164
      %v2221 = vadd.f32 %v1913, %v2169
      %v2222 = vadd.f32 %v1914, %v2172
      %v2223 = vadd.f32 %v1915, %v2177
      %v2224 = vadd.f32 %v1916, %v2180
      %v2225 = vadd.f32 %v1917, %v2185
      %v2226 = vadd.f32 %v1918, %v2188
      %v2229 = vunpack.c.l.b16 %v282
      %v2230 = vunpack.c.l.b16 %v283
      %v2231 = vpack.c.b16 %v2229, %v1334
      %v2232 = vpack.c.b16 %v2230, %v2230
      %v2233 = vrot.slane %v2231, 2
      %v2234 = vsel %vm1919, %v1953, %v2233
      %v2235 = vrot.slane %v2232, 2
      %v2236 = vsel %vm1919, %v2233, %v2235
      %v2238 = vsel %vm571, %v2234, 0
      %v2241 = vsel %vm571, %v2236, 0
      %v2244 = vsel %vm626, %v290, 0
      %2246 = vmatprep.subr.bf16.mxu0 0
      %2247 = vmatpush1.bf16.msra.mxu0 0
      %2248 = vmatprep.subr.bf16.mxu0 0
      %2249 = vmatpush1.bf16.msra.mxu0 0
      %2250 = vmatprep.subr.bf16.mxu0 0
      %2251 = vmatpush1.bf16.msra.mxu0 0
      %2252 = vmatprep.subr.bf16.mxu0 0
      %2253 = vmatpush1.bf16.msra.mxu0 0
      %2254 = vmatprep.subr.bf16.mxu0 0
      %2255 = vmatpush1.bf16.msra.mxu0 0
      %2256 = vmatprep.subr.bf16.mxu0 0
      %2257 = vmatpush1.bf16.msra.mxu0 0
      %2258 = vmatprep.subr.bf16.mxu0 0
      %2259 = vmatpush1.bf16.msra.mxu0 0
      %2260 = vmatprep.subr.bf16.mxu0 0
      %2261 = vmatpush1.bf16.msra.mxu0 %v2244
      %2262 = vmatprep.subr.bf16.mxu0 0
      %2263 = vmatpush2.bf16.msra.mxu0 0
      %2264 = vmatprep.subr.bf16.mxu0 0
      %2265 = vmatpush2.bf16.msra.mxu0 0
      %2266 = vmatprep.subr.bf16.mxu0 0
      %2267 = vmatpush2.bf16.msra.mxu0 0
      %2268 = vmatprep.subr.bf16.mxu0 0
      %2269 = vmatpush2.bf16.msra.mxu0 0
      %2270 = vmatprep.subr.bf16.mxu0 0
      %2271 = vmatpush2.bf16.msra.mxu0 0
      %2272 = vmatprep.subr.bf16.mxu0 0
      %2273 = vmatpush2.bf16.msra.mxu0 0
      %2274 = vmatprep.subr.bf16.mxu0 0
      %2275 = vmatpush2.bf16.msra.mxu0 0
      %2276 = vmatprep.subr.bf16.mxu0 0
      %2277 = vmatpush2.bf16.msra.mxu0 0
      %2278 = vmatprep.mubr.bf16.mxu0 0
      %2279 = vmatmul.mubr.bf16.gmra.mxu0 %v1961
      %v2280 = vpop.f32.mrf.mxu0
      %v2281 = vadd.f32 0.0, %v2280
      %v2282 = vpop.f32.mrf.mxu0
      %v2283 = vpop.f32.mrf.mxu0
      %v2284 = vadd.f32 0.0, %v2283
      %v2285 = vpop.f32.mrf.mxu0
      %2286 = vmatprep.mubr.bf16.mxu0 0
      %2287 = vmatmul.mubr.bf16.gmra.mxu0 %v1964
      %v2288 = vpop.f32.mrf.mxu0
      %v2289 = vadd.f32 0.0, %v2288
      %v2290 = vpop.f32.mrf.mxu0
      %v2291 = vpop.f32.mrf.mxu0
      %v2292 = vadd.f32 0.0, %v2291
      %v2293 = vpop.f32.mrf.mxu0
      %2294 = vmatprep.mubr.bf16.mxu0 0
      %2295 = vmatmul.mubr.bf16.gmra.mxu0 %v1967
      %v2296 = vpop.f32.mrf.mxu0
      %v2297 = vadd.f32 0.0, %v2296
      %v2298 = vpop.f32.mrf.mxu0
      %v2299 = vpop.f32.mrf.mxu0
      %v2300 = vadd.f32 0.0, %v2299
      %v2301 = vpop.f32.mrf.mxu0
      %2302 = vmatprep.mubr.bf16.mxu0 0
      %2303 = vmatmul.mubr.bf16.gmra.mxu0 %v1970
      %v2304 = vpop.f32.mrf.mxu0
      %v2305 = vadd.f32 0.0, %v2304
      %v2306 = vpop.f32.mrf.mxu0
      %v2307 = vpop.f32.mrf.mxu0
      %v2308 = vadd.f32 0.0, %v2307
      %v2309 = vpop.f32.mrf.mxu0
      %2310 = vmatprep.mubr.bf16.mxu0 0
      %2311 = vmatmul.mubr.bf16.gmra.mxu0 %v1973
      %v2312 = vpop.f32.mrf.mxu0
      %v2313 = vadd.f32 0.0, %v2312
      %v2314 = vpop.f32.mrf.mxu0
      %v2315 = vpop.f32.mrf.mxu0
      %v2316 = vadd.f32 0.0, %v2315
      %v2317 = vpop.f32.mrf.mxu0
      %2318 = vmatprep.mubr.bf16.mxu0 0
      %2319 = vmatmul.mubr.bf16.gmra.mxu0 %v1976
      %v2320 = vpop.f32.mrf.mxu0
      %v2321 = vadd.f32 0.0, %v2320
      %v2322 = vpop.f32.mrf.mxu0
      %v2323 = vpop.f32.mrf.mxu0
      %v2324 = vadd.f32 0.0, %v2323
      %v2325 = vpop.f32.mrf.mxu0
      %2326 = vmatprep.mubr.bf16.mxu0 0
      %2327 = vmatmul.mubr.bf16.gmra.mxu0 %v1979
      %v2328 = vpop.f32.mrf.mxu0
      %v2329 = vadd.f32 0.0, %v2328
      %v2330 = vpop.f32.mrf.mxu0
      %v2331 = vpop.f32.mrf.mxu0
      %v2332 = vadd.f32 0.0, %v2331
      %v2333 = vpop.f32.mrf.mxu0
      %2334 = vmatprep.mubr.bf16.mxu0 0
      %2335 = vmatmul.mubr.bf16.gmra.mxu0 %v1982
      %v2336 = vpop.f32.mrf.mxu0
      %v2337 = vadd.f32 0.0, %v2336
      %v2338 = vpop.f32.mrf.mxu0
      %v2339 = vpop.f32.mrf.mxu0
      %v2340 = vadd.f32 0.0, %v2339
      %v2341 = vpop.f32.mrf.mxu0
      %2342 = vmatprep.mubr.bf16.mxu0 0
      %2343 = vmatmul.mubr.bf16.gmra.mxu0 %v1985
      %v2344 = vpop.f32.mrf.mxu0
      %v2345 = vadd.f32 0.0, %v2344
      %v2346 = vpop.f32.mrf.mxu0
      %v2347 = vpop.f32.mrf.mxu0
      %v2348 = vadd.f32 0.0, %v2347
      %v2349 = vpop.f32.mrf.mxu0
      %2350 = vmatprep.mubr.bf16.mxu0 0
      %2351 = vmatmul.mubr.bf16.gmra.mxu0 %v1988
      %v2352 = vpop.f32.mrf.mxu0
      %v2353 = vadd.f32 0.0, %v2352
      %v2354 = vpop.f32.mrf.mxu0
      %v2355 = vpop.f32.mrf.mxu0
      %v2356 = vadd.f32 0.0, %v2355
      %v2357 = vpop.f32.mrf.mxu0
      %2358 = vmatprep.mubr.bf16.mxu0 0
      %2359 = vmatmul.mubr.bf16.gmra.mxu0 %v1991
      %v2360 = vpop.f32.mrf.mxu0
      %v2361 = vadd.f32 0.0, %v2360
      %v2362 = vpop.f32.mrf.mxu0
      %v2363 = vpop.f32.mrf.mxu0
      %v2364 = vadd.f32 0.0, %v2363
      %v2365 = vpop.f32.mrf.mxu0
      %2366 = vmatprep.mubr.bf16.mxu0 0
      %2367 = vmatmul.mubr.bf16.gmra.mxu0 %v1994
      %v2368 = vpop.f32.mrf.mxu0
      %v2369 = vadd.f32 0.0, %v2368
      %v2370 = vpop.f32.mrf.mxu0
      %v2371 = vpop.f32.mrf.mxu0
      %v2372 = vadd.f32 0.0, %v2371
      %v2373 = vpop.f32.mrf.mxu0
      %2374 = vmatprep.mubr.bf16.mxu0 0
      %2375 = vmatmul.mubr.bf16.gmra.mxu0 %v1997
      %v2376 = vpop.f32.mrf.mxu0
      %v2377 = vadd.f32 0.0, %v2376
      %v2378 = vpop.f32.mrf.mxu0
      %v2379 = vpop.f32.mrf.mxu0
      %v2380 = vadd.f32 0.0, %v2379
      %v2381 = vpop.f32.mrf.mxu0
      %2382 = vmatprep.mubr.bf16.mxu0 0
      %2383 = vmatmul.mubr.bf16.gmra.mxu0 %v2000
      %v2384 = vpop.f32.mrf.mxu0
      %v2385 = vadd.f32 0.0, %v2384
      %v2386 = vpop.f32.mrf.mxu0
      %v2387 = vpop.f32.mrf.mxu0
      %v2388 = vadd.f32 0.0, %v2387
      %v2389 = vpop.f32.mrf.mxu0
      %2390 = vmatprep.mubr.bf16.mxu0 0
      %2391 = vmatmul.mubr.bf16.gmra.mxu0 %v2003
      %v2392 = vpop.f32.mrf.mxu0
      %v2393 = vadd.f32 0.0, %v2392
      %v2394 = vpop.f32.mrf.mxu0
      %v2395 = vpop.f32.mrf.mxu0
      %v2396 = vadd.f32 0.0, %v2395
      %v2397 = vpop.f32.mrf.mxu0
      %2398 = vmatprep.mubr.bf16.mxu0 0
      %2399 = vmatmul.mubr.bf16.gmra.mxu0 %v2006
      %v2400 = vpop.f32.mrf.mxu0
      %v2401 = vadd.f32 0.0, %v2400
      %v2402 = vpop.f32.mrf.mxu0
      %v2403 = vpop.f32.mrf.mxu0
      %v2404 = vadd.f32 0.0, %v2403
      %v2405 = vpop.f32.mrf.mxu0
      %2406 = vmatprep.mubr.bf16.mxu0 0
      %2407 = vmatmul.mubr.bf16.gmra.mxu0 %v2238
      %v2408 = vpop.f32.mrf.mxu0
      %v2409 = vadd.f32 0.0, %v2408
      %v2410 = vpop.f32.mrf.mxu0
      %v2411 = vpop.f32.mrf.mxu0
      %v2412 = vadd.f32 0.0, %v2411
      %v2413 = vpop.f32.mrf.mxu0
      %2414 = vmatprep.mubr.bf16.mxu0 0
      %2415 = vmatmul.mubr.bf16.gmra.mxu0 %v2241
      %v2416 = vpop.f32.mrf.mxu0
      %v2417 = vadd.f32 0.0, %v2416
      %v2418 = vpop.f32.mrf.mxu0
      %v2419 = vpop.f32.mrf.mxu0
      %v2420 = vadd.f32 0.0, %v2419
      %v2421 = vpop.f32.mrf.mxu0
      %2422 = vdwg.mxu0
      %v2423 = vadd.f32 %v2191, %v2281
      %v2424 = vadd.f32 %v2192, %v2284
      %v2425 = vadd.f32 %v2193, %v2289
      %v2426 = vadd.f32 %v2194, %v2292
      %v2427 = vadd.f32 %v2195, %v2297
      %v2428 = vadd.f32 %v2196, %v2300
      %v2429 = vadd.f32 %v2197, %v2305
      %v2430 = vadd.f32 %v2198, %v2308
      %v2431 = vadd.f32 %v2199, %v2313
      %v2432 = vadd.f32 %v2200, %v2316
      %v2433 = vadd.f32 %v2201, %v2321
      %v2434 = vadd.f32 %v2202, %v2324
      %v2435 = vadd.f32 %v2203, %v2329
      %v2436 = vadd.f32 %v2204, %v2332
      %v2437 = vadd.f32 %v2205, %v2337
      %v2438 = vadd.f32 %v2206, %v2340
      %v2439 = vadd.f32 %v2207, %v2345
      %v2440 = vadd.f32 %v2208, %v2348
      %v2441 = vadd.f32 %v2209, %v2353
      %v2442 = vadd.f32 %v2210, %v2356
      %v2443 = vadd.f32 %v2211, %v2361
      %v2444 = vadd.f32 %v2212, %v2364
      %v2445 = vadd.f32 %v2213, %v2369
      %v2446 = vadd.f32 %v2214, %v2372
      %v2447 = vadd.f32 %v2215, %v2377
      %v2448 = vadd.f32 %v2216, %v2380
      %v2449 = vadd.f32 %v2217, %v2385
      %v2450 = vadd.f32 %v2218, %v2388
      %v2451 = vadd.f32 %v2219, %v2393
      %v2452 = vadd.f32 %v2220, %v2396
      %v2453 = vadd.f32 %v2221, %v2401
      %v2454 = vadd.f32 %v2222, %v2404
      %v2455 = vadd.f32 %v2223, %v2409
      %v2456 = vadd.f32 %v2224, %v2412
      %v2457 = vadd.f32 %v2225, %v2417
      %v2458 = vadd.f32 %v2226, %v2420
      %vm2459 = vsmask.f32 5376
      %v2460 = vrot.slane %v443, 2
      %v2461 = vrot.slane %v439, 3
      %v2462 = vor.u32 %v2460, %v2461
      %v2463 = vrot.slane %v451, 2
      %v2464 = vrot.slane %v447, 3
      %v2465 = vor.u32 %v2463, %v2464
      %v2466 = vsel %vm2459, %v2462, %v2465
      %v2467 = vrot.slane %v459, 2
      %v2468 = vrot.slane %v455, 3
      %v2469 = vor.u32 %v2467, %v2468
      %v2470 = vsel %vm2459, %v2465, %v2469
      %v2471 = vrot.slane %v467, 2
      %v2472 = vrot.slane %v463, 3
      %v2473 = vor.u32 %v2471, %v2472
      %v2474 = vsel %vm2459, %v2469, %v2473
      %v2475 = vrot.slane %v475, 2
      %v2476 = vrot.slane %v471, 3
      %v2477 = vor.u32 %v2475, %v2476
      %v2478 = vsel %vm2459, %v2473, %v2477
      %v2479 = vrot.slane %v483, 2
      %v2480 = vrot.slane %v479, 3
      %v2481 = vor.u32 %v2479, %v2480
      %v2482 = vsel %vm2459, %v2477, %v2481
      %v2483 = vrot.slane %v491, 2
      %v2484 = vrot.slane %v487, 3
      %v2485 = vor.u32 %v2483, %v2484
      %v2486 = vsel %vm2459, %v2481, %v2485
      %v2487 = vrot.slane %v499, 2
      %v2488 = vrot.slane %v495, 3
      %v2489 = vor.u32 %v2487, %v2488
      %v2490 = vsel %vm2459, %v2485, %v2489
      %v2491 = vrot.slane %v507, 2
      %v2492 = vrot.slane %v503, 3
      %v2493 = vor.u32 %v2491, %v2492
      %v2494 = vsel %vm2459, %v2489, %v2493
      %v2495 = vrot.slane %v515, 2
      %v2496 = vrot.slane %v511, 3
      %v2497 = vor.u32 %v2495, %v2496
      %v2498 = vsel %vm2459, %v2493, %v2497
      %v2499 = vrot.slane %v523, 2
      %v2500 = vrot.slane %v519, 3
      %v2501 = vor.u32 %v2499, %v2500
      %v2502 = vsel %vm2459, %v2497, %v2501
      %v2503 = vrot.slane %v531, 2
      %v2504 = vrot.slane %v527, 3
      %v2505 = vor.u32 %v2503, %v2504
      %v2506 = vsel %vm2459, %v2501, %v2505
      %v2507 = vrot.slane %v539, 2
      %v2508 = vrot.slane %v535, 3
      %v2509 = vor.u32 %v2507, %v2508
      %v2510 = vsel %vm2459, %v2505, %v2509
      %v2511 = vrot.slane %v547, 2
      %v2512 = vrot.slane %v543, 3
      %v2513 = vor.u32 %v2511, %v2512
      %v2514 = vsel %vm2459, %v2509, %v2513
      %v2515 = vrot.slane %v555, 2
      %v2516 = vrot.slane %v551, 3
      %v2517 = vor.u32 %v2515, %v2516
      %v2518 = vsel %vm2459, %v2513, %v2517
      %v2519 = vrot.slane %v563, 2
      %v2520 = vrot.slane %v559, 3
      %v2521 = vor.u32 %v2519, %v2520
      %v2522 = vsel %vm2459, %v2517, %v2521
      %v2523 = vrot.slane %v1632, 2
      %v2524 = vrot.slane %v1635, 3
      %v2525 = vor.u32 %v2523, %v2524
      %v2526 = vsel %vm2459, %v2521, %v2525
      %v2528 = vshrl.u32 %v2231, 16
      %v2530 = vrot.slane %v2528, 2
      %v2531 = vshll.u32 %v2231, 16
      %v2533 = vrot.slane %v2531, 3
      %v2534 = vor.u32 %v2530, %v2533
      %v2535 = vsel %vm2459, %v2525, %v2534
      %v2537 = vshrl.u32 %v2232, 16
      %v2539 = vrot.slane %v2537, 2
      %v2540 = vshll.u32 %v2232, 16
      %v2542 = vrot.slane %v2540, 3
      %v2543 = vor.u32 %v2539, %v2542
      %v2544 = vsel %vm2459, %v2534, %v2543
      %v2546 = vsel %vm571, %v2466, 0
      %v2549 = vsel %vm571, %v2470, 0
      %v2552 = vsel %vm571, %v2474, 0
      %v2555 = vsel %vm571, %v2478, 0
      %v2558 = vsel %vm571, %v2482, 0
      %v2561 = vsel %vm571, %v2486, 0
      %v2564 = vsel %vm571, %v2490, 0
      %v2567 = vsel %vm571, %v2494, 0
      %v2570 = vsel %vm571, %v2498, 0
      %v2573 = vsel %vm571, %v2502, 0
      %v2576 = vsel %vm571, %v2506, 0
      %v2579 = vsel %vm571, %v2510, 0
      %v2582 = vsel %vm571, %v2514, 0
      %v2585 = vsel %vm571, %v2518, 0
      %v2588 = vsel %vm571, %v2522, 0
      %v2591 = vsel %vm571, %v2526, 0
      %v2594 = vsel %vm571, %v2535, 0
      %v2597 = vsel %vm571, %v2544, 0
      %v2600 = vsel %vm626, %v291, 0
      %2602 = vmatprep.subr.bf16.mxu0 0
      %2603 = vmatpush1.bf16.msra.mxu0 0
      %2604 = vmatprep.subr.bf16.mxu0 0
      %2605 = vmatpush1.bf16.msra.mxu0 0
      %2606 = vmatprep.subr.bf16.mxu0 0
      %2607 = vmatpush1.bf16.msra.mxu0 0
      %2608 = vmatprep.subr.bf16.mxu0 0
      %2609 = vmatpush1.bf16.msra.mxu0 0
      %2610 = vmatprep.subr.bf16.mxu0 0
      %2611 = vmatpush1.bf16.msra.mxu0 0
      %2612 = vmatprep.subr.bf16.mxu0 0
      %2613 = vmatpush1.bf16.msra.mxu0 0
      %2614 = vmatprep.subr.bf16.mxu0 0
      %2615 = vmatpush1.bf16.msra.mxu0 0
      %2616 = vmatprep.subr.bf16.mxu0 0
      %2617 = vmatpush1.bf16.msra.mxu0 %v2600
      %2618 = vmatprep.subr.bf16.mxu0 0
      %2619 = vmatpush2.bf16.msra.mxu0 0
      %2620 = vmatprep.subr.bf16.mxu0 0
      %2621 = vmatpush2.bf16.msra.mxu0 0
      %2622 = vmatprep.subr.bf16.mxu0 0
      %2623 = vmatpush2.bf16.msra.mxu0 0
      %2624 = vmatprep.subr.bf16.mxu0 0
      %2625 = vmatpush2.bf16.msra.mxu0 0
      %2626 = vmatprep.subr.bf16.mxu0 0
      %2627 = vmatpush2.bf16.msra.mxu0 0
      %2628 = vmatprep.subr.bf16.mxu0 0
      %2629 = vmatpush2.bf16.msra.mxu0 0
      %2630 = vmatprep.subr.bf16.mxu0 0
      %2631 = vmatpush2.bf16.msra.mxu0 0
      %2632 = vmatprep.subr.bf16.mxu0 0
      %2633 = vmatpush2.bf16.msra.mxu0 0
      %2634 = vmatprep.mubr.bf16.mxu0 0
      %2635 = vmatmul.mubr.bf16.gmra.mxu0 %v2546
      %v2636 = vpop.f32.mrf.mxu0
      %v2637 = vadd.f32 0.0, %v2636
      %v2638 = vpop.f32.mrf.mxu0
      %v2639 = vpop.f32.mrf.mxu0
      %v2640 = vadd.f32 0.0, %v2639
      %v2641 = vpop.f32.mrf.mxu0
      %2642 = vmatprep.mubr.bf16.mxu0 0
      %2643 = vmatmul.mubr.bf16.gmra.mxu0 %v2549
      %v2644 = vpop.f32.mrf.mxu0
      %v2645 = vadd.f32 0.0, %v2644
      %v2646 = vpop.f32.mrf.mxu0
      %v2647 = vpop.f32.mrf.mxu0
      %v2648 = vadd.f32 0.0, %v2647
      %v2649 = vpop.f32.mrf.mxu0
      %2650 = vmatprep.mubr.bf16.mxu0 0
      %2651 = vmatmul.mubr.bf16.gmra.mxu0 %v2552
      %v2652 = vpop.f32.mrf.mxu0
      %v2653 = vadd.f32 0.0, %v2652
      %v2654 = vpop.f32.mrf.mxu0
      %v2655 = vpop.f32.mrf.mxu0
      %v2656 = vadd.f32 0.0, %v2655
      %v2657 = vpop.f32.mrf.mxu0
      %2658 = vmatprep.mubr.bf16.mxu0 0
      %2659 = vmatmul.mubr.bf16.gmra.mxu0 %v2555
      %v2660 = vpop.f32.mrf.mxu0
      %v2661 = vadd.f32 0.0, %v2660
      %v2662 = vpop.f32.mrf.mxu0
      %v2663 = vpop.f32.mrf.mxu0
      %v2664 = vadd.f32 0.0, %v2663
      %v2665 = vpop.f32.mrf.mxu0
      %2666 = vmatprep.mubr.bf16.mxu0 0
      %2667 = vmatmul.mubr.bf16.gmra.mxu0 %v2558
      %v2668 = vpop.f32.mrf.mxu0
      %v2669 = vadd.f32 0.0, %v2668
      %v2670 = vpop.f32.mrf.mxu0
      %v2671 = vpop.f32.mrf.mxu0
      %v2672 = vadd.f32 0.0, %v2671
      %v2673 = vpop.f32.mrf.mxu0
      %2674 = vmatprep.mubr.bf16.mxu0 0
      %2675 = vmatmul.mubr.bf16.gmra.mxu0 %v2561
      %v2676 = vpop.f32.mrf.mxu0
      %v2677 = vadd.f32 0.0, %v2676
      %v2678 = vpop.f32.mrf.mxu0
      %v2679 = vpop.f32.mrf.mxu0
      %v2680 = vadd.f32 0.0, %v2679
      %v2681 = vpop.f32.mrf.mxu0
      %2682 = vmatprep.mubr.bf16.mxu0 0
      %2683 = vmatmul.mubr.bf16.gmra.mxu0 %v2564
      %v2684 = vpop.f32.mrf.mxu0
      %v2685 = vadd.f32 0.0, %v2684
      %v2686 = vpop.f32.mrf.mxu0
      %v2687 = vpop.f32.mrf.mxu0
      %v2688 = vadd.f32 0.0, %v2687
      %v2689 = vpop.f32.mrf.mxu0
      %2690 = vmatprep.mubr.bf16.mxu0 0
      %2691 = vmatmul.mubr.bf16.gmra.mxu0 %v2567
      %v2692 = vpop.f32.mrf.mxu0
      %v2693 = vadd.f32 0.0, %v2692
      %v2694 = vpop.f32.mrf.mxu0
      %v2695 = vpop.f32.mrf.mxu0
      %v2696 = vadd.f32 0.0, %v2695
      %v2697 = vpop.f32.mrf.mxu0
      %2698 = vmatprep.mubr.bf16.mxu0 0
      %2699 = vmatmul.mubr.bf16.gmra.mxu0 %v2570
      %v2700 = vpop.f32.mrf.mxu0
      %v2701 = vadd.f32 0.0, %v2700
      %v2702 = vpop.f32.mrf.mxu0
      %v2703 = vpop.f32.mrf.mxu0
      %v2704 = vadd.f32 0.0, %v2703
      %v2705 = vpop.f32.mrf.mxu0
      %2706 = vmatprep.mubr.bf16.mxu0 0
      %2707 = vmatmul.mubr.bf16.gmra.mxu0 %v2573
      %v2708 = vpop.f32.mrf.mxu0
      %v2709 = vadd.f32 0.0, %v2708
      %v2710 = vpop.f32.mrf.mxu0
      %v2711 = vpop.f32.mrf.mxu0
      %v2712 = vadd.f32 0.0, %v2711
      %v2713 = vpop.f32.mrf.mxu0
      %2714 = vmatprep.mubr.bf16.mxu0 0
      %2715 = vmatmul.mubr.bf16.gmra.mxu0 %v2576
      %v2716 = vpop.f32.mrf.mxu0
      %v2717 = vadd.f32 0.0, %v2716
      %v2718 = vpop.f32.mrf.mxu0
      %v2719 = vpop.f32.mrf.mxu0
      %v2720 = vadd.f32 0.0, %v2719
      %v2721 = vpop.f32.mrf.mxu0
      %2722 = vmatprep.mubr.bf16.mxu0 0
      %2723 = vmatmul.mubr.bf16.gmra.mxu0 %v2579
      %v2724 = vpop.f32.mrf.mxu0
      %v2725 = vadd.f32 0.0, %v2724
      %v2726 = vpop.f32.mrf.mxu0
      %v2727 = vpop.f32.mrf.mxu0
      %v2728 = vadd.f32 0.0, %v2727
      %v2729 = vpop.f32.mrf.mxu0
      %2730 = vmatprep.mubr.bf16.mxu0 0
      %2731 = vmatmul.mubr.bf16.gmra.mxu0 %v2582
      %v2732 = vpop.f32.mrf.mxu0
      %v2733 = vadd.f32 0.0, %v2732
      %v2734 = vpop.f32.mrf.mxu0
      %v2735 = vpop.f32.mrf.mxu0
      %v2736 = vadd.f32 0.0, %v2735
      %v2737 = vpop.f32.mrf.mxu0
      %2738 = vmatprep.mubr.bf16.mxu0 0
      %2739 = vmatmul.mubr.bf16.gmra.mxu0 %v2585
      %v2740 = vpop.f32.mrf.mxu0
      %v2741 = vadd.f32 0.0, %v2740
      %v2742 = vpop.f32.mrf.mxu0
      %v2743 = vpop.f32.mrf.mxu0
      %v2744 = vadd.f32 0.0, %v2743
      %v2745 = vpop.f32.mrf.mxu0
      %2746 = vmatprep.mubr.bf16.mxu0 0
      %2747 = vmatmul.mubr.bf16.gmra.mxu0 %v2588
      %v2748 = vpop.f32.mrf.mxu0
      %v2749 = vadd.f32 0.0, %v2748
      %v2750 = vpop.f32.mrf.mxu0
      %v2751 = vpop.f32.mrf.mxu0
      %v2752 = vadd.f32 0.0, %v2751
      %v2753 = vpop.f32.mrf.mxu0
      %2754 = vmatprep.mubr.bf16.mxu0 0
      %2755 = vmatmul.mubr.bf16.gmra.mxu0 %v2591
      %v2756 = vpop.f32.mrf.mxu0
      %v2757 = vadd.f32 0.0, %v2756
      %v2758 = vpop.f32.mrf.mxu0
      %v2759 = vpop.f32.mrf.mxu0
      %v2760 = vadd.f32 0.0, %v2759
      %v2761 = vpop.f32.mrf.mxu0
      %2762 = vmatprep.mubr.bf16.mxu0 0
      %2763 = vmatmul.mubr.bf16.gmra.mxu0 %v2594
      %v2764 = vpop.f32.mrf.mxu0
      %v2765 = vadd.f32 0.0, %v2764
      %v2766 = vpop.f32.mrf.mxu0
      %v2767 = vpop.f32.mrf.mxu0
      %v2768 = vadd.f32 0.0, %v2767
      %v2769 = vpop.f32.mrf.mxu0
      %2770 = vmatprep.mubr.bf16.mxu0 0
      %2771 = vmatmul.mubr.bf16.gmra.mxu0 %v2597
      %v2772 = vpop.f32.mrf.mxu0
      %v2773 = vadd.f32 0.0, %v2772
      %v2774 = vpop.f32.mrf.mxu0
      %v2775 = vpop.f32.mrf.mxu0
      %v2776 = vadd.f32 0.0, %v2775
      %v2777 = vpop.f32.mrf.mxu0
      %2778 = vdwg.mxu0
      %v2779 = vadd.f32 %v2423, %v2637
      %v2780 = vadd.f32 %v2424, %v2640
      %v2781 = vadd.f32 %v2425, %v2645
      %v2782 = vadd.f32 %v2426, %v2648
      %v2783 = vadd.f32 %v2427, %v2653
      %v2784 = vadd.f32 %v2428, %v2656
      %v2785 = vadd.f32 %v2429, %v2661
      %v2786 = vadd.f32 %v2430, %v2664
      %v2787 = vadd.f32 %v2431, %v2669
      %v2788 = vadd.f32 %v2432, %v2672
      %v2789 = vadd.f32 %v2433, %v2677
      %v2790 = vadd.f32 %v2434, %v2680
      %v2791 = vadd.f32 %v2435, %v2685
      %v2792 = vadd.f32 %v2436, %v2688
      %v2793 = vadd.f32 %v2437, %v2693
      %v2794 = vadd.f32 %v2438, %v2696
      %v2795 = vadd.f32 %v2439, %v2701
      %v2796 = vadd.f32 %v2440, %v2704
      %v2797 = vadd.f32 %v2441, %v2709
      %v2798 = vadd.f32 %v2442, %v2712
      %v2799 = vadd.f32 %v2443, %v2717
      %v2800 = vadd.f32 %v2444, %v2720
      %v2801 = vadd.f32 %v2445, %v2725
      %v2802 = vadd.f32 %v2446, %v2728
      %v2803 = vadd.f32 %v2447, %v2733
      %v2804 = vadd.f32 %v2448, %v2736
      %v2805 = vadd.f32 %v2449, %v2741
      %v2806 = vadd.f32 %v2450, %v2744
      %v2807 = vadd.f32 %v2451, %v2749
      %v2808 = vadd.f32 %v2452, %v2752
      %v2809 = vadd.f32 %v2453, %v2757
      %v2810 = vadd.f32 %v2454, %v2760
      %v2811 = vadd.f32 %v2455, %v2765
      %v2812 = vadd.f32 %v2456, %v2768
      %v2813 = vadd.f32 %v2457, %v2773
      %v2814 = vadd.f32 %v2458, %v2776
      %vm2815 = vcmask 1044480
      %v2816 = vrot.slane %v405, 3
      %v2817 = vrot.slane %v406, 3
      %v2818 = vsel %vm2815, %v2816, %v2817
      %v2819 = vrot.slane %v407, 3
      %v2820 = vsel %vm2815, %v2817, %v2819
      %v2821 = vrot.slane %v408, 3
      %v2822 = vsel %vm2815, %v2819, %v2821
      %v2823 = vrot.slane %v409, 3
      %v2824 = vsel %vm2815, %v2821, %v2823
      %v2825 = vrot.slane %v410, 3
      %v2826 = vsel %vm2815, %v2823, %v2825
      %v2827 = vrot.slane %v411, 3
      %v2828 = vsel %vm2815, %v2825, %v2827
      %v2829 = vrot.slane %v412, 3
      %v2830 = vsel %vm2815, %v2827, %v2829
      %v2831 = vrot.slane %v413, 3
      %v2832 = vsel %vm2815, %v2829, %v2831
      %v2833 = vrot.slane %v414, 3
      %v2834 = vsel %vm2815, %v2831, %v2833
      %v2835 = vrot.slane %v415, 3
      %v2836 = vsel %vm2815, %v2833, %v2835
      %v2837 = vrot.slane %v416, 3
      %v2838 = vsel %vm2815, %v2835, %v2837
      %v2839 = vrot.slane %v417, 3
      %v2840 = vsel %vm2815, %v2837, %v2839
      %v2841 = vrot.slane %v418, 3
      %v2842 = vsel %vm2815, %v2839, %v2841
      %v2843 = vrot.slane %v419, 3
      %v2844 = vsel %vm2815, %v2841, %v2843
      %v2845 = vrot.slane %v420, 3
      %v2846 = vsel %vm2815, %v2843, %v2845
      %v2847 = vrot.slane %v1335, 3
      %v2848 = vsel %vm2815, %v2845, %v2847
      %v2849 = vrot.slane %v2231, 3
      %v2850 = vsel %vm2815, %v2847, %v2849
      %v2851 = vrot.slane %v2232, 3
      %v2852 = vsel %vm2815, %v2849, %v2851
      %v2854 = vsel %vm571, %v2818, 0
      %v2857 = vsel %vm571, %v2820, 0
      %v2860 = vsel %vm571, %v2822, 0
      %v2863 = vsel %vm571, %v2824, 0
      %v2866 = vsel %vm571, %v2826, 0
      %v2869 = vsel %vm571, %v2828, 0
      %v2872 = vsel %vm571, %v2830, 0
      %v2875 = vsel %vm571, %v2832, 0
      %v2878 = vsel %vm571, %v2834, 0
      %v2881 = vsel %vm571, %v2836, 0
      %v2884 = vsel %vm571, %v2838, 0
      %v2887 = vsel %vm571, %v2840, 0
      %v2890 = vsel %vm571, %v2842, 0
      %v2893 = vsel %vm571, %v2844, 0
      %v2896 = vsel %vm571, %v2846, 0
      %v2899 = vsel %vm571, %v2848, 0
      %v2902 = vsel %vm571, %v2850, 0
      %v2905 = vsel %vm571, %v2852, 0
      %v2908 = vsel %vm626, %v292, 0
      %2910 = vmatprep.subr.bf16.mxu0 0
      %2911 = vmatpush1.bf16.msra.mxu0 0
      %2912 = vmatprep.subr.bf16.mxu0 0
      %2913 = vmatpush1.bf16.msra.mxu0 0
      %2914 = vmatprep.subr.bf16.mxu0 0
      %2915 = vmatpush1.bf16.msra.mxu0 0
      %2916 = vmatprep.subr.bf16.mxu0 0
      %2917 = vmatpush1.bf16.msra.mxu0 0
      %2918 = vmatprep.subr.bf16.mxu0 0
      %2919 = vmatpush1.bf16.msra.mxu0 0
      %2920 = vmatprep.subr.bf16.mxu0 0
      %2921 = vmatpush1.bf16.msra.mxu0 0
      %2922 = vmatprep.subr.bf16.mxu0 0
      %2923 = vmatpush1.bf16.msra.mxu0 0
      %2924 = vmatprep.subr.bf16.mxu0 0
      %2925 = vmatpush1.bf16.msra.mxu0 %v2908
      %2926 = vmatprep.subr.bf16.mxu0 0
      %2927 = vmatpush2.bf16.msra.mxu0 0
      %2928 = vmatprep.subr.bf16.mxu0 0
      %2929 = vmatpush2.bf16.msra.mxu0 0
      %2930 = vmatprep.subr.bf16.mxu0 0
      %2931 = vmatpush2.bf16.msra.mxu0 0
      %2932 = vmatprep.subr.bf16.mxu0 0
      %2933 = vmatpush2.bf16.msra.mxu0 0
      %2934 = vmatprep.subr.bf16.mxu0 0
      %2935 = vmatpush2.bf16.msra.mxu0 0
      %2936 = vmatprep.subr.bf16.mxu0 0
      %2937 = vmatpush2.bf16.msra.mxu0 0
      %2938 = vmatprep.subr.bf16.mxu0 0
      %2939 = vmatpush2.bf16.msra.mxu0 0
      %2940 = vmatprep.subr.bf16.mxu0 0
      %2941 = vmatpush2.bf16.msra.mxu0 0
      %2942 = vmatprep.mubr.bf16.mxu0 0
      %2943 = vmatmul.mubr.bf16.gmra.mxu0 %v2854
      %v2944 = vpop.f32.mrf.mxu0
      %v2945 = vadd.f32 0.0, %v2944
      %v2946 = vpop.f32.mrf.mxu0
      %v2947 = vpop.f32.mrf.mxu0
      %v2948 = vadd.f32 0.0, %v2947
      %v2949 = vpop.f32.mrf.mxu0
      %2950 = vmatprep.mubr.bf16.mxu0 0
      %2951 = vmatmul.mubr.bf16.gmra.mxu0 %v2857
      %v2952 = vpop.f32.mrf.mxu0
      %v2953 = vadd.f32 0.0, %v2952
      %v2954 = vpop.f32.mrf.mxu0
      %v2955 = vpop.f32.mrf.mxu0
      %v2956 = vadd.f32 0.0, %v2955
      %v2957 = vpop.f32.mrf.mxu0
      %2958 = vmatprep.mubr.bf16.mxu0 0
      %2959 = vmatmul.mubr.bf16.gmra.mxu0 %v2860
      %v2960 = vpop.f32.mrf.mxu0
      %v2961 = vadd.f32 0.0, %v2960
      %v2962 = vpop.f32.mrf.mxu0
      %v2963 = vpop.f32.mrf.mxu0
      %v2964 = vadd.f32 0.0, %v2963
      %v2965 = vpop.f32.mrf.mxu0
      %2966 = vmatprep.mubr.bf16.mxu0 0
      %2967 = vmatmul.mubr.bf16.gmra.mxu0 %v2863
      %v2968 = vpop.f32.mrf.mxu0
      %v2969 = vadd.f32 0.0, %v2968
      %v2970 = vpop.f32.mrf.mxu0
      %v2971 = vpop.f32.mrf.mxu0
      %v2972 = vadd.f32 0.0, %v2971
      %v2973 = vpop.f32.mrf.mxu0
      %2974 = vmatprep.mubr.bf16.mxu0 0
      %2975 = vmatmul.mubr.bf16.gmra.mxu0 %v2866
      %v2976 = vpop.f32.mrf.mxu0
      %v2977 = vadd.f32 0.0, %v2976
      %v2978 = vpop.f32.mrf.mxu0
      %v2979 = vpop.f32.mrf.mxu0
      %v2980 = vadd.f32 0.0, %v2979
      %v2981 = vpop.f32.mrf.mxu0
      %2982 = vmatprep.mubr.bf16.mxu0 0
      %2983 = vmatmul.mubr.bf16.gmra.mxu0 %v2869
      %v2984 = vpop.f32.mrf.mxu0
      %v2985 = vadd.f32 0.0, %v2984
      %v2986 = vpop.f32.mrf.mxu0
      %v2987 = vpop.f32.mrf.mxu0
      %v2988 = vadd.f32 0.0, %v2987
      %v2989 = vpop.f32.mrf.mxu0
      %2990 = vmatprep.mubr.bf16.mxu0 0
      %2991 = vmatmul.mubr.bf16.gmra.mxu0 %v2872
      %v2992 = vpop.f32.mrf.mxu0
      %v2993 = vadd.f32 0.0, %v2992
      %v2994 = vpop.f32.mrf.mxu0
      %v2995 = vpop.f32.mrf.mxu0
      %v2996 = vadd.f32 0.0, %v2995
      %v2997 = vpop.f32.mrf.mxu0
      %2998 = vmatprep.mubr.bf16.mxu0 0
      %2999 = vmatmul.mubr.bf16.gmra.mxu0 %v2875
      %v3000 = vpop.f32.mrf.mxu0
      %v3001 = vadd.f32 0.0, %v3000
      %v3002 = vpop.f32.mrf.mxu0
      %v3003 = vpop.f32.mrf.mxu0
      %v3004 = vadd.f32 0.0, %v3003
      %v3005 = vpop.f32.mrf.mxu0
      %3006 = vmatprep.mubr.bf16.mxu0 0
      %3007 = vmatmul.mubr.bf16.gmra.mxu0 %v2878
      %v3008 = vpop.f32.mrf.mxu0
      %v3009 = vadd.f32 0.0, %v3008
      %v3010 = vpop.f32.mrf.mxu0
      %v3011 = vpop.f32.mrf.mxu0
      %v3012 = vadd.f32 0.0, %v3011
      %v3013 = vpop.f32.mrf.mxu0
      %3014 = vmatprep.mubr.bf16.mxu0 0
      %3015 = vmatmul.mubr.bf16.gmra.mxu0 %v2881
      %v3016 = vpop.f32.mrf.mxu0
      %v3017 = vadd.f32 0.0, %v3016
      %v3018 = vpop.f32.mrf.mxu0
      %v3019 = vpop.f32.mrf.mxu0
      %v3020 = vadd.f32 0.0, %v3019
      %v3021 = vpop.f32.mrf.mxu0
      %3022 = vmatprep.mubr.bf16.mxu0 0
      %3023 = vmatmul.mubr.bf16.gmra.mxu0 %v2884
      %v3024 = vpop.f32.mrf.mxu0
      %v3025 = vadd.f32 0.0, %v3024
      %v3026 = vpop.f32.mrf.mxu0
      %v3027 = vpop.f32.mrf.mxu0
      %v3028 = vadd.f32 0.0, %v3027
      %v3029 = vpop.f32.mrf.mxu0
      %3030 = vmatprep.mubr.bf16.mxu0 0
      %3031 = vmatmul.mubr.bf16.gmra.mxu0 %v2887
      %v3032 = vpop.f32.mrf.mxu0
      %v3033 = vadd.f32 0.0, %v3032
      %v3034 = vpop.f32.mrf.mxu0
      %v3035 = vpop.f32.mrf.mxu0
      %v3036 = vadd.f32 0.0, %v3035
      %v3037 = vpop.f32.mrf.mxu0
      %3038 = vmatprep.mubr.bf16.mxu0 0
      %3039 = vmatmul.mubr.bf16.gmra.mxu0 %v2890
      %v3040 = vpop.f32.mrf.mxu0
      %v3041 = vadd.f32 0.0, %v3040
      %v3042 = vpop.f32.mrf.mxu0
      %v3043 = vpop.f32.mrf.mxu0
      %v3044 = vadd.f32 0.0, %v3043
      %v3045 = vpop.f32.mrf.mxu0
      %3046 = vmatprep.mubr.bf16.mxu0 0
      %3047 = vmatmul.mubr.bf16.gmra.mxu0 %v2893
      %v3048 = vpop.f32.mrf.mxu0
      %v3049 = vadd.f32 0.0, %v3048
      %v3050 = vpop.f32.mrf.mxu0
      %v3051 = vpop.f32.mrf.mxu0
      %v3052 = vadd.f32 0.0, %v3051
      %v3053 = vpop.f32.mrf.mxu0
      %3054 = vmatprep.mubr.bf16.mxu0 0
      %3055 = vmatmul.mubr.bf16.gmra.mxu0 %v2896
      %v3056 = vpop.f32.mrf.mxu0
      %v3057 = vadd.f32 0.0, %v3056
      %v3058 = vpop.f32.mrf.mxu0
      %v3059 = vpop.f32.mrf.mxu0
      %v3060 = vadd.f32 0.0, %v3059
      %v3061 = vpop.f32.mrf.mxu0
      %3062 = vmatprep.mubr.bf16.mxu0 0
      %3063 = vmatmul.mubr.bf16.gmra.mxu0 %v2899
      %v3064 = vpop.f32.mrf.mxu0
      %v3065 = vadd.f32 0.0, %v3064
      %v3066 = vpop.f32.mrf.mxu0
      %v3067 = vpop.f32.mrf.mxu0
      %v3068 = vadd.f32 0.0, %v3067
      %v3069 = vpop.f32.mrf.mxu0
      %3070 = vmatprep.mubr.bf16.mxu0 0
      %3071 = vmatmul.mubr.bf16.gmra.mxu0 %v2902
      %v3072 = vpop.f32.mrf.mxu0
      %v3073 = vadd.f32 0.0, %v3072
      %v3074 = vpop.f32.mrf.mxu0
      %v3075 = vpop.f32.mrf.mxu0
      %v3076 = vadd.f32 0.0, %v3075
      %v3077 = vpop.f32.mrf.mxu0
      %3078 = vmatprep.mubr.bf16.mxu0 0
      %3079 = vmatmul.mubr.bf16.gmra.mxu0 %v2905
      %v3080 = vpop.f32.mrf.mxu0
      %v3081 = vadd.f32 0.0, %v3080
      %v3082 = vpop.f32.mrf.mxu0
      %v3083 = vpop.f32.mrf.mxu0
      %v3084 = vadd.f32 0.0, %v3083
      %v3085 = vpop.f32.mrf.mxu0
      %3086 = vdwg.mxu0
      %v3087 = vadd.f32 %v2779, %v2945
      %v3088 = vadd.f32 %v2780, %v2948
      %v3089 = vadd.f32 %v2781, %v2953
      %v3090 = vadd.f32 %v2782, %v2956
      %v3091 = vadd.f32 %v2783, %v2961
      %v3092 = vadd.f32 %v2784, %v2964
      %v3093 = vadd.f32 %v2785, %v2969
      %v3094 = vadd.f32 %v2786, %v2972
      %v3095 = vadd.f32 %v2787, %v2977
      %v3096 = vadd.f32 %v2788, %v2980
      %v3097 = vadd.f32 %v2789, %v2985
      %v3098 = vadd.f32 %v2790, %v2988
      %v3099 = vadd.f32 %v2791, %v2993
      %v3100 = vadd.f32 %v2792, %v2996
      %v3101 = vadd.f32 %v2793, %v3001
      %v3102 = vadd.f32 %v2794, %v3004
      %v3103 = vadd.f32 %v2795, %v3009
      %v3104 = vadd.f32 %v2796, %v3012
      %v3105 = vadd.f32 %v2797, %v3017
      %v3106 = vadd.f32 %v2798, %v3020
      %v3107 = vadd.f32 %v2799, %v3025
      %v3108 = vadd.f32 %v2800, %v3028
      %v3109 = vadd.f32 %v2801, %v3033
      %v3110 = vadd.f32 %v2802, %v3036
      %v3111 = vadd.f32 %v2803, %v3041
      %v3112 = vadd.f32 %v2804, %v3044
      %v3113 = vadd.f32 %v2805, %v3049
      %v3114 = vadd.f32 %v2806, %v3052
      %v3115 = vadd.f32 %v2807, %v3057
      %v3116 = vadd.f32 %v2808, %v3060
      %v3117 = vadd.f32 %v2809, %v3065
      %v3118 = vadd.f32 %v2810, %v3068
      %v3119 = vadd.f32 %v2811, %v3073
      %v3120 = vadd.f32 %v2812, %v3076
      %v3121 = vadd.f32 %v2813, %v3081
      %v3122 = vadd.f32 %v2814, %v3084
      %3123 = vst [vmem:[%s235] sm:$0xff] %v3087
      %3124 = vst [vmem:[%s235 + $0x8] sm:$0xff] %v3088
      %3125 = vst [vmem:[%s235 + $0x10] sm:$0xff] %v3089
      %3126 = vst [vmem:[%s235 + $0x18] sm:$0xff] %v3090
      %3127 = vst [vmem:[%s235 + $0x20] sm:$0xff] %v3091
      %3128 = vst [vmem:[%s235 + $0x28] sm:$0xff] %v3092
      %3129 = vst [vmem:[%s235 + $0x30] sm:$0xff] %v3093
      %3130 = vst [vmem:[%s235 + $0x38] sm:$0xff] %v3094
      %3131 = vst [vmem:[%s235 + $0x40] sm:$0xff] %v3095
      %3132 = vst [vmem:[%s235 + $0x48] sm:$0xff] %v3096
      %3133 = vst [vmem:[%s235 + $0x50] sm:$0xff] %v3097
      %3134 = vst [vmem:[%s235 + $0x58] sm:$0xff] %v3098
      %3135 = vst [vmem:[%s235 + $0x60] sm:$0xff] %v3099
      %3136 = vst [vmem:[%s235 + $0x68] sm:$0xff] %v3100
      %3137 = vst [vmem:[%s235 + $0x70] sm:$0xff] %v3101
      %3138 = vst [vmem:[%s235 + $0x78] sm:$0xff] %v3102
      %3139 = vst [vmem:[%s235 + $0x80] sm:$0xff] %v3103
      %3140 = vst [vmem:[%s235 + $0x88] sm:$0xff] %v3104
      %3141 = vst [vmem:[%s235 + $0x90] sm:$0xff] %v3105
      %3142 = vst [vmem:[%s235 + $0x98] sm:$0xff] %v3106
      %3143 = vst [vmem:[%s235 + $0xa0] sm:$0xff] %v3107
      %3144 = vst [vmem:[%s235 + $0xa8] sm:$0xff] %v3108
      %3145 = vst [vmem:[%s235 + $0xb0] sm:$0xff] %v3109
      %3146 = vst [vmem:[%s235 + $0xb8] sm:$0xff] %v3110
      %3147 = vst [vmem:[%s235 + $0xc0] sm:$0xff] %v3111
      %3148 = vst [vmem:[%s235 + $0xc8] sm:$0xff] %v3112
      %3149 = vst [vmem:[%s235 + $0xd0] sm:$0xff] %v3113
      %3150 = vst [vmem:[%s235 + $0xd8] sm:$0xff] %v3114
      %3151 = vst [vmem:[%s235 + $0xe0] sm:$0xff] %v3115
      %3152 = vst [vmem:[%s235 + $0xe8] sm:$0xff] %v3116
      %3153 = vst [vmem:[%s235 + $0xf0] sm:$0xff] %v3117
      %3154 = vst [vmem:[%s235 + $0xf8] sm:$0xff] %v3118
      %3155 = vst [vmem:[%s235 + $0x100] sm:$0xff] %v3119
      %3156 = vst [vmem:[%s235 + $0x108] sm:$0xff] %v3120
      %3157 = vst [vmem:[%s235 + $0x110] sm:$0xff] %v3121
      %3158 = vst [vmem:[%s235 + $0x118] sm:$0xff] %v3122
      %3160 = vset.pattern.permute.xlu0 0
      %3161 = vperm.xlu0 %3160, %v293
      %v3162 = vpop.permute.xlu0 %3161
      %3165 = vset.pattern.permute.xlu0 0
      %3166 = vperm.xlu0 %3165, %v294
      %v3167 = vpop.permute.xlu0 %3166
      %3170 = vset.pattern.permute.xlu0 0
      %3171 = vperm.xlu0 %3170, %v295
      %v3172 = vpop.permute.xlu0 %3171
      %3175 = vset.pattern.permute.xlu0 0
      %3176 = vperm.xlu0 %3175, %v296
      %v3177 = vpop.permute.xlu0 %3176
      %3180 = vset.pattern.permute.xlu0 0
      %3181 = vperm.xlu0 %3180, %v297
      %v3182 = vpop.permute.xlu0 %3181
      %3185 = vset.pattern.permute.xlu0 0
      %3186 = vperm.xlu0 %3185, %v298
      %v3187 = vpop.permute.xlu0 %3186
      %3190 = vset.pattern.permute.xlu0 0
      %3191 = vperm.xlu0 %3190, %v299
      %v3192 = vpop.permute.xlu0 %3191
      %3195 = vset.pattern.permute.xlu0 0
      %3196 = vperm.xlu0 %3195, %v300
      %v3197 = vpop.permute.xlu0 %3196
      %3200 = vset.pattern.permute.xlu0 0
      %3201 = vperm.xlu0 %3200, %v301
      %v3202 = vpop.permute.xlu0 %3201
      %3205 = vset.pattern.permute.xlu0 0
      %3206 = vperm.xlu0 %3205, %v302
      %v3207 = vpop.permute.xlu0 %3206
      %3210 = vset.pattern.permute.xlu0 0
      %3211 = vperm.xlu0 %3210, %v303
      %v3212 = vpop.permute.xlu0 %3211
      %3215 = vset.pattern.permute.xlu0 0
      %3216 = vperm.xlu0 %3215, %v304
      %v3217 = vpop.permute.xlu0 %3216
      %3220 = vset.pattern.permute.xlu0 0
      %3221 = vperm.xlu0 %3220, %v305
      %v3222 = vpop.permute.xlu0 %3221
      %3225 = vset.pattern.permute.xlu0 0
      %3226 = vperm.xlu0 %3225, %v306
      %v3227 = vpop.permute.xlu0 %3226
      %3230 = vset.pattern.permute.xlu0 0
      %3231 = vperm.xlu0 %3230, %v307
      %v3232 = vpop.permute.xlu0 %3231
      %3235 = vset.pattern.permute.xlu0 0
      %3236 = vperm.xlu0 %3235, %v308
      %v3237 = vpop.permute.xlu0 %3236
      %3240 = vset.pattern.permute.xlu0 0
      %3241 = vperm.xlu0 %3240, %v309
      %v3242 = vpop.permute.xlu0 %3241
      %3245 = vset.pattern.permute.xlu0 0
      %3246 = vperm.xlu0 %3245, %v310
      %v3247 = vpop.permute.xlu0 %3246
      %3250 = vset.pattern.permute.xlu0 0
      %3251 = vperm.xlu0 %3250, %v311
      %v3252 = vpop.permute.xlu0 %3251
      %3255 = vset.pattern.permute.xlu0 0
      %3256 = vperm.xlu0 %3255, %v312
      %v3257 = vpop.permute.xlu0 %3256
      %3260 = vset.pattern.permute.xlu0 0
      %3261 = vperm.xlu0 %3260, %v313
      %v3262 = vpop.permute.xlu0 %3261
      %3265 = vset.pattern.permute.xlu0 0
      %3266 = vperm.xlu0 %3265, %v314
      %v3267 = vpop.permute.xlu0 %3266
      %3270 = vset.pattern.permute.xlu0 0
      %3271 = vperm.xlu0 %3270, %v315
      %v3272 = vpop.permute.xlu0 %3271
      %3275 = vset.pattern.permute.xlu0 0
      %3276 = vperm.xlu0 %3275, %v316
      %v3277 = vpop.permute.xlu0 %3276
      %3280 = vset.pattern.permute.xlu0 0
      %3281 = vperm.xlu0 %3280, %v317
      %v3282 = vpop.permute.xlu0 %3281
      %3285 = vset.pattern.permute.xlu0 0
      %3286 = vperm.xlu0 %3285, %v318
      %v3287 = vpop.permute.xlu0 %3286
      %3290 = vset.pattern.permute.xlu0 0
      %3291 = vperm.xlu0 %3290, %v319
      %v3292 = vpop.permute.xlu0 %3291
      %3295 = vset.pattern.permute.xlu0 0
      %3296 = vperm.xlu0 %3295, %v320
      %v3297 = vpop.permute.xlu0 %3296
      %3300 = vset.pattern.permute.xlu0 0
      %3301 = vperm.xlu0 %3300, %v321
      %v3302 = vpop.permute.xlu0 %3301
      %3305 = vset.pattern.permute.xlu0 0
      %3306 = vperm.xlu0 %3305, %v322
      %v3307 = vpop.permute.xlu0 %3306
      %3310 = vset.pattern.permute.xlu0 0
      %3311 = vperm.xlu0 %3310, %v323
      %v3312 = vpop.permute.xlu0 %3311
      %3315 = vset.pattern.permute.xlu0 0
      %3316 = vperm.xlu0 %3315, %v324
      %v3317 = vpop.permute.xlu0 %3316
      %3320 = vset.pattern.permute.xlu0 0
      %3321 = vperm.xlu0 %3320, %v325
      %v3322 = vpop.permute.xlu0 %3321
      %3325 = vset.pattern.permute.xlu0 0
      %3326 = vperm.xlu0 %3325, %v326
      %v3327 = vpop.permute.xlu0 %3326
      %3330 = vset.pattern.permute.xlu0 0
      %3331 = vperm.xlu0 %3330, %v327
      %v3332 = vpop.permute.xlu0 %3331
      %3335 = vset.pattern.permute.xlu0 0
      %3336 = vperm.xlu0 %3335, %v328
      %v3337 = vpop.permute.xlu0 %3336
      %v3339 = vmul.f32 %v3087, %v3162
      %v3340 = vmul.f32 %v3088, %v3167
      %v3341 = vmul.f32 %v3089, %v3172
      %v3342 = vmul.f32 %v3090, %v3177
      %v3343 = vmul.f32 %v3091, %v3182
      %v3344 = vmul.f32 %v3092, %v3187
      %v3345 = vmul.f32 %v3093, %v3192
      %v3346 = vmul.f32 %v3094, %v3197
      %v3347 = vmul.f32 %v3095, %v3202
      %v3348 = vmul.f32 %v3096, %v3207
      %v3349 = vmul.f32 %v3097, %v3212
      %v3350 = vmul.f32 %v3098, %v3217
      %v3351 = vmul.f32 %v3099, %v3222
      %v3352 = vmul.f32 %v3100, %v3227
      %v3353 = vmul.f32 %v3101, %v3232
      %v3354 = vmul.f32 %v3102, %v3237
      %v3355 = vmul.f32 %v3103, %v3242
      %v3356 = vmul.f32 %v3104, %v3247
      %v3357 = vmul.f32 %v3105, %v3252
      %v3358 = vmul.f32 %v3106, %v3257
      %v3359 = vmul.f32 %v3107, %v3262
      %v3360 = vmul.f32 %v3108, %v3267
      %v3361 = vmul.f32 %v3109, %v3272
      %v3362 = vmul.f32 %v3110, %v3277
      %v3363 = vmul.f32 %v3111, %v3282
      %v3364 = vmul.f32 %v3112, %v3287
      %v3365 = vmul.f32 %v3113, %v3292
      %v3366 = vmul.f32 %v3114, %v3297
      %v3367 = vmul.f32 %v3115, %v3302
      %v3368 = vmul.f32 %v3116, %v3307
      %v3369 = vmul.f32 %v3117, %v3312
      %v3370 = vmul.f32 %v3118, %v3317
      %v3371 = vmul.f32 %v3119, %v3322
      %v3372 = vmul.f32 %v3120, %v3327
      %v3373 = vmul.f32 %v3121, %v3332
      %v3374 = vmul.f32 %v3122, %v3337
      %v3375 = vadd.f32 %v3339, %v3340
      %v3376 = vadd.f32 %v3375, %v3341
      %v3377 = vadd.f32 %v3376, %v3342
      %v3378 = vadd.f32 %v3377, %v3343
      %v3379 = vadd.f32 %v3378, %v3344
      %v3380 = vadd.f32 %v3379, %v3345
      %v3381 = vadd.f32 %v3380, %v3346
      %v3382 = vadd.f32 %v3381, %v3347
      %v3383 = vadd.f32 %v3382, %v3348
      %v3384 = vadd.f32 %v3383, %v3349
      %v3385 = vadd.f32 %v3384, %v3350
      %v3386 = vadd.f32 %v3385, %v3351
      %v3387 = vadd.f32 %v3386, %v3352
      %v3388 = vadd.f32 %v3387, %v3353
      %v3389 = vadd.f32 %v3388, %v3354
      %v3390 = vadd.f32 %v3389, %v3355
      %v3391 = vadd.f32 %v3390, %v3356
      %v3392 = vadd.f32 %v3391, %v3357
      %v3393 = vadd.f32 %v3392, %v3358
      %v3394 = vadd.f32 %v3393, %v3359
      %v3395 = vadd.f32 %v3394, %v3360
      %v3396 = vadd.f32 %v3395, %v3361
      %v3397 = vadd.f32 %v3396, %v3362
      %v3398 = vadd.f32 %v3397, %v3363
      %v3399 = vadd.f32 %v3398, %v3364
      %v3400 = vadd.f32 %v3399, %v3365
      %v3401 = vadd.f32 %v3400, %v3366
      %v3402 = vadd.f32 %v3401, %v3367
      %v3403 = vadd.f32 %v3402, %v3368
      %v3404 = vadd.f32 %v3403, %v3369
      %v3405 = vadd.f32 %v3404, %v3370
      %v3406 = vadd.f32 %v3405, %v3371
      %v3407 = vadd.f32 %v3406, %v3372
      %v3408 = vadd.f32 %v3407, %v3373
      %v3409 = vadd.f32 %v3408, %v3374
      %v3410 = vrot.slane %v3409, 4
      %v3411 = vadd.f32 %v3409, %v3410
      %v3412 = vrot.slane %v3411, 2
      %v3413 = vadd.f32 %v3411, %v3412
      %v3414 = vrot.slane %v3413, 1
      %v3415 = vadd.f32 %v3413, %v3414
      %3416 = vst [vmem:[%s238] sm:$0x1] %v3415
      %v3417 = vmul.f32 %v3087, %v3339
      %v3418 = vmul.f32 %v3088, %v3340
      %v3419 = vmul.f32 %v3089, %v3341
      %v3420 = vmul.f32 %v3090, %v3342
      %v3421 = vmul.f32 %v3091, %v3343
      %v3422 = vmul.f32 %v3092, %v3344
      %v3423 = vmul.f32 %v3093, %v3345
      %v3424 = vmul.f32 %v3094, %v3346
      %v3425 = vmul.f32 %v3095, %v3347
      %v3426 = vmul.f32 %v3096, %v3348
      %v3427 = vmul.f32 %v3097, %v3349
      %v3428 = vmul.f32 %v3098, %v3350
      %v3429 = vmul.f32 %v3099, %v3351
      %v3430 = vmul.f32 %v3100, %v3352
      %v3431 = vmul.f32 %v3101, %v3353
      %v3432 = vmul.f32 %v3102, %v3354
      %v3433 = vmul.f32 %v3103, %v3355
      %v3434 = vmul.f32 %v3104, %v3356
      %v3435 = vmul.f32 %v3105, %v3357
      %v3436 = vmul.f32 %v3106, %v3358
      %v3437 = vmul.f32 %v3107, %v3359
      %v3438 = vmul.f32 %v3108, %v3360
      %v3439 = vmul.f32 %v3109, %v3361
      %v3440 = vmul.f32 %v3110, %v3362
      %v3441 = vmul.f32 %v3111, %v3363
      %v3442 = vmul.f32 %v3112, %v3364
      %v3443 = vmul.f32 %v3113, %v3365
      %v3444 = vmul.f32 %v3114, %v3366
      %v3445 = vmul.f32 %v3115, %v3367
      %v3446 = vmul.f32 %v3116, %v3368
      %v3447 = vmul.f32 %v3117, %v3369
      %v3448 = vmul.f32 %v3118, %v3370
      %v3449 = vmul.f32 %v3119, %v3371
      %v3450 = vmul.f32 %v3120, %v3372
      %v3451 = vmul.f32 %v3121, %v3373
      %v3452 = vmul.f32 %v3122, %v3374
      %v3453 = vadd.f32 %v3417, %v3418
      %v3454 = vadd.f32 %v3453, %v3419
      %v3455 = vadd.f32 %v3454, %v3420
      %v3456 = vadd.f32 %v3455, %v3421
      %v3457 = vadd.f32 %v3456, %v3422
      %v3458 = vadd.f32 %v3457, %v3423
      %v3459 = vadd.f32 %v3458, %v3424
      %v3460 = vadd.f32 %v3459, %v3425
      %v3461 = vadd.f32 %v3460, %v3426
      %v3462 = vadd.f32 %v3461, %v3427
      %v3463 = vadd.f32 %v3462, %v3428
      %v3464 = vadd.f32 %v3463, %v3429
      %v3465 = vadd.f32 %v3464, %v3430
      %v3466 = vadd.f32 %v3465, %v3431
      %v3467 = vadd.f32 %v3466, %v3432
      %v3468 = vadd.f32 %v3467, %v3433
      %v3469 = vadd.f32 %v3468, %v3434
      %v3470 = vadd.f32 %v3469, %v3435
      %v3471 = vadd.f32 %v3470, %v3436
      %v3472 = vadd.f32 %v3471, %v3437
      %v3473 = vadd.f32 %v3472, %v3438
      %v3474 = vadd.f32 %v3473, %v3439
      %v3475 = vadd.f32 %v3474, %v3440
      %v3476 = vadd.f32 %v3475, %v3441
      %v3477 = vadd.f32 %v3476, %v3442
      %v3478 = vadd.f32 %v3477, %v3443
      %v3479 = vadd.f32 %v3478, %v3444
      %v3480 = vadd.f32 %v3479, %v3445
      %v3481 = vadd.f32 %v3480, %v3446
      %v3482 = vadd.f32 %v3481, %v3447
      %v3483 = vadd.f32 %v3482, %v3448
      %v3484 = vadd.f32 %v3483, %v3449
      %v3485 = vadd.f32 %v3484, %v3450
      %v3486 = vadd.f32 %v3485, %v3451
      %v3487 = vadd.f32 %v3486, %v3452
      %v3488 = vrot.slane %v3487, 4
      %v3489 = vadd.f32 %v3487, %v3488
      %v3490 = vrot.slane %v3489, 2
      %v3491 = vadd.f32 %v3489, %v3490
      %v3492 = vrot.slane %v3491, 1
      %v3493 = vadd.f32 %v3491, %v3492
      %3494 = vst [vmem:[%s241] sm:$0x1] %v3493
      %p3495 = scmp.lt.s32.totalorder %s17, 1
      %s3496 = scalar_select %p3495, %s17, 1
      %s3497 = smul.addr %s3496, 36
      %s3498 = smul.addr %s3497, 8
      %s3499 = scalar_lea.vmem %s3, %s3498
      %p3500 = scmp.lt.s32.totalorder %s17, 1
      %s3501 = scalar_select %p3500, %s17, 1
      %s3502 = scalar_lea.vmem %s4, %s3501
      %p3503 = scmp.lt.s32.totalorder %s17, 1
      %s3504 = scalar_select %p3503, %s17, 1
      %s3505 = scalar_lea.vmem %s5, %s3504
      // Predicated region
      $region33: #{basic_conv2d.2} parent=31 // pred_check
        %p3506 = pneg %p103
      $region34: #{basic_conv2d.2} parent=31 // pred_check_branch
        %3508 = sbr.rel (%p3506) target = $region36
      $region35: #{basic_conv2d.2} parent=31 // pred_region
        _
      $region36: #{basic_conv2d.2} parent=31 // pred_fallthru
        _
      // Predicated region
      $region37: #{basic_conv2d.2} parent=31 // pred_check
        %p3509 = pneg %p129
      $region38: #{basic_conv2d.2} parent=31 // pred_check_branch
        %3511 = sbr.rel (%p3509) target = $region40
      $region39: #{basic_conv2d.2} parent=31 // pred_region
        _
      $region40: #{basic_conv2d.2} parent=31 // pred_fallthru
        _
      // Predicated region
      $region41: #{basic_conv2d.2} parent=31 // pred_check
        %p3512 = pneg %p155
      $region42: #{basic_conv2d.2} parent=31 // pred_check_branch
        %3514 = sbr.rel (%p3512) target = $region44
      $region43: #{basic_conv2d.2} parent=31 // pred_region
        _
      $region44: #{basic_conv2d.2} parent=31 // pred_fallthru
        _
    $region32: #{basic_conv2d.2} parent=5 // pred_fallthru
      _
    %p3515 = scmp.le.s32.totalorder 2, %s12
    // Predicated region
    $region45: #{basic_conv2d.2} parent=5 // pred_check
      %p3516 = pneg %p3515
    $region46: #{basic_conv2d.2} parent=5 // pred_check_branch
      %3518 = sbr.rel (%p3516) target = $region48
    $region47: #{basic_conv2d.2} parent=5 // pred_region
      %s3519 = ssub.s32 %s12, 2
      // Predicated region
      $region49: #{basic_conv2d.2} parent=47 // pred_check
        %p3520 = pneg %p109
      $region50: #{basic_conv2d.2} parent=47 // pred_check_branch
        %3522 = sbr.rel (%p3520) target = $region52
      $region51: #{basic_conv2d.2} parent=47 // pred_region
        %p3523 = scmp.lt.s32.totalorder %s18, 1
        %s3524 = scalar_select %p3523, %s18, 1
        %s3525 = smul.addr %s3524, 36
        %s3526 = smul.addr %s3525, 8
        %s3527 = scalar_lea.vmem %s3, %s3526
      $region52: #{basic_conv2d.2} parent=47 // pred_fallthru
        _
      // Predicated region
      $region53: #{basic_conv2d.2} parent=47 // pred_check
        %p3528 = pneg %p135
      $region54: #{basic_conv2d.2} parent=47 // pred_check_branch
        %3530 = sbr.rel (%p3528) target = $region56
      $region55: #{basic_conv2d.2} parent=47 // pred_region
        %p3531 = scmp.lt.s32.totalorder %s18, 1
        %s3532 = scalar_select %p3531, %s18, 1
        %s3533 = scalar_lea.vmem %s4, %s3532
      $region56: #{basic_conv2d.2} parent=47 // pred_fallthru
        _
      // Predicated region
      $region57: #{basic_conv2d.2} parent=47 // pred_check
        %p3534 = pneg %p161
      $region58: #{basic_conv2d.2} parent=47 // pred_check_branch
        %3536 = sbr.rel (%p3534) target = $region60
      $region59: #{basic_conv2d.2} parent=47 // pred_region
        %p3537 = scmp.lt.s32.totalorder %s18, 1
        %s3538 = scalar_select %p3537, %s18, 1
        %s3539 = scalar_lea.vmem %s5, %s3538
      $region60: #{basic_conv2d.2} parent=47 // pred_fallthru
        _
    $region48: #{basic_conv2d.2} parent=5 // pred_fallthru
      _
  $region6: #{basic_conv2d.2} parent=0 // loop_footer
    %s16 = sadd.s32 1, %s12
  $region7: #{basic_conv2d.2} parent=0 // loop_footer_branch
    %11 = sbr.rel target = $region3
  $region8: #{basic_conv2d.2} parent=0 // loop_exit
    _

</llo_original>
